<compile_context>
chip_gen: v6e
topology: v6e:2x2x1
jax: 0.10.0
libtpu: 0.0.40
codegen_flags: <defaults>
</compile_context>

<pallas_src>
import functools
import math

import jax
import jax.numpy as jnp
from jax import lax
from jax.experimental import pallas as pl
from jax.experimental.pallas import tpu as pltpu


KPARAM_ORDER = [
    "wqkv1_t", "bqkv1", "wo1_t", "bo1",                   # self-attention
    "wq2_t", "bq2", "wkv2_t", "bkv2", "wo2_t", "bo2",     # cross-attention
    "fc1_t", "fc1_b", "fc2_t", "fc2_b",                   # feed-forward
]


def _decoder_layer_kernel(nheads,
                          x_ref, mem_ref, bias_self_ref, bias_cross_ref,
                          wqkv1_ref, bqkv1_ref, wo1_ref, bo1_ref,
                          wq2_ref, bq2_ref, wkv2_ref, bkv2_ref, wo2_ref, bo2_ref,
                          fc1w_ref, fc1b_ref, fc2w_ref, fc2b_ref,
                          out_ref):
    x = x_ref[...].astype(jnp.float32)        # (T, E)   T  = L*N tokens, row = l*N + n
    mem = mem_ref[...].astype(jnp.float32)    # (Tk, E)  Tk = S*N tokens
    T, E = x.shape
    hd = E // nheads

    def attention(q, k, v, bias, wo_t, bo):
        # q: (Tq, E), already 1/sqrt(hd)-scaled.  k, v: (Tkv, E).
        # bias: (Tq, Tkv) additive mask (0 same batch item / -1e30 otherwise).
        tq = q.shape[0]
        scores = []
        for h in range(nheads):               # heads: tiny static loop, no concat of ctx
            sl = slice(h * hd, (h + 1) * hd)
            s_h = lax.dot_general(q[:, sl], k[:, sl],
                                  (((1,), (1,)), ((), ())),
                                  preferred_element_type=jnp.float32)
            scores.append(s_h + bias)
        # stack heads along sublanes -> ONE softmax for all heads & batch items
        s_all = jnp.concatenate(scores, axis=0)                 # (H*Tq, Tkv)
        m = jnp.max(s_all, axis=-1, keepdims=True)
        p = jnp.exp(s_all - m)
        p = p * (1.0 / jnp.sum(p, axis=-1, keepdims=True))      # exact divide
        out = jnp.zeros((tq, E), jnp.float32)
        for h in range(nheads):
            sl = slice(h * hd, (h + 1) * hd)
            p_h = p[h * tq:(h + 1) * tq, :]                     # (Tq, Tkv)
            ctx_h = jnp.dot(p_h, v[:, sl], preferred_element_type=jnp.float32)
            # accumulate per-head out-projection instead of concatenating heads
            out = out + jnp.dot(ctx_h, wo_t[sl, :], preferred_element_type=jnp.float32)
        return out + bo

    bias_self = bias_self_ref[...]
    bias_cross = bias_cross_ref[...]

    # --- self-attention (single fused QKV matmul) + residual (dropout p=0) ---
    qkv = jnp.dot(x, wqkv1_ref[...], preferred_element_type=jnp.float32) + bqkv1_ref[...]
    h = attention(qkv[:, :E], qkv[:, E:2 * E], qkv[:, 2 * E:],
                  bias_self, wo1_ref[...], bo1_ref[...]) + x

    # --- cross-attention over memory (fused KV matmul) + residual ---
    q2 = jnp.dot(h, wq2_ref[...], preferred_element_type=jnp.float32) + bq2_ref[...]
    kv2 = jnp.dot(mem, wkv2_ref[...], preferred_element_type=jnp.float32) + bkv2_ref[...]
    h = attention(q2, kv2[:, :E], kv2[:, E:],
                  bias_cross, wo2_ref[...], bo2_ref[...]) + h

    # --- feed-forward: fc2(LeakyReLU(fc1(h))) + residual ---
    ff = jnp.dot(h, fc1w_ref[...], preferred_element_type=jnp.float32) + fc1b_ref[...]
    ff = jnp.where(ff >= 0, ff, 0.01 * ff)    # LeakyReLU, negative_slope=0.01
    h1 = jnp.dot(ff, fc2w_ref[...], preferred_element_type=jnp.float32) + fc2b_ref[...]
    out_ref[...] = (h1 + h).astype(out_ref.dtype)


def prepare_kernel_params(params, nheads):
    """PyTorch-layout params -> kernel layout: pre-transposed weights, fused
    QKV (self) / KV (cross), 1/sqrt(head_dim) folded into the Q projection."""
    E = params["wo1"].shape[0]
    hd = E // nheads
    scale = 1.0 / math.sqrt(hd)
    w1, b1 = params["w_qkv1"], params["b_qkv1"]
    w2, b2 = params["w_qkv2"], params["b_qkv2"]
    return {
        "wqkv1_t": jnp.concatenate([w1[:E].T * scale, w1[E:].T], axis=1),   # (E, 3E)
        "bqkv1": jnp.concatenate([b1[:, :E] * scale, b1[:, E:]], axis=1),   # (1, 3E)
        "wo1_t": params["wo1"].T, "bo1": params["bo1"],
        "wq2_t": w2[:E].T * scale, "bq2": b2[:, :E] * scale,                # (E, E), (1, E)
        "wkv2_t": w2[E:].T, "bkv2": b2[:, E:],                              # (E, 2E), (1, 2E)
        "wo2_t": params["wo2"].T, "bo2": params["bo2"],
        "fc1_t": params["fc1_w"].T, "fc1_b": params["fc1_b"],
        "fc2_t": params["fc2_w"].T, "fc2_b": params["fc2_b"],
    }


@functools.partial(jax.jit, static_argnames=("nheads",))
def transformer_decoder_layer(x, memory, kparams, nheads):
    """x: (L, N, E) seq-first, memory: (S, N, E) seq-first (PyTorch MHA convention)."""
    L, N, E = x.shape
    S = memory.shape[0]
    T, Tk = L * N, S * N
    F = kparams["fc1_t"].shape[1]

    # Free contiguous reshapes (NOT transposes): row index = seq*N + batch.
    x2d = x.reshape(T, E)
    m2d = memory.reshape(Tk, E)

    # Static additive masks that keep attention within each batch item.
    bid_q = jnp.arange(T, dtype=jnp.int32) % N
    bid_k = jnp.arange(Tk, dtype=jnp.int32) % N
    bias_self = jnp.where(bid_q[:, None] == bid_q[None, :], 0.0, -1e30).astype(jnp.float32)
    bias_cross = jnp.where(bid_q[:, None] == bid_k[None, :], 0.0, -1e30).astype(jnp.float32)

    inputs = [x2d, m2d, bias_self, bias_cross] + [kparams[k] for k in KPARAM_ORDER]

    flops = (2 * T * E * 3 * E                                # fused QKV (self)
             + 4 * T * T * E + 2 * T * E * E                  # self-attn scores/ctx/out-proj
             + 2 * T * E * E + 2 * Tk * E * 2 * E             # cross q / fused kv
             + 4 * T * Tk * E + 2 * T * E * E                 # cross-attn
             + 4 * T * E * F)                                 # FFN (fc1 + fc2)
    transcendentals = nheads * (T * T + T * Tk)
    bytes_accessed = (sum(int(math.prod(a.shape)) * jnp.dtype(a.dtype).itemsize
                          for a in inputs)
                      + T * E * jnp.dtype(x.dtype).itemsize)

    vmem = pl.BlockSpec(memory_space=pltpu.MemorySpace.VMEM)
    out2d = pl.pallas_call(
        functools.partial(_decoder_layer_kernel, nheads),
        out_shape=jax.ShapeDtypeStruct((T, E), x.dtype),
        in_specs=[vmem] * len(inputs),
        out_specs=vmem,
        cost_estimate=pl.CostEstimate(flops=flops,
                                      transcendentals=transcendentals,
                                      bytes_accessed=bytes_accessed),
    )(*inputs)
    return out2d.reshape(L, N, E)


def ref_forward(x, memory, params, nheads):
    """Pure-JAX reference mirroring PyTorch nn.MultiheadAttention semantics."""
    def mha(q_in, kv_in, w_qkv, b_qkv, wo, bo):
        L, N, E = q_in.shape
        S = kv_in.shape[0]
        hd = E // nheads
        q = q_in @ w_qkv[:E].T + b_qkv[0, :E]
        k = kv_in @ w_qkv[E:2 * E].T + b_qkv[0, E:2 * E]
        v = kv_in @ w_qkv[2 * E:].T + b_qkv[0, 2 * E:]
        q = q.reshape(L, N * nheads, hd).transpose(1, 0, 2)
        k = k.reshape(S, N * nheads, hd).transpose(1, 0, 2)
        v = v.reshape(S, N * nheads, hd).transpose(1, 0, 2)
        s = jnp.einsum('bld,bsd->bls', q, k) / math.sqrt(hd)
        p = jax.nn.softmax(s, axis=-1)
        ctx = jnp.einsum('bls,bsd->bld', p, v)
        ctx = ctx.transpose(1, 0, 2).reshape(L, N, E)
        return ctx @ wo.T + bo[0]

    h = mha(x, x, params["w_qkv1"], params["b_qkv1"],
            params["wo1"], params["bo1"]) + x
    h = mha(h, memory, params["w_qkv2"], params["b_qkv2"],
            params["wo2"], params["bo2"]) + h
    ff = h @ params["fc1_w"].T + params["fc1_b"][0]
    ff = jnp.where(ff >= 0, ff, 0.01 * ff)
    return ff @ params["fc2_w"].T + params["fc2_b"][0] + h


if __name__ == "__main__":
    # in_dim=32, nheads=4, dim_feedforward=16, dropout=0
    L, S, N, E, H, F = 8, 8, 2, 32, 4, 16

    key = jax.random.PRNGKey(0)
    keys = jax.random.split(key, 16)

    def mk(k, shape, scale=0.1):
        return (scale * jax.random.normal(k, shape)).astype(jnp.float32)

    params = {
        "w_qkv1": mk(keys[0], (3 * E, E)),   # MHA in_proj_weight
        "b_qkv1": mk(keys[1], (1, 3 * E)),   # MHA in_proj_bias
        "wo1":    mk(keys[2], (E, E)),       # MHA out_proj.weight
        "bo1":    mk(keys[3], (1, E)),       # MHA out_proj.bias
        "w_qkv2": mk(keys[4], (3 * E, E)),
        "b_qkv2": mk(keys[5], (1, 3 * E)),
        "wo2":    mk(keys[6], (E, E)),
        "bo2":    mk(keys[7], (1, E)),
        "fc1_w":  mk(keys[8], (F, E)),       # Linear(E -> F)
        "fc1_b":  mk(keys[9], (1, F)),
        "fc2_w":  mk(keys[10], (E, F)),      # Linear(F -> E)
        "fc2_b":  mk(keys[11], (1, E)),
    }

    x = jax.random.normal(keys[12], (L, N, E), dtype=jnp.float32)
    memory = jax.random.normal(keys[13], (S, N, E), dtype=jnp.float32)

    kparams = prepare_kernel_params(params, H)   # one-time parameter prep
    out = transformer_decoder_layer(x, memory, kparams, nheads=H)
    jax.block_until_ready(out)

    ref = ref_forward(x, memory, params, H)
    assert out.shape == (L, N, E)
    assert jnp.allclose(out, ref, atol=1e-4, rtol=1e-4), \
        float(jnp.max(jnp.abs(out - ref)))
    print("KERNEL_OK")
</pallas_src>

<mosaic_0001>
module attributes {stable_mosaic.version = 11 : i64} {
  func.func @_decoder_layer_kernel(%arg0: memref<16x32xf32, #tpu.memory_space<vmem>>, %arg1: memref<16x32xf32, #tpu.memory_space<vmem>>, %arg2: memref<16x16xf32, #tpu.memory_space<vmem>>, %arg3: memref<16x16xf32, #tpu.memory_space<vmem>>, %arg4: memref<32x96xf32, #tpu.memory_space<vmem>>, %arg5: memref<1x96xf32, #tpu.memory_space<vmem>>, %arg6: memref<32x32xf32, #tpu.memory_space<vmem>>, %arg7: memref<1x32xf32, #tpu.memory_space<vmem>>, %arg8: memref<32x32xf32, #tpu.memory_space<vmem>>, %arg9: memref<1x32xf32, #tpu.memory_space<vmem>>, %arg10: memref<32x64xf32, #tpu.memory_space<vmem>>, %arg11: memref<1x64xf32, #tpu.memory_space<vmem>>, %arg12: memref<32x32xf32, #tpu.memory_space<vmem>>, %arg13: memref<1x32xf32, #tpu.memory_space<vmem>>, %arg14: memref<32x16xf32, #tpu.memory_space<vmem>>, %arg15: memref<1x16xf32, #tpu.memory_space<vmem>>, %arg16: memref<16x32xf32, #tpu.memory_space<vmem>>, %arg17: memref<1x32xf32, #tpu.memory_space<vmem>>, %arg18: memref<16x32xf32, #tpu.memory_space<vmem>>) attributes {dimension_semantics = [], scalar_prefetch = 0 : i64, scratch_operands = 0 : i64, tpu.core_type = #tpu.core_type<tc>} {
    %c0 = arith.constant 0 : index
    %c0_0 = arith.constant 0 : index
    %0 = vector.load %arg0[%c0, %c0_0] : memref<16x32xf32, #tpu.memory_space<vmem>>, vector<16x32xf32>
    %c0_1 = arith.constant 0 : index
    %c0_2 = arith.constant 0 : index
    %1 = vector.load %arg1[%c0_1, %c0_2] : memref<16x32xf32, #tpu.memory_space<vmem>>, vector<16x32xf32>
    %c0_3 = arith.constant 0 : index
    %c0_4 = arith.constant 0 : index
    %2 = vector.load %arg2[%c0_3, %c0_4] : memref<16x16xf32, #tpu.memory_space<vmem>>, vector<16x16xf32>
    %c0_5 = arith.constant 0 : index
    %c0_6 = arith.constant 0 : index
    %3 = vector.load %arg3[%c0_5, %c0_6] : memref<16x16xf32, #tpu.memory_space<vmem>>, vector<16x16xf32>
    %c0_7 = arith.constant 0 : index
    %c0_8 = arith.constant 0 : index
    %4 = vector.load %arg4[%c0_7, %c0_8] : memref<32x96xf32, #tpu.memory_space<vmem>>, vector<32x96xf32>
    %cst = arith.constant dense<0.000000e+00> : vector<16x96xf32>
    %5 = tpu.matmul %0, %4, %cst {dimension_numbers = #tpu.dot_dimension_numbers<[1], [0], [0], [1], [0, 0, 1, 1], [], []>} : vector<16x32xf32>, vector<32x96xf32>, vector<16x96xf32> -> vector<16x96xf32>
    %c0_9 = arith.constant 0 : index
    %c0_10 = arith.constant 0 : index
    %6 = vector.load %arg5[%c0_9, %c0_10] : memref<1x96xf32, #tpu.memory_space<vmem>>, vector<1x96xf32>
    %7 = vector.broadcast %6 : vector<1x96xf32> to vector<16x96xf32>
    %8 = arith.addf %5, %7 : vector<16x96xf32>
    %9 = vector.extract_strided_slice %8 {offsets = [0, 0], sizes = [16, 32], strides = [1, 1]} : vector<16x96xf32> to vector<16x32xf32>
    %10 = vector.extract_strided_slice %8 {offsets = [0, 32], sizes = [16, 32], strides = [1, 1]} : vector<16x96xf32> to vector<16x32xf32>
    %11 = vector.extract_strided_slice %8 {offsets = [0, 64], sizes = [16, 32], strides = [1, 1]} : vector<16x96xf32> to vector<16x32xf32>
    %c0_11 = arith.constant 0 : index
    %c0_12 = arith.constant 0 : index
    %12 = vector.load %arg6[%c0_11, %c0_12] : memref<32x32xf32, #tpu.memory_space<vmem>>, vector<32x32xf32>
    %c0_13 = arith.constant 0 : index
    %c0_14 = arith.constant 0 : index
    %13 = vector.load %arg7[%c0_13, %c0_14] : memref<1x32xf32, #tpu.memory_space<vmem>>, vector<1x32xf32>
    %14 = vector.extract_strided_slice %9 {offsets = [0, 0], sizes = [16, 8], strides = [1, 1]} : vector<16x32xf32> to vector<16x8xf32>
    %15 = vector.extract_strided_slice %10 {offsets = [0, 0], sizes = [16, 8], strides = [1, 1]} : vector<16x32xf32> to vector<16x8xf32>
    %cst_15 = arith.constant dense<0.000000e+00> : vector<16x16xf32>
    %16 = tpu.matmul %14, %15, %cst_15 {dimension_numbers = #tpu.dot_dimension_numbers<[1], [1], [0], [0], [0, 0, 1, 0], [], []>} : vector<16x8xf32>, vector<16x8xf32>, vector<16x16xf32> -> vector<16x16xf32>
    %17 = arith.addf %16, %2 : vector<16x16xf32>
    %18 = vector.extract_strided_slice %9 {offsets = [0, 8], sizes = [16, 8], strides = [1, 1]} : vector<16x32xf32> to vector<16x8xf32>
    %19 = vector.extract_strided_slice %10 {offsets = [0, 8], sizes = [16, 8], strides = [1, 1]} : vector<16x32xf32> to vector<16x8xf32>
    %cst_16 = arith.constant dense<0.000000e+00> : vector<16x16xf32>
    %20 = tpu.matmul %18, %19, %cst_16 {dimension_numbers = #tpu.dot_dimension_numbers<[1], [1], [0], [0], [0, 0, 1, 0], [], []>} : vector<16x8xf32>, vector<16x8xf32>, vector<16x16xf32> -> vector<16x16xf32>
    %21 = arith.addf %20, %2 : vector<16x16xf32>
    %22 = vector.extract_strided_slice %9 {offsets = [0, 16], sizes = [16, 8], strides = [1, 1]} : vector<16x32xf32> to vector<16x8xf32>
    %23 = vector.extract_strided_slice %10 {offsets = [0, 16], sizes = [16, 8], strides = [1, 1]} : vector<16x32xf32> to vector<16x8xf32>
    %cst_17 = arith.constant dense<0.000000e+00> : vector<16x16xf32>
    %24 = tpu.matmul %22, %23, %cst_17 {dimension_numbers = #tpu.dot_dimension_numbers<[1], [1], [0], [0], [0, 0, 1, 0], [], []>} : vector<16x8xf32>, vector<16x8xf32>, vector<16x16xf32> -> vector<16x16xf32>
    %25 = arith.addf %24, %2 : vector<16x16xf32>
    %26 = vector.extract_strided_slice %9 {offsets = [0, 24], sizes = [16, 8], strides = [1, 1]} : vector<16x32xf32> to vector<16x8xf32>
    %27 = vector.extract_strided_slice %10 {offsets = [0, 24], sizes = [16, 8], strides = [1, 1]} : vector<16x32xf32> to vector<16x8xf32>
    %cst_18 = arith.constant dense<0.000000e+00> : vector<16x16xf32>
    %28 = tpu.matmul %26, %27, %cst_18 {dimension_numbers = #tpu.dot_dimension_numbers<[1], [1], [0], [0], [0, 0, 1, 0], [], []>} : vector<16x8xf32>, vector<16x8xf32>, vector<16x16xf32> -> vector<16x16xf32>
    %29 = arith.addf %28, %2 : vector<16x16xf32>
    %30 = tpu.concatenate %17, %21, %25, %29 in 0 : vector<16x16xf32>, vector<16x16xf32>, vector<16x16xf32>, vector<16x16xf32> -> vector<64x16xf32>
    %cst_19 = arith.constant dense<0xFF800000> : vector<64xf32>
    %31 = vector.multi_reduction <maximumf>, %30, %cst_19 [1] : vector<64x16xf32> to vector<64xf32>
    %32 = vector.shape_cast %31 : vector<64xf32> to vector<64x1xf32>
    %33 = vector.broadcast %32 : vector<64x1xf32> to vector<64x16xf32>
    %34 = arith.subf %30, %33 : vector<64x16xf32>
    %35 = math.exp %34 : vector<64x16xf32>
    %cst_20 = arith.constant dense<0.000000e+00> : vector<64xf32>
    %36 = vector.multi_reduction <add>, %35, %cst_20 [1] : vector<64x16xf32> to vector<64xf32>
    %37 = vector.shape_cast %36 : vector<64xf32> to vector<64x1xf32>
    %cst_21 = arith.constant 1.000000e+00 : f32
    %38 = vector.broadcast %cst_21 : f32 to vector<64x1xf32>
    %39 = arith.divf %38, %37 : vector<64x1xf32>
    %40 = vector.broadcast %39 : vector<64x1xf32> to vector<64x16xf32>
    %41 = arith.mulf %35, %40 : vector<64x16xf32>
    %cst_22 = arith.constant 0.000000e+00 : f32
    %42 = vector.broadcast %cst_22 : f32 to vector<16x32xf32>
    %43 = vector.extract_strided_slice %41 {offsets = [0, 0], sizes = [16, 16], strides = [1, 1]} : vector<64x16xf32> to vector<16x16xf32>
    %44 = vector.extract_strided_slice %11 {offsets = [0, 0], sizes = [16, 8], strides = [1, 1]} : vector<16x32xf32> to vector<16x8xf32>
    %cst_23 = arith.constant dense<0.000000e+00> : vector<16x8xf32>
    %45 = tpu.matmul %43, %44, %cst_23 {dimension_numbers = #tpu.dot_dimension_numbers<[1], [0], [0], [1], [0, 0, 1, 1], [], []>} : vector<16x16xf32>, vector<16x8xf32>, vector<16x8xf32> -> vector<16x8xf32>
    %46 = vector.extract_strided_slice %12 {offsets = [0, 0], sizes = [8, 32], strides = [1, 1]} : vector<32x32xf32> to vector<8x32xf32>
    %cst_24 = arith.constant dense<0.000000e+00> : vector<16x32xf32>
    %47 = tpu.matmul %45, %46, %cst_24 {dimension_numbers = #tpu.dot_dimension_numbers<[1], [0], [0], [1], [0, 0, 1, 1], [], []>} : vector<16x8xf32>, vector<8x32xf32>, vector<16x32xf32> -> vector<16x32xf32>
    %48 = arith.addf %42, %47 : vector<16x32xf32>
    %49 = vector.extract_strided_slice %41 {offsets = [16, 0], sizes = [16, 16], strides = [1, 1]} : vector<64x16xf32> to vector<16x16xf32>
    %50 = vector.extract_strided_slice %11 {offsets = [0, 8], sizes = [16, 8], strides = [1, 1]} : vector<16x32xf32> to vector<16x8xf32>
    %cst_25 = arith.constant dense<0.000000e+00> : vector<16x8xf32>
    %51 = tpu.matmul %49, %50, %cst_25 {dimension_numbers = #tpu.dot_dimension_numbers<[1], [0], [0], [1], [0, 0, 1, 1], [], []>} : vector<16x16xf32>, vector<16x8xf32>, vector<16x8xf32> -> vector<16x8xf32>
    %52 = vector.extract_strided_slice %12 {offsets = [8, 0], sizes = [8, 32], strides = [1, 1]} : vector<32x32xf32> to vector<8x32xf32>
    %cst_26 = arith.constant dense<0.000000e+00> : vector<16x32xf32>
    %53 = tpu.matmul %51, %52, %cst_26 {dimension_numbers = #tpu.dot_dimension_numbers<[1], [0], [0], [1], [0, 0, 1, 1], [], []>} : vector<16x8xf32>, vector<8x32xf32>, vector<16x32xf32> -> vector<16x32xf32>
    %54 = arith.addf %48, %53 : vector<16x32xf32>
    %55 = vector.extract_strided_slice %41 {offsets = [32, 0], sizes = [16, 16], strides = [1, 1]} : vector<64x16xf32> to vector<16x16xf32>
    %56 = vector.extract_strided_slice %11 {offsets = [0, 16], sizes = [16, 8], strides = [1, 1]} : vector<16x32xf32> to vector<16x8xf32>
    %cst_27 = arith.constant dense<0.000000e+00> : vector<16x8xf32>
    %57 = tpu.matmul %55, %56, %cst_27 {dimension_numbers = #tpu.dot_dimension_numbers<[1], [0], [0], [1], [0, 0, 1, 1], [], []>} : vector<16x16xf32>, vector<16x8xf32>, vector<16x8xf32> -> vector<16x8xf32>
    %58 = vector.extract_strided_slice %12 {offsets = [16, 0], sizes = [8, 32], strides = [1, 1]} : vector<32x32xf32> to vector<8x32xf32>
    %cst_28 = arith.constant dense<0.000000e+00> : vector<16x32xf32>
    %59 = tpu.matmul %57, %58, %cst_28 {dimension_numbers = #tpu.dot_dimension_numbers<[1], [0], [0], [1], [0, 0, 1, 1], [], []>} : vector<16x8xf32>, vector<8x32xf32>, vector<16x32xf32> -> vector<16x32xf32>
    %60 = arith.addf %54, %59 : vector<16x32xf32>
    %61 = vector.extract_strided_slice %41 {offsets = [48, 0], sizes = [16, 16], strides = [1, 1]} : vector<64x16xf32> to vector<16x16xf32>
    %62 = vector.extract_strided_slice %11 {offsets = [0, 24], sizes = [16, 8], strides = [1, 1]} : vector<16x32xf32> to vector<16x8xf32>
    %cst_29 = arith.constant dense<0.000000e+00> : vector<16x8xf32>
    %63 = tpu.matmul %61, %62, %cst_29 {dimension_numbers = #tpu.dot_dimension_numbers<[1], [0], [0], [1], [0, 0, 1, 1], [], []>} : vector<16x16xf32>, vector<16x8xf32>, vector<16x8xf32> -> vector<16x8xf32>
    %64 = vector.extract_strided_slice %12 {offsets = [24, 0], sizes = [8, 32], strides = [1, 1]} : vector<32x32xf32> to vector<8x32xf32>
    %cst_30 = arith.constant dense<0.000000e+00> : vector<16x32xf32>
    %65 = tpu.matmul %63, %64, %cst_30 {dimension_numbers = #tpu.dot_dimension_numbers<[1], [0], [0], [1], [0, 0, 1, 1], [], []>} : vector<16x8xf32>, vector<8x32xf32>, vector<16x32xf32> -> vector<16x32xf32>
    %66 = arith.addf %60, %65 : vector<16x32xf32>
    %67 = vector.broadcast %13 : vector<1x32xf32> to vector<16x32xf32>
    %68 = arith.addf %66, %67 : vector<16x32xf32>
    %69 = arith.addf %68, %0 : vector<16x32xf32>
    %c0_31 = arith.constant 0 : index
    %c0_32 = arith.constant 0 : index
    %70 = vector.load %arg8[%c0_31, %c0_32] : memref<32x32xf32, #tpu.memory_space<vmem>>, vector<32x32xf32>
    %cst_33 = arith.constant dense<0.000000e+00> : vector<16x32xf32>
    %71 = tpu.matmul %69, %70, %cst_33 {dimension_numbers = #tpu.dot_dimension_numbers<[1], [0], [0], [1], [0, 0, 1, 1], [], []>} : vector<16x32xf32>, vector<32x32xf32>, vector<16x32xf32> -> vector<16x32xf32>
    %c0_34 = arith.constant 0 : index
    %c0_35 = arith.constant 0 : index
    %72 = vector.load %arg9[%c0_34, %c0_35] : memref<1x32xf32, #tpu.memory_space<vmem>>, vector<1x32xf32>
    %73 = vector.broadcast %72 : vector<1x32xf32> to vector<16x32xf32>
    %74 = arith.addf %71, %73 : vector<16x32xf32>
    %c0_36 = arith.constant 0 : index
    %c0_37 = arith.constant 0 : index
    %75 = vector.load %arg10[%c0_36, %c0_37] : memref<32x64xf32, #tpu.memory_space<vmem>>, vector<32x64xf32>
    %cst_38 = arith.constant dense<0.000000e+00> : vector<16x64xf32>
    %76 = tpu.matmul %1, %75, %cst_38 {dimension_numbers = #tpu.dot_dimension_numbers<[1], [0], [0], [1], [0, 0, 1, 1], [], []>} : vector<16x32xf32>, vector<32x64xf32>, vector<16x64xf32> -> vector<16x64xf32>
    %c0_39 = arith.constant 0 : index
    %c0_40 = arith.constant 0 : index
    %77 = vector.load %arg11[%c0_39, %c0_40] : memref<1x64xf32, #tpu.memory_space<vmem>>, vector<1x64xf32>
    %78 = vector.broadcast %77 : vector<1x64xf32> to vector<16x64xf32>
    %79 = arith.addf %76, %78 : vector<16x64xf32>
    %80 = vector.extract_strided_slice %79 {offsets = [0, 0], sizes = [16, 32], strides = [1, 1]} : vector<16x64xf32> to vector<16x32xf32>
    %81 = vector.extract_strided_slice %79 {offsets = [0, 32], sizes = [16, 32], strides = [1, 1]} : vector<16x64xf32> to vector<16x32xf32>
    %c0_41 = arith.constant 0 : index
    %c0_42 = arith.constant 0 : index
    %82 = vector.load %arg12[%c0_41, %c0_42] : memref<32x32xf32, #tpu.memory_space<vmem>>, vector<32x32xf32>
    %c0_43 = arith.constant 0 : index
    %c0_44 = arith.constant 0 : index
    %83 = vector.load %arg13[%c0_43, %c0_44] : memref<1x32xf32, #tpu.memory_space<vmem>>, vector<1x32xf32>
    %84 = vector.extract_strided_slice %74 {offsets = [0, 0], sizes = [16, 8], strides = [1, 1]} : vector<16x32xf32> to vector<16x8xf32>
    %85 = vector.extract_strided_slice %80 {offsets = [0, 0], sizes = [16, 8], strides = [1, 1]} : vector<16x32xf32> to vector<16x8xf32>
    %cst_45 = arith.constant dense<0.000000e+00> : vector<16x16xf32>
    %86 = tpu.matmul %84, %85, %cst_45 {dimension_numbers = #tpu.dot_dimension_numbers<[1], [1], [0], [0], [0, 0, 1, 0], [], []>} : vector<16x8xf32>, vector<16x8xf32>, vector<16x16xf32> -> vector<16x16xf32>
    %87 = arith.addf %86, %3 : vector<16x16xf32>
    %88 = vector.extract_strided_slice %74 {offsets = [0, 8], sizes = [16, 8], strides = [1, 1]} : vector<16x32xf32> to vector<16x8xf32>
    %89 = vector.extract_strided_slice %80 {offsets = [0, 8], sizes = [16, 8], strides = [1, 1]} : vector<16x32xf32> to vector<16x8xf32>
    %cst_46 = arith.constant dense<0.000000e+00> : vector<16x16xf32>
    %90 = tpu.matmul %88, %89, %cst_46 {dimension_numbers = #tpu.dot_dimension_numbers<[1], [1], [0], [0], [0, 0, 1, 0], [], []>} : vector<16x8xf32>, vector<16x8xf32>, vector<16x16xf32> -> vector<16x16xf32>
    %91 = arith.addf %90, %3 : vector<16x16xf32>
    %92 = vector.extract_strided_slice %74 {offsets = [0, 16], sizes = [16, 8], strides = [1, 1]} : vector<16x32xf32> to vector<16x8xf32>
    %93 = vector.extract_strided_slice %80 {offsets = [0, 16], sizes = [16, 8], strides = [1, 1]} : vector<16x32xf32> to vector<16x8xf32>
    %cst_47 = arith.constant dense<0.000000e+00> : vector<16x16xf32>
    %94 = tpu.matmul %92, %93, %cst_47 {dimension_numbers = #tpu.dot_dimension_numbers<[1], [1], [0], [0], [0, 0, 1, 0], [], []>} : vector<16x8xf32>, vector<16x8xf32>, vector<16x16xf32> -> vector<16x16xf32>
    %95 = arith.addf %94, %3 : vector<16x16xf32>
    %96 = vector.extract_strided_slice %74 {offsets = [0, 24], sizes = [16, 8], strides = [1, 1]} : vector<16x32xf32> to vector<16x8xf32>
    %97 = vector.extract_strided_slice %80 {offsets = [0, 24], sizes = [16, 8], strides = [1, 1]} : vector<16x32xf32> to vector<16x8xf32>
    %cst_48 = arith.constant dense<0.000000e+00> : vector<16x16xf32>
    %98 = tpu.matmul %96, %97, %cst_48 {dimension_numbers = #tpu.dot_dimension_numbers<[1], [1], [0], [0], [0, 0, 1, 0], [], []>} : vector<16x8xf32>, vector<16x8xf32>, vector<16x16xf32> -> vector<16x16xf32>
    %99 = arith.addf %98, %3 : vector<16x16xf32>
    %100 = tpu.concatenate %87, %91, %95, %99 in 0 : vector<16x16xf32>, vector<16x16xf32>, vector<16x16xf32>, vector<16x16xf32> -> vector<64x16xf32>
    %cst_49 = arith.constant dense<0xFF800000> : vector<64xf32>
    %101 = vector.multi_reduction <maximumf>, %100, %cst_49 [1] : vector<64x16xf32> to vector<64xf32>
    %102 = vector.shape_cast %101 : vector<64xf32> to vector<64x1xf32>
    %103 = vector.broadcast %102 : vector<64x1xf32> to vector<64x16xf32>
    %104 = arith.subf %100, %103 : vector<64x16xf32>
    %105 = math.exp %104 : vector<64x16xf32>
    %cst_50 = arith.constant dense<0.000000e+00> : vector<64xf32>
    %106 = vector.multi_reduction <add>, %105, %cst_50 [1] : vector<64x16xf32> to vector<64xf32>
    %107 = vector.shape_cast %106 : vector<64xf32> to vector<64x1xf32>
    %cst_51 = arith.constant 1.000000e+00 : f32
    %108 = vector.broadcast %cst_51 : f32 to vector<64x1xf32>
    %109 = arith.divf %108, %107 : vector<64x1xf32>
    %110 = vector.broadcast %109 : vector<64x1xf32> to vector<64x16xf32>
    %111 = arith.mulf %105, %110 : vector<64x16xf32>
    %cst_52 = arith.constant 0.000000e+00 : f32
    %112 = vector.broadcast %cst_52 : f32 to vector<16x32xf32>
    %113 = vector.extract_strided_slice %111 {offsets = [0, 0], sizes = [16, 16], strides = [1, 1]} : vector<64x16xf32> to vector<16x16xf32>
    %114 = vector.extract_strided_slice %81 {offsets = [0, 0], sizes = [16, 8], strides = [1, 1]} : vector<16x32xf32> to vector<16x8xf32>
    %cst_53 = arith.constant dense<0.000000e+00> : vector<16x8xf32>
    %115 = tpu.matmul %113, %114, %cst_53 {dimension_numbers = #tpu.dot_dimension_numbers<[1], [0], [0], [1], [0, 0, 1, 1], [], []>} : vector<16x16xf32>, vector<16x8xf32>, vector<16x8xf32> -> vector<16x8xf32>
    %116 = vector.extract_strided_slice %82 {offsets = [0, 0], sizes = [8, 32], strides = [1, 1]} : vector<32x32xf32> to vector<8x32xf32>
    %cst_54 = arith.constant dense<0.000000e+00> : vector<16x32xf32>
    %117 = tpu.matmul %115, %116, %cst_54 {dimension_numbers = #tpu.dot_dimension_numbers<[1], [0], [0], [1], [0, 0, 1, 1], [], []>} : vector<16x8xf32>, vector<8x32xf32>, vector<16x32xf32> -> vector<16x32xf32>
    %118 = arith.addf %112, %117 : vector<16x32xf32>
    %119 = vector.extract_strided_slice %111 {offsets = [16, 0], sizes = [16, 16], strides = [1, 1]} : vector<64x16xf32> to vector<16x16xf32>
    %120 = vector.extract_strided_slice %81 {offsets = [0, 8], sizes = [16, 8], strides = [1, 1]} : vector<16x32xf32> to vector<16x8xf32>
    %cst_55 = arith.constant dense<0.000000e+00> : vector<16x8xf32>
    %121 = tpu.matmul %119, %120, %cst_55 {dimension_numbers = #tpu.dot_dimension_numbers<[1], [0], [0], [1], [0, 0, 1, 1], [], []>} : vector<16x16xf32>, vector<16x8xf32>, vector<16x8xf32> -> vector<16x8xf32>
    %122 = vector.extract_strided_slice %82 {offsets = [8, 0], sizes = [8, 32], strides = [1, 1]} : vector<32x32xf32> to vector<8x32xf32>
    %cst_56 = arith.constant dense<0.000000e+00> : vector<16x32xf32>
    %123 = tpu.matmul %121, %122, %cst_56 {dimension_numbers = #tpu.dot_dimension_numbers<[1], [0], [0], [1], [0, 0, 1, 1], [], []>} : vector<16x8xf32>, vector<8x32xf32>, vector<16x32xf32> -> vector<16x32xf32>
    %124 = arith.addf %118, %123 : vector<16x32xf32>
    %125 = vector.extract_strided_slice %111 {offsets = [32, 0], sizes = [16, 16], strides = [1, 1]} : vector<64x16xf32> to vector<16x16xf32>
    %126 = vector.extract_strided_slice %81 {offsets = [0, 16], sizes = [16, 8], strides = [1, 1]} : vector<16x32xf32> to vector<16x8xf32>
    %cst_57 = arith.constant dense<0.000000e+00> : vector<16x8xf32>
    %127 = tpu.matmul %125, %126, %cst_57 {dimension_numbers = #tpu.dot_dimension_numbers<[1], [0], [0], [1], [0, 0, 1, 1], [], []>} : vector<16x16xf32>, vector<16x8xf32>, vector<16x8xf32> -> vector<16x8xf32>
    %128 = vector.extract_strided_slice %82 {offsets = [16, 0], sizes = [8, 32], strides = [1, 1]} : vector<32x32xf32> to vector<8x32xf32>
    %cst_58 = arith.constant dense<0.000000e+00> : vector<16x32xf32>
    %129 = tpu.matmul %127, %128, %cst_58 {dimension_numbers = #tpu.dot_dimension_numbers<[1], [0], [0], [1], [0, 0, 1, 1], [], []>} : vector<16x8xf32>, vector<8x32xf32>, vector<16x32xf32> -> vector<16x32xf32>
    %130 = arith.addf %124, %129 : vector<16x32xf32>
    %131 = vector.extract_strided_slice %111 {offsets = [48, 0], sizes = [16, 16], strides = [1, 1]} : vector<64x16xf32> to vector<16x16xf32>
    %132 = vector.extract_strided_slice %81 {offsets = [0, 24], sizes = [16, 8], strides = [1, 1]} : vector<16x32xf32> to vector<16x8xf32>
    %cst_59 = arith.constant dense<0.000000e+00> : vector<16x8xf32>
    %133 = tpu.matmul %131, %132, %cst_59 {dimension_numbers = #tpu.dot_dimension_numbers<[1], [0], [0], [1], [0, 0, 1, 1], [], []>} : vector<16x16xf32>, vector<16x8xf32>, vector<16x8xf32> -> vector<16x8xf32>
    %134 = vector.extract_strided_slice %82 {offsets = [24, 0], sizes = [8, 32], strides = [1, 1]} : vector<32x32xf32> to vector<8x32xf32>
    %cst_60 = arith.constant dense<0.000000e+00> : vector<16x32xf32>
    %135 = tpu.matmul %133, %134, %cst_60 {dimension_numbers = #tpu.dot_dimension_numbers<[1], [0], [0], [1], [0, 0, 1, 1], [], []>} : vector<16x8xf32>, vector<8x32xf32>, vector<16x32xf32> -> vector<16x32xf32>
    %136 = arith.addf %130, %135 : vector<16x32xf32>
    %137 = vector.broadcast %83 : vector<1x32xf32> to vector<16x32xf32>
    %138 = arith.addf %136, %137 : vector<16x32xf32>
    %139 = arith.addf %138, %69 : vector<16x32xf32>
    %c0_61 = arith.constant 0 : index
    %c0_62 = arith.constant 0 : index
    %140 = vector.load %arg14[%c0_61, %c0_62] : memref<32x16xf32, #tpu.memory_space<vmem>>, vector<32x16xf32>
    %cst_63 = arith.constant dense<0.000000e+00> : vector<16x16xf32>
    %141 = tpu.matmul %139, %140, %cst_63 {dimension_numbers = #tpu.dot_dimension_numbers<[1], [0], [0], [1], [0, 0, 1, 1], [], []>} : vector<16x32xf32>, vector<32x16xf32>, vector<16x16xf32> -> vector<16x16xf32>
    %c0_64 = arith.constant 0 : index
    %c0_65 = arith.constant 0 : index
    %142 = vector.load %arg15[%c0_64, %c0_65] : memref<1x16xf32, #tpu.memory_space<vmem>>, vector<1x16xf32>
    %143 = vector.broadcast %142 : vector<1x16xf32> to vector<16x16xf32>
    %144 = arith.addf %141, %143 : vector<16x16xf32>
    %cst_66 = arith.constant 0.000000e+00 : f32
    %145 = vector.broadcast %cst_66 : f32 to vector<16x16xf32>
    %146 = arith.cmpf oge, %144, %145 : vector<16x16xf32>
    %cst_67 = arith.constant 0.00999999977 : f32
    %147 = vector.broadcast %cst_67 : f32 to vector<16x16xf32>
    %148 = arith.mulf %147, %144 : vector<16x16xf32>
    %149 = arith.select %146, %144, %148 : vector<16x16xi1>, vector<16x16xf32>
    %c0_68 = arith.constant 0 : index
    %c0_69 = arith.constant 0 : index
    %150 = vector.load %arg16[%c0_68, %c0_69] : memref<16x32xf32, #tpu.memory_space<vmem>>, vector<16x32xf32>
    %cst_70 = arith.constant dense<0.000000e+00> : vector<16x32xf32>
    %151 = tpu.matmul %149, %150, %cst_70 {dimension_numbers = #tpu.dot_dimension_numbers<[1], [0], [0], [1], [0, 0, 1, 1], [], []>} : vector<16x16xf32>, vector<16x32xf32>, vector<16x32xf32> -> vector<16x32xf32>
    %c0_71 = arith.constant 0 : index
    %c0_72 = arith.constant 0 : index
    %152 = vector.load %arg17[%c0_71, %c0_72] : memref<1x32xf32, #tpu.memory_space<vmem>>, vector<1x32xf32>
    %153 = vector.broadcast %152 : vector<1x32xf32> to vector<16x32xf32>
    %154 = arith.addf %151, %153 : vector<16x32xf32>
    %155 = arith.addf %154, %139 : vector<16x32xf32>
    %c0_73 = arith.constant 0 : index
    %c0_74 = arith.constant 0 : index
    %156 = vector.load %arg18[%c0_73, %c0_74] : memref<16x32xf32, #tpu.memory_space<vmem>>, vector<16x32xf32>
    tpu.vector_store %arg18[%c0_73, %c0_74], %155 {strides = array<i32>} : memref<16x32xf32, #tpu.memory_space<vmem>>, vector<16x32xf32>,
    return
  }
}

</mosaic_0001>

<llo_original>
// kernel: transformer_decoder_layer.1
$region0: #{transformer_decoder_layer.1}
  #allocation0 [shape = 'u32[]', space=smem, size = 0x4, offset = 0x4, fixed_abs, tag = 'smem constant byte address 0x4 - core index']
  #allocation1 [shape = 'u32[144,128]{1,0:T(1,128)}', space=vmem, size = 0x12000, scoped, tag = 'internal scratch']
  %s0 = inlined_call_operand.hbm [shape: f32[16,32], index: 0, kind: input, shape index: {}]
  %s1 = inlined_call_operand.hbm [shape: f32[16,32], index: 1, kind: input, shape index: {}]
  %s2 = inlined_call_operand.vmem [shape: f32[16,16], index: 2, kind: input, shape index: {}, may-alias: {2,3}]
  %s3 = inlined_call_operand.vmem [shape: f32[16,16], index: 3, kind: input, shape index: {}, may-alias: {2,3}]
  %s4 = inlined_call_operand.vmem [shape: f32[32,96], index: 4, kind: input, shape index: {}]
  %s5 = inlined_call_operand.vmem [shape: f32[1,96], index: 5, kind: input, shape index: {}]
  %s6 = inlined_call_operand.vmem [shape: f32[32,32], index: 6, kind: input, shape index: {}]
  %s7 = inlined_call_operand.hbm [shape: f32[1,32], index: 7, kind: input, shape index: {}]
  %s8 = inlined_call_operand.vmem [shape: f32[32,32], index: 8, kind: input, shape index: {}]
  %s9 = inlined_call_operand.hbm [shape: f32[1,32], index: 9, kind: input, shape index: {}]
  %s10 = inlined_call_operand.hbm [shape: f32[32,64], index: 10, kind: input, shape index: {}]
  %s11 = inlined_call_operand.hbm [shape: f32[1,64], index: 11, kind: input, shape index: {}]
  %s12 = inlined_call_operand.hbm [shape: f32[32,32], index: 12, kind: input, shape index: {}]
  %s13 = inlined_call_operand.hbm [shape: f32[1,32], index: 13, kind: input, shape index: {}]
  %s14 = inlined_call_operand.vmem [shape: f32[32,16], index: 14, kind: input, shape index: {}]
  %s15 = inlined_call_operand.hbm [shape: f32[1,16], index: 15, kind: input, shape index: {}]
  %s16 = inlined_call_operand.hbm [shape: f32[16,32], index: 16, kind: input, shape index: {}]
  %s17 = inlined_call_operand.hbm [shape: f32[1,32], index: 17, kind: input, shape index: {}]
  %s18 = inlined_call_operand.hbm [shape: f32[16,32], index: 18, kind: output, shape index: {}]
  %s19 = sld [smem:[#allocation0]]
  $region126: #{transformer_decoder_layer.1} parent=0
    _
  %s21 = ssub.s32 1, %s19
  %s22 = scalar_select 0, %s21, %s19
  $region1: #{transformer_decoder_layer.1} parent=0
    #allocation2 [shape = 'u8[8192]{0}', space=vmem, size = 0x2000, scoped, tag = 'input window, operand 0, single buffered']
    #allocation3 [shape = 's32[1]{0}', space=sflag, size = 0x4, scoped, tag = 'scoped memory for transformer_decoder_layer.1']
    #allocation4 [shape = 's32[1]{0}', space=sflag, size = 0x4, scoped, tag = 'scoped memory for transformer_decoder_layer.1']
    #allocation5 [shape = 'u8[8192]{0}', space=vmem, size = 0x2000, scoped, tag = 'input window, operand 1, single buffered']
    #allocation6 [shape = 's32[1]{0}', space=sflag, size = 0x4, scoped, tag = 'scoped memory for transformer_decoder_layer.1']
    #allocation7 [shape = 'u8[512]{0}', space=vmem, size = 0x400, scoped, tag = 'input window, operand 7, single buffered']
    #allocation8 [shape = 'u8[512]{0}', space=vmem, size = 0x400, scoped, tag = 'input window, operand 9, single buffered']
    #allocation9 [shape = 's32[1]{0}', space=sflag, size = 0x4, scoped, tag = 'scoped memory for transformer_decoder_layer.1']
    #allocation10 [shape = 'u8[16384]{0}', space=vmem, size = 0x4000, scoped, tag = 'input window, operand 10, single buffered']
    #allocation11 [shape = 'u8[512]{0}', space=vmem, size = 0x400, scoped, tag = 'input window, operand 11, single buffered']
    #allocation12 [shape = 's32[1]{0}', space=sflag, size = 0x4, scoped, tag = 'scoped memory for transformer_decoder_layer.1']
    #allocation13 [shape = 'u8[16384]{0}', space=vmem, size = 0x4000, scoped, tag = 'input window, operand 12, single buffered']
    #allocation14 [shape = 'u8[512]{0}', space=vmem, size = 0x400, scoped, tag = 'input window, operand 13, single buffered']
    #allocation15 [shape = 's32[1]{0}', space=sflag, size = 0x4, scoped, tag = 'scoped memory for transformer_decoder_layer.1']
    #allocation16 [shape = 'u8[512]{0}', space=vmem, size = 0x400, scoped, tag = 'input window, operand 15, single buffered']
    #allocation17 [shape = 'u8[8192]{0}', space=vmem, size = 0x2000, scoped, tag = 'input window, operand 16, single buffered']
    #allocation18 [shape = 's32[1]{0}', space=sflag, size = 0x4, scoped, tag = 'scoped memory for transformer_decoder_layer.1']
    #allocation19 [shape = 'u8[512]{0}', space=vmem, size = 0x400, scoped, tag = 'input window, operand 17, single buffered']
    #allocation20 [shape = 'u8[8192]{0}', space=vmem, size = 0x2000, scoped, tag = 'output window, operand 0, single buffered']
    %23 = vsyncpa [#allocation3], 0
    %24 = vsyncpa [#allocation6], 0
    %25 = vsyncpa [#allocation9], 0
    %26 = vsyncpa [#allocation12], 0
    %27 = vsyncpa [#allocation15], 0
    %28 = vsyncpa [#allocation18], 0
    %29 = vsyncpa [#allocation4], 0
    // Predicated region
    $region2: #{transformer_decoder_layer.1} parent=1 // pred_check
      _
    $region3: #{transformer_decoder_layer.1} parent=1 // pred_check_branch
      %31 = sbr.rel (0) target = $region5
    $region4: #{transformer_decoder_layer.1} parent=1 // pred_region
      %s33 = ssub.s32 256, 256
      %34 = vsyncadd [#allocation3], %s33
      %s35 = sshll.u32 [#allocation2], 4
      %s36 = int_to_ptr.vmem [resolvable:$true] %s35
      %41 = dma.hbm_to_vmem [thread:$0]  %s0, 256, %s36, [#allocation3], 128, 128, 8
    $region5: #{transformer_decoder_layer.1} parent=1 // pred_fallthru
      _
    // Predicated region
    $region6: #{transformer_decoder_layer.1} parent=1 // pred_check
      _
    $region7: #{transformer_decoder_layer.1} parent=1 // pred_check_branch
      %43 = sbr.rel (0) target = $region9
    $region8: #{transformer_decoder_layer.1} parent=1 // pred_region
      %s45 = ssub.s32 256, 256
      %46 = vsyncadd [#allocation6], %s45
      %s47 = sshll.u32 [#allocation5], 4
      %s48 = int_to_ptr.vmem [resolvable:$true] %s47
      %53 = dma.hbm_to_vmem [thread:$0]  %s1, 256, %s48, [#allocation6], 128, 128, 8
    $region9: #{transformer_decoder_layer.1} parent=1 // pred_fallthru
      _
    // Predicated region
    $region10: #{transformer_decoder_layer.1} parent=1 // pred_check
      _
    $region11: #{transformer_decoder_layer.1} parent=1 // pred_check_branch
      %55 = sbr.rel (0) target = $region13
    $region12: #{transformer_decoder_layer.1} parent=1 // pred_region
      _
    $region13: #{transformer_decoder_layer.1} parent=1 // pred_fallthru
      _
    // Predicated region
    $region14: #{transformer_decoder_layer.1} parent=1 // pred_check
      _
    $region15: #{transformer_decoder_layer.1} parent=1 // pred_check_branch
      %57 = sbr.rel (0) target = $region17
    $region16: #{transformer_decoder_layer.1} parent=1 // pred_region
      _
    $region17: #{transformer_decoder_layer.1} parent=1 // pred_fallthru
      _
    // Predicated region
    $region18: #{transformer_decoder_layer.1} parent=1 // pred_check
      _
    $region19: #{transformer_decoder_layer.1} parent=1 // pred_check_branch
      %59 = sbr.rel (0) target = $region21
    $region20: #{transformer_decoder_layer.1} parent=1 // pred_region
      _
    $region21: #{transformer_decoder_layer.1} parent=1 // pred_fallthru
      _
    // Predicated region
    $region22: #{transformer_decoder_layer.1} parent=1 // pred_check
      _
    $region23: #{transformer_decoder_layer.1} parent=1 // pred_check_branch
      %61 = sbr.rel (0) target = $region25
    $region24: #{transformer_decoder_layer.1} parent=1 // pred_region
      _
    $region25: #{transformer_decoder_layer.1} parent=1 // pred_fallthru
      _
    // Predicated region
    $region26: #{transformer_decoder_layer.1} parent=1 // pred_check
      _
    $region27: #{transformer_decoder_layer.1} parent=1 // pred_check_branch
      %63 = sbr.rel (0) target = $region29
    $region28: #{transformer_decoder_layer.1} parent=1 // pred_region
      _
    $region29: #{transformer_decoder_layer.1} parent=1 // pred_fallthru
      _
    // Predicated region
    $region30: #{transformer_decoder_layer.1} parent=1 // pred_check
      _
    $region31: #{transformer_decoder_layer.1} parent=1 // pred_check_branch
      %65 = sbr.rel (0) target = $region33
    $region32: #{transformer_decoder_layer.1} parent=1 // pred_region
      %s67 = ssub.s32 16, 16
      %68 = vsyncadd [#allocation6], %s67
      %s70 = sshll.u32 [#allocation7], 4
      %s71 = int_to_ptr.vmem [resolvable:$true] %s70
      %73 = dma.hbm_to_vmem [thread:$0]  %s7, 16, %s71, [#allocation6]
    $region33: #{transformer_decoder_layer.1} parent=1 // pred_fallthru
      _
    // Predicated region
    $region34: #{transformer_decoder_layer.1} parent=1 // pred_check
      _
    $region35: #{transformer_decoder_layer.1} parent=1 // pred_check_branch
      %75 = sbr.rel (0) target = $region37
    $region36: #{transformer_decoder_layer.1} parent=1 // pred_region
      _
    $region37: #{transformer_decoder_layer.1} parent=1 // pred_fallthru
      _
    // Predicated region
    $region38: #{transformer_decoder_layer.1} parent=1 // pred_check
      _
    $region39: #{transformer_decoder_layer.1} parent=1 // pred_check_branch
      %77 = sbr.rel (0) target = $region41
    $region40: #{transformer_decoder_layer.1} parent=1 // pred_region
      %s79 = ssub.s32 16, 16
      %80 = vsyncadd [#allocation9], %s79
      %s82 = sshll.u32 [#allocation8], 4
      %s83 = int_to_ptr.vmem [resolvable:$true] %s82
      %85 = dma.hbm_to_vmem [thread:$0]  %s9, 16, %s83, [#allocation9]
    $region41: #{transformer_decoder_layer.1} parent=1 // pred_fallthru
      _
    // Predicated region
    $region42: #{transformer_decoder_layer.1} parent=1 // pred_check
      _
    $region43: #{transformer_decoder_layer.1} parent=1 // pred_check_branch
      %87 = sbr.rel (0) target = $region45
    $region44: #{transformer_decoder_layer.1} parent=1 // pred_region
      %s89 = ssub.s32 512, 512
      %90 = vsyncadd [#allocation9], %s89
      %s91 = sshll.u32 [#allocation10], 4
      %s92 = int_to_ptr.vmem [resolvable:$true] %s91
      %97 = dma.hbm_to_vmem [thread:$0]  %s10, 512, %s92, [#allocation9], 128, 128, 8
    $region45: #{transformer_decoder_layer.1} parent=1 // pred_fallthru
      _
    // Predicated region
    $region46: #{transformer_decoder_layer.1} parent=1 // pred_check
      _
    $region47: #{transformer_decoder_layer.1} parent=1 // pred_check_branch
      %99 = sbr.rel (0) target = $region49
    $region48: #{transformer_decoder_layer.1} parent=1 // pred_region
      %s101 = ssub.s32 16, 16
      %102 = vsyncadd [#allocation12], %s101
      %s104 = sshll.u32 [#allocation11], 4
      %s105 = int_to_ptr.vmem [resolvable:$true] %s104
      %107 = dma.hbm_to_vmem [thread:$0]  %s11, 16, %s105, [#allocation12]
    $region49: #{transformer_decoder_layer.1} parent=1 // pred_fallthru
      _
    // Predicated region
    $region50: #{transformer_decoder_layer.1} parent=1 // pred_check
      _
    $region51: #{transformer_decoder_layer.1} parent=1 // pred_check_branch
      %109 = sbr.rel (0) target = $region53
    $region52: #{transformer_decoder_layer.1} parent=1 // pred_region
      %s111 = ssub.s32 512, 512
      %112 = vsyncadd [#allocation12], %s111
      %s113 = sshll.u32 [#allocation13], 4
      %s114 = int_to_ptr.vmem [resolvable:$true] %s113
      %119 = dma.hbm_to_vmem [thread:$0]  %s12, 512, %s114, [#allocation12], 128, 128, 8
    $region53: #{transformer_decoder_layer.1} parent=1 // pred_fallthru
      _
    // Predicated region
    $region54: #{transformer_decoder_layer.1} parent=1 // pred_check
      _
    $region55: #{transformer_decoder_layer.1} parent=1 // pred_check_branch
      %121 = sbr.rel (0) target = $region57
    $region56: #{transformer_decoder_layer.1} parent=1 // pred_region
      %s123 = ssub.s32 16, 16
      %124 = vsyncadd [#allocation15], %s123
      %s126 = sshll.u32 [#allocation14], 4
      %s127 = int_to_ptr.vmem [resolvable:$true] %s126
      %129 = dma.hbm_to_vmem [thread:$0]  %s13, 16, %s127, [#allocation15]
    $region57: #{transformer_decoder_layer.1} parent=1 // pred_fallthru
      _
    // Predicated region
    $region58: #{transformer_decoder_layer.1} parent=1 // pred_check
      _
    $region59: #{transformer_decoder_layer.1} parent=1 // pred_check_branch
      %131 = sbr.rel (0) target = $region61
    $region60: #{transformer_decoder_layer.1} parent=1 // pred_region
      _
    $region61: #{transformer_decoder_layer.1} parent=1 // pred_fallthru
      _
    // Predicated region
    $region62: #{transformer_decoder_layer.1} parent=1 // pred_check
      _
    $region63: #{transformer_decoder_layer.1} parent=1 // pred_check_branch
      %133 = sbr.rel (0) target = $region65
    $region64: #{transformer_decoder_layer.1} parent=1 // pred_region
      %s135 = ssub.s32 16, 16
      %136 = vsyncadd [#allocation15], %s135
      %s138 = sshll.u32 [#allocation16], 4
      %s139 = int_to_ptr.vmem [resolvable:$true] %s138
      %141 = dma.hbm_to_vmem [thread:$0]  %s15, 16, %s139, [#allocation15]
    $region65: #{transformer_decoder_layer.1} parent=1 // pred_fallthru
      _
    // Predicated region
    $region66: #{transformer_decoder_layer.1} parent=1 // pred_check
      _
    $region67: #{transformer_decoder_layer.1} parent=1 // pred_check_branch
      %143 = sbr.rel (0) target = $region69
    $region68: #{transformer_decoder_layer.1} parent=1 // pred_region
      %s145 = ssub.s32 256, 256
      %146 = vsyncadd [#allocation18], %s145
      %s147 = sshll.u32 [#allocation17], 4
      %s148 = int_to_ptr.vmem [resolvable:$true] %s147
      %153 = dma.hbm_to_vmem [thread:$0]  %s16, 256, %s148, [#allocation18], 128, 128, 8
    $region69: #{transformer_decoder_layer.1} parent=1 // pred_fallthru
      _
    // Predicated region
    $region70: #{transformer_decoder_layer.1} parent=1 // pred_check
      _
    $region71: #{transformer_decoder_layer.1} parent=1 // pred_check_branch
      %155 = sbr.rel (0) target = $region73
    $region72: #{transformer_decoder_layer.1} parent=1 // pred_region
      %s157 = ssub.s32 16, 16
      %158 = vsyncadd [#allocation18], %s157
      %s160 = sshll.u32 [#allocation19], 4
      %s161 = int_to_ptr.vmem [resolvable:$true] %s160
      %163 = dma.hbm_to_vmem [thread:$0]  %s17, 16, %s161, [#allocation18]
    $region73: #{transformer_decoder_layer.1} parent=1 // pred_fallthru
      _
    // Predicated region
    $region74: #{transformer_decoder_layer.1} parent=1 // pred_check
      _
    $region75: #{transformer_decoder_layer.1} parent=1 // pred_check_branch
      %165 = sbr.rel (0) target = $region77
    $region76: #{transformer_decoder_layer.1} parent=1 // pred_region
      %166 = dma.done [#allocation3], 256
    $region77: #{transformer_decoder_layer.1} parent=1 // pred_fallthru
      _
    // Predicated region
    $region78: #{transformer_decoder_layer.1} parent=1 // pred_check
      _
    $region79: #{transformer_decoder_layer.1} parent=1 // pred_check_branch
      %168 = sbr.rel (0) target = $region81
    $region80: #{transformer_decoder_layer.1} parent=1 // pred_region
      %169 = dma.done [#allocation6], 256
    $region81: #{transformer_decoder_layer.1} parent=1 // pred_fallthru
      _
    // Predicated region
    $region82: #{transformer_decoder_layer.1} parent=1 // pred_check
      _
    $region83: #{transformer_decoder_layer.1} parent=1 // pred_check_branch
      %171 = sbr.rel (0) target = $region85
    $region84: #{transformer_decoder_layer.1} parent=1 // pred_region
      %172 = dma.done [#allocation6], 16
    $region85: #{transformer_decoder_layer.1} parent=1 // pred_fallthru
      _
    // Predicated region
    $region86: #{transformer_decoder_layer.1} parent=1 // pred_check
      _
    $region87: #{transformer_decoder_layer.1} parent=1 // pred_check_branch
      %174 = sbr.rel (0) target = $region89
    $region88: #{transformer_decoder_layer.1} parent=1 // pred_region
      %175 = dma.done [#allocation9], 16
    $region89: #{transformer_decoder_layer.1} parent=1 // pred_fallthru
      _
    // Predicated region
    $region90: #{transformer_decoder_layer.1} parent=1 // pred_check
      _
    $region91: #{transformer_decoder_layer.1} parent=1 // pred_check_branch
      %177 = sbr.rel (0) target = $region93
    $region92: #{transformer_decoder_layer.1} parent=1 // pred_region
      %178 = dma.done [#allocation9], 512
    $region93: #{transformer_decoder_layer.1} parent=1 // pred_fallthru
      _
    // Predicated region
    $region94: #{transformer_decoder_layer.1} parent=1 // pred_check
      _
    $region95: #{transformer_decoder_layer.1} parent=1 // pred_check_branch
      %180 = sbr.rel (0) target = $region97
    $region96: #{transformer_decoder_layer.1} parent=1 // pred_region
      %181 = dma.done [#allocation12], 16
    $region97: #{transformer_decoder_layer.1} parent=1 // pred_fallthru
      _
    // Predicated region
    $region98: #{transformer_decoder_layer.1} parent=1 // pred_check
      _
    $region99: #{transformer_decoder_layer.1} parent=1 // pred_check_branch
      %183 = sbr.rel (0) target = $region101
    $region100: #{transformer_decoder_layer.1} parent=1 // pred_region
      %184 = dma.done [#allocation12], 512
    $region101: #{transformer_decoder_layer.1} parent=1 // pred_fallthru
      _
    // Predicated region
    $region102: #{transformer_decoder_layer.1} parent=1 // pred_check
      _
    $region103: #{transformer_decoder_layer.1} parent=1 // pred_check_branch
      %186 = sbr.rel (0) target = $region105
    $region104: #{transformer_decoder_layer.1} parent=1 // pred_region
      %187 = dma.done [#allocation15], 16
    $region105: #{transformer_decoder_layer.1} parent=1 // pred_fallthru
      _
    // Predicated region
    $region106: #{transformer_decoder_layer.1} parent=1 // pred_check
      _
    $region107: #{transformer_decoder_layer.1} parent=1 // pred_check_branch
      %189 = sbr.rel (0) target = $region109
    $region108: #{transformer_decoder_layer.1} parent=1 // pred_region
      %190 = dma.done [#allocation15], 16
    $region109: #{transformer_decoder_layer.1} parent=1 // pred_fallthru
      _
    // Predicated region
    $region110: #{transformer_decoder_layer.1} parent=1 // pred_check
      _
    $region111: #{transformer_decoder_layer.1} parent=1 // pred_check_branch
      %192 = sbr.rel (0) target = $region113
    $region112: #{transformer_decoder_layer.1} parent=1 // pred_region
      %193 = dma.done [#allocation18], 256
    $region113: #{transformer_decoder_layer.1} parent=1 // pred_fallthru
      _
    // Predicated region
    $region114: #{transformer_decoder_layer.1} parent=1 // pred_check
      _
    $region115: #{transformer_decoder_layer.1} parent=1 // pred_check_branch
      %195 = sbr.rel (0) target = $region117
    $region116: #{transformer_decoder_layer.1} parent=1 // pred_region
      %196 = dma.done [#allocation18], 16
    $region117: #{transformer_decoder_layer.1} parent=1 // pred_fallthru
      _
    %v197 = vld [vmem:[#allocation2] sm:$0xff]
    %v198 = vld [vmem:[#allocation2 + $0x8] sm:$0xff]
    %v199 = vld [vmem:[#allocation5] sm:$0xff]
    %v200 = vld [vmem:[#allocation5 + $0x8] sm:$0xff]
    %v201 = vld [vmem:[%s2] sm:$0xff]
    %v202 = vld [vmem:[%s2 + $0x8] sm:$0xff]
    %v203 = vld [vmem:[%s3] sm:$0xff]
    %v204 = vld [vmem:[%s3 + $0x8] sm:$0xff]
    %v205 = vld [vmem:[%s4] sm:$0xff]
    %v206 = vld [vmem:[%s4 + $0x8] sm:$0xff]
    %v207 = vld [vmem:[%s4 + $0x10] sm:$0xff]
    %v208 = vld [vmem:[%s4 + $0x18] sm:$0xff]
    %v209 = vld [vmem:[%s5] sm:$0x1]
    %v211 = vlaneseq
    %v212 = vshrl.u32 %v211, 7
    %v213 = vsub.s32 0, %v212
    %v214 = vrot.slane %v209, %v213
    %vm216 = vcmask 261120
    %v218 = vsel %vm216, %v197, 0
    %v221 = vsel %vm216, %v198, 0
    %223 = vmatprep.subr.mxu0 0.0
    %224 = vmatpush1.msra.mxu0 0.0
    %225 = vmatprep.subr.mxu0 0.0
    %226 = vmatpush1.msra.mxu0 0.0
    %227 = vmatprep.subr.mxu0 0.0
    %228 = vmatpush1.msra.mxu0 0.0
    %229 = vmatprep.subr.mxu0 0.0
    %230 = vmatpush1.msra.mxu0 0.0
    %231 = vmatprep.subr.mxu0 0.0
    %232 = vmatpush1.msra.mxu0 0.0
    %233 = vmatprep.subr.mxu0 0.0
    %234 = vmatpush1.msra.mxu0 0.0
    %235 = vmatprep.subr.mxu0 0.0
    %236 = vmatpush1.msra.mxu0 0.0
    %237 = vmatprep.subr.mxu0 0.0
    %238 = vmatpush1.msra.mxu0 0.0
    %239 = vmatprep.subr.mxu0 0.0
    %240 = vmatpush1.msra.mxu0 0.0
    %241 = vmatprep.subr.mxu0 0.0
    %242 = vmatpush1.msra.mxu0 0.0
    %243 = vmatprep.subr.mxu0 0.0
    %244 = vmatpush1.msra.mxu0 0.0
    %245 = vmatprep.subr.mxu0 0.0
    %246 = vmatpush1.msra.mxu0 0.0
    %247 = vmatprep.subr.mxu0 0.0
    %248 = vmatpush1.msra.mxu0 %v208
    %249 = vmatprep.subr.mxu0 0.0
    %250 = vmatpush1.msra.mxu0 %v207
    %251 = vmatprep.subr.mxu0 0.0
    %252 = vmatpush1.msra.mxu0 %v206
    %253 = vmatprep.subr.mxu0 0.0
    %254 = vmatpush1.msra.mxu0 %v205
    %255 = vmatprep.subr.mxu0 0.0
    %256 = vmatpush2.msra.mxu0 0.0
    %257 = vmatprep.subr.mxu0 0.0
    %258 = vmatpush2.msra.mxu0 0.0
    %259 = vmatprep.subr.mxu0 0.0
    %260 = vmatpush2.msra.mxu0 0.0
    %261 = vmatprep.subr.mxu0 0.0
    %262 = vmatpush2.msra.mxu0 0.0
    %263 = vmatprep.subr.mxu0 0.0
    %264 = vmatpush2.msra.mxu0 0.0
    %265 = vmatprep.subr.mxu0 0.0
    %266 = vmatpush2.msra.mxu0 0.0
    %267 = vmatprep.subr.mxu0 0.0
    %268 = vmatpush2.msra.mxu0 0.0
    %269 = vmatprep.subr.mxu0 0.0
    %270 = vmatpush2.msra.mxu0 0.0
    %271 = vmatprep.subr.mxu0 0.0
    %272 = vmatpush2.msra.mxu0 0.0
    %273 = vmatprep.subr.mxu0 0.0
    %274 = vmatpush2.msra.mxu0 0.0
    %275 = vmatprep.subr.mxu0 0.0
    %276 = vmatpush2.msra.mxu0 0.0
    %277 = vmatprep.subr.mxu0 0.0
    %278 = vmatpush2.msra.mxu0 0.0
    %279 = vmatprep.subr.mxu0 0.0
    %280 = vmatpush2.msra.mxu0 0.0
    %281 = vmatprep.subr.mxu0 0.0
    %282 = vmatpush2.msra.mxu0 0.0
    %283 = vmatprep.subr.mxu0 0.0
    %284 = vmatpush2.msra.mxu0 0.0
    %285 = vmatprep.subr.mxu0 0.0
    %286 = vmatpush2.msra.mxu0 0.0
    %287 = vmatprep.mubr.f32.mxu0 0.0
    %288 = vmatmul.mubr.f32.gmra.mxu0 %v218
    %v289 = vpop.f32.mrf.mxu0
    %v290 = vadd.f32 %v214, %v289
    %v291 = vpop.f32.mrf.mxu0
    %292 = vmatprep.mubr.f32.mxu0 0.0
    %293 = vmatmul.mubr.f32.gmra.mxu0 %v221
    %v294 = vpop.f32.mrf.mxu0
    %v295 = vadd.f32 %v214, %v294
    %v296 = vpop.f32.mrf.mxu0
    %297 = vdwg.mxu0
    %v298 = vld [vmem:[%s6] sm:$0xff]
    %v299 = vld [vmem:[%s6 + $0x8] sm:$0xff]
    %v300 = vld [vmem:[%s6 + $0x10] sm:$0xff]
    %v301 = vld [vmem:[%s6 + $0x18] sm:$0xff]
    %v302 = vld [vmem:[#allocation7] sm:$0x1]
    %305 = vrot.lane.b32.xlu0 %v290, 96
    %v306 = vpop.permute.xlu0 %305
    %307 = vrot.lane.b32.xlu0 %v295, 96
    %v308 = vpop.permute.xlu0 %307
    %vm309 = vcmask 64512
    %v310 = vsel %vm309, %v290, 0
    %v312 = vsel %vm309, %v295, 0
    %v314 = vsel %vm309, %v306, 0
    %v316 = vsel %vm309, %v308, 0
    %318 = vmatprep.subr.mxu0 0.0
    %319 = vmatpush1.xpose.msra.mxu0 0.0
    %320 = vmatprep.subr.mxu0 0.0
    %321 = vmatpush1.xpose.msra.mxu0 0.0
    %322 = vmatprep.subr.mxu0 0.0
    %323 = vmatpush1.xpose.msra.mxu0 0.0
    %324 = vmatprep.subr.mxu0 0.0
    %325 = vmatpush1.xpose.msra.mxu0 0.0
    %326 = vmatprep.subr.mxu0 0.0
    %327 = vmatpush1.xpose.msra.mxu0 0.0
    %328 = vmatprep.subr.mxu0 0.0
    %329 = vmatpush1.xpose.msra.mxu0 0.0
    %330 = vmatprep.subr.mxu0 0.0
    %331 = vmatpush1.xpose.msra.mxu0 0.0
    %332 = vmatprep.subr.mxu0 0.0
    %333 = vmatpush1.xpose.msra.mxu0 0.0
    %334 = vmatprep.subr.mxu0 0.0
    %335 = vmatpush1.xpose.msra.mxu0 0.0
    %336 = vmatprep.subr.mxu0 0.0
    %337 = vmatpush1.xpose.msra.mxu0 0.0
    %338 = vmatprep.subr.mxu0 0.0
    %339 = vmatpush1.xpose.msra.mxu0 0.0
    %340 = vmatprep.subr.mxu0 0.0
    %341 = vmatpush1.xpose.msra.mxu0 0.0
    %342 = vmatprep.subr.mxu0 0.0
    %343 = vmatpush1.xpose.msra.mxu0 0.0
    %344 = vmatprep.subr.mxu0 0.0
    %345 = vmatpush1.xpose.msra.mxu0 0.0
    %346 = vmatprep.subr.mxu0 0.0
    %347 = vmatpush1.xpose.msra.mxu0 %v316
    %348 = vmatprep.subr.mxu0 0.0
    %349 = vmatpush1.xpose.msra.mxu0 %v314
    %350 = vmatprep.subr.mxu0 0.0
    %351 = vmatpush2.xpose.msra.mxu0 0.0
    %352 = vmatprep.subr.mxu0 0.0
    %353 = vmatpush2.xpose.msra.mxu0 0.0
    %354 = vmatprep.subr.mxu0 0.0
    %355 = vmatpush2.xpose.msra.mxu0 0.0
    %356 = vmatprep.subr.mxu0 0.0
    %357 = vmatpush2.xpose.msra.mxu0 0.0
    %358 = vmatprep.subr.mxu0 0.0
    %359 = vmatpush2.xpose.msra.mxu0 0.0
    %360 = vmatprep.subr.mxu0 0.0
    %361 = vmatpush2.xpose.msra.mxu0 0.0
    %362 = vmatprep.subr.mxu0 0.0
    %363 = vmatpush2.xpose.msra.mxu0 0.0
    %364 = vmatprep.subr.mxu0 0.0
    %365 = vmatpush2.xpose.msra.mxu0 0.0
    %366 = vmatprep.subr.mxu0 0.0
    %367 = vmatpush2.xpose.msra.mxu0 0.0
    %368 = vmatprep.subr.mxu0 0.0
    %369 = vmatpush2.xpose.msra.mxu0 0.0
    %370 = vmatprep.subr.mxu0 0.0
    %371 = vmatpush2.xpose.msra.mxu0 0.0
    %372 = vmatprep.subr.mxu0 0.0
    %373 = vmatpush2.xpose.msra.mxu0 0.0
    %374 = vmatprep.subr.mxu0 0.0
    %375 = vmatpush2.xpose.msra.mxu0 0.0
    %376 = vmatprep.subr.mxu0 0.0
    %377 = vmatpush2.xpose.msra.mxu0 0.0
    %378 = vmatprep.subr.mxu0 0.0
    %379 = vmatpush2.xpose.msra.mxu0 0.0
    %380 = vmatprep.subr.mxu0 0.0
    %381 = vmatpush2.xpose.msra.mxu0 0.0
    %382 = vmatprep.mubr.f32.mxu0 0.0
    %383 = vmatmul.mubr.f32.gmra.mxu0 %v310
    %v384 = vpop.f32.mrf.mxu0
    %v385 = vadd.f32 %v201, %v384
    %v386 = vpop.f32.mrf.mxu0
    %387 = vmatprep.mubr.f32.mxu0 0.0
    %388 = vmatmul.mubr.f32.gmra.mxu0 %v312
    %v389 = vpop.f32.mrf.mxu0
    %v390 = vadd.f32 %v202, %v389
    %v391 = vpop.f32.mrf.mxu0
    %392 = vdwg.mxu0
    %393 = vrot.lane.b32.xlu0 %v290, 120
    %v394 = vpop.permute.xlu0 %393
    %395 = vrot.lane.b32.xlu0 %v295, 120
    %v396 = vpop.permute.xlu0 %395
    %397 = vrot.lane.b32.xlu0 %v290, 88
    %v398 = vpop.permute.xlu0 %397
    %399 = vrot.lane.b32.xlu0 %v295, 88
    %v400 = vpop.permute.xlu0 %399
    %v401 = vsel %vm309, %v394, 0
    %v403 = vsel %vm309, %v396, 0
    %v405 = vsel %vm309, %v398, 0
    %v407 = vsel %vm309, %v400, 0
    %409 = vmatprep.subr.mxu0 0.0
    %410 = vmatpush1.xpose.msra.mxu0 0.0
    %411 = vmatprep.subr.mxu0 0.0
    %412 = vmatpush1.xpose.msra.mxu0 0.0
    %413 = vmatprep.subr.mxu0 0.0
    %414 = vmatpush1.xpose.msra.mxu0 0.0
    %415 = vmatprep.subr.mxu0 0.0
    %416 = vmatpush1.xpose.msra.mxu0 0.0
    %417 = vmatprep.subr.mxu0 0.0
    %418 = vmatpush1.xpose.msra.mxu0 0.0
    %419 = vmatprep.subr.mxu0 0.0
    %420 = vmatpush1.xpose.msra.mxu0 0.0
    %421 = vmatprep.subr.mxu0 0.0
    %422 = vmatpush1.xpose.msra.mxu0 0.0
    %423 = vmatprep.subr.mxu0 0.0
    %424 = vmatpush1.xpose.msra.mxu0 0.0
    %425 = vmatprep.subr.mxu0 0.0
    %426 = vmatpush1.xpose.msra.mxu0 0.0
    %427 = vmatprep.subr.mxu0 0.0
    %428 = vmatpush1.xpose.msra.mxu0 0.0
    %429 = vmatprep.subr.mxu0 0.0
    %430 = vmatpush1.xpose.msra.mxu0 0.0
    %431 = vmatprep.subr.mxu0 0.0
    %432 = vmatpush1.xpose.msra.mxu0 0.0
    %433 = vmatprep.subr.mxu0 0.0
    %434 = vmatpush1.xpose.msra.mxu0 0.0
    %435 = vmatprep.subr.mxu0 0.0
    %436 = vmatpush1.xpose.msra.mxu0 0.0
    %437 = vmatprep.subr.mxu0 0.0
    %438 = vmatpush1.xpose.msra.mxu0 %v407
    %439 = vmatprep.subr.mxu0 0.0
    %440 = vmatpush1.xpose.msra.mxu0 %v405
    %441 = vmatprep.subr.mxu0 0.0
    %442 = vmatpush2.xpose.msra.mxu0 0.0
    %443 = vmatprep.subr.mxu0 0.0
    %444 = vmatpush2.xpose.msra.mxu0 0.0
    %445 = vmatprep.subr.mxu0 0.0
    %446 = vmatpush2.xpose.msra.mxu0 0.0
    %447 = vmatprep.subr.mxu0 0.0
    %448 = vmatpush2.xpose.msra.mxu0 0.0
    %449 = vmatprep.subr.mxu0 0.0
    %450 = vmatpush2.xpose.msra.mxu0 0.0
    %451 = vmatprep.subr.mxu0 0.0
    %452 = vmatpush2.xpose.msra.mxu0 0.0
    %453 = vmatprep.subr.mxu0 0.0
    %454 = vmatpush2.xpose.msra.mxu0 0.0
    %455 = vmatprep.subr.mxu0 0.0
    %456 = vmatpush2.xpose.msra.mxu0 0.0
    %457 = vmatprep.subr.mxu0 0.0
    %458 = vmatpush2.xpose.msra.mxu0 0.0
    %459 = vmatprep.subr.mxu0 0.0
    %460 = vmatpush2.xpose.msra.mxu0 0.0
    %461 = vmatprep.subr.mxu0 0.0
    %462 = vmatpush2.xpose.msra.mxu0 0.0
    %463 = vmatprep.subr.mxu0 0.0
    %464 = vmatpush2.xpose.msra.mxu0 0.0
    %465 = vmatprep.subr.mxu0 0.0
    %466 = vmatpush2.xpose.msra.mxu0 0.0
    %467 = vmatprep.subr.mxu0 0.0
    %468 = vmatpush2.xpose.msra.mxu0 0.0
    %469 = vmatprep.subr.mxu0 0.0
    %470 = vmatpush2.xpose.msra.mxu0 0.0
    %471 = vmatprep.subr.mxu0 0.0
    %472 = vmatpush2.xpose.msra.mxu0 0.0
    %473 = vmatprep.mubr.f32.mxu0 0.0
    %474 = vmatmul.mubr.f32.gmra.mxu0 %v401
    %v475 = vpop.f32.mrf.mxu0
    %v476 = vadd.f32 %v201, %v475
    %v477 = vpop.f32.mrf.mxu0
    %478 = vmatprep.mubr.f32.mxu0 0.0
    %479 = vmatmul.mubr.f32.gmra.mxu0 %v403
    %v480 = vpop.f32.mrf.mxu0
    %v481 = vadd.f32 %v202, %v480
    %v482 = vpop.f32.mrf.mxu0
    %483 = vdwg.mxu0
    %484 = vrot.lane.b32.xlu0 %v290, 112
    %v485 = vpop.permute.xlu0 %484
    %486 = vrot.lane.b32.xlu0 %v295, 112
    %v487 = vpop.permute.xlu0 %486
    %488 = vrot.lane.b32.xlu0 %v290, 80
    %v489 = vpop.permute.xlu0 %488
    %490 = vrot.lane.b32.xlu0 %v295, 80
    %v491 = vpop.permute.xlu0 %490
    %v492 = vsel %vm309, %v485, 0
    %v494 = vsel %vm309, %v487, 0
    %v496 = vsel %vm309, %v489, 0
    %v498 = vsel %vm309, %v491, 0
    %500 = vmatprep.subr.mxu0 0.0
    %501 = vmatpush1.xpose.msra.mxu0 0.0
    %502 = vmatprep.subr.mxu0 0.0
    %503 = vmatpush1.xpose.msra.mxu0 0.0
    %504 = vmatprep.subr.mxu0 0.0
    %505 = vmatpush1.xpose.msra.mxu0 0.0
    %506 = vmatprep.subr.mxu0 0.0
    %507 = vmatpush1.xpose.msra.mxu0 0.0
    %508 = vmatprep.subr.mxu0 0.0
    %509 = vmatpush1.xpose.msra.mxu0 0.0
    %510 = vmatprep.subr.mxu0 0.0
    %511 = vmatpush1.xpose.msra.mxu0 0.0
    %512 = vmatprep.subr.mxu0 0.0
    %513 = vmatpush1.xpose.msra.mxu0 0.0
    %514 = vmatprep.subr.mxu0 0.0
    %515 = vmatpush1.xpose.msra.mxu0 0.0
    %516 = vmatprep.subr.mxu0 0.0
    %517 = vmatpush1.xpose.msra.mxu0 0.0
    %518 = vmatprep.subr.mxu0 0.0
    %519 = vmatpush1.xpose.msra.mxu0 0.0
    %520 = vmatprep.subr.mxu0 0.0
    %521 = vmatpush1.xpose.msra.mxu0 0.0
    %522 = vmatprep.subr.mxu0 0.0
    %523 = vmatpush1.xpose.msra.mxu0 0.0
    %524 = vmatprep.subr.mxu0 0.0
    %525 = vmatpush1.xpose.msra.mxu0 0.0
    %526 = vmatprep.subr.mxu0 0.0
    %527 = vmatpush1.xpose.msra.mxu0 0.0
    %528 = vmatprep.subr.mxu0 0.0
    %529 = vmatpush1.xpose.msra.mxu0 %v498
    %530 = vmatprep.subr.mxu0 0.0
    %531 = vmatpush1.xpose.msra.mxu0 %v496
    %532 = vmatprep.subr.mxu0 0.0
    %533 = vmatpush2.xpose.msra.mxu0 0.0
    %534 = vmatprep.subr.mxu0 0.0
    %535 = vmatpush2.xpose.msra.mxu0 0.0
    %536 = vmatprep.subr.mxu0 0.0
    %537 = vmatpush2.xpose.msra.mxu0 0.0
    %538 = vmatprep.subr.mxu0 0.0
    %539 = vmatpush2.xpose.msra.mxu0 0.0
    %540 = vmatprep.subr.mxu0 0.0
    %541 = vmatpush2.xpose.msra.mxu0 0.0
    %542 = vmatprep.subr.mxu0 0.0
    %543 = vmatpush2.xpose.msra.mxu0 0.0
    %544 = vmatprep.subr.mxu0 0.0
    %545 = vmatpush2.xpose.msra.mxu0 0.0
    %546 = vmatprep.subr.mxu0 0.0
    %547 = vmatpush2.xpose.msra.mxu0 0.0
    %548 = vmatprep.subr.mxu0 0.0
    %549 = vmatpush2.xpose.msra.mxu0 0.0
    %550 = vmatprep.subr.mxu0 0.0
    %551 = vmatpush2.xpose.msra.mxu0 0.0
    %552 = vmatprep.subr.mxu0 0.0
    %553 = vmatpush2.xpose.msra.mxu0 0.0
    %554 = vmatprep.subr.mxu0 0.0
    %555 = vmatpush2.xpose.msra.mxu0 0.0
    %556 = vmatprep.subr.mxu0 0.0
    %557 = vmatpush2.xpose.msra.mxu0 0.0
    %558 = vmatprep.subr.mxu0 0.0
    %559 = vmatpush2.xpose.msra.mxu0 0.0
    %560 = vmatprep.subr.mxu0 0.0
    %561 = vmatpush2.xpose.msra.mxu0 0.0
    %562 = vmatprep.subr.mxu0 0.0
    %563 = vmatpush2.xpose.msra.mxu0 0.0
    %564 = vmatprep.mubr.f32.mxu0 0.0
    %565 = vmatmul.mubr.f32.gmra.mxu0 %v492
    %v566 = vpop.f32.mrf.mxu0
    %v567 = vadd.f32 %v201, %v566
    %v568 = vpop.f32.mrf.mxu0
    %569 = vmatprep.mubr.f32.mxu0 0.0
    %570 = vmatmul.mubr.f32.gmra.mxu0 %v494
    %v571 = vpop.f32.mrf.mxu0
    %v572 = vadd.f32 %v202, %v571
    %v573 = vpop.f32.mrf.mxu0
    %574 = vdwg.mxu0
    %575 = vrot.lane.b32.xlu0 %v290, 104
    %v576 = vpop.permute.xlu0 %575
    %577 = vrot.lane.b32.xlu0 %v295, 104
    %v578 = vpop.permute.xlu0 %577
    %579 = vrot.lane.b32.xlu0 %v290, 72
    %v580 = vpop.permute.xlu0 %579
    %581 = vrot.lane.b32.xlu0 %v295, 72
    %v582 = vpop.permute.xlu0 %581
    %v583 = vsel %vm309, %v576, 0
    %v585 = vsel %vm309, %v578, 0
    %v587 = vsel %vm309, %v580, 0
    %v589 = vsel %vm309, %v582, 0
    %591 = vmatprep.subr.mxu0 0.0
    %592 = vmatpush1.xpose.msra.mxu0 0.0
    %593 = vmatprep.subr.mxu0 0.0
    %594 = vmatpush1.xpose.msra.mxu0 0.0
    %595 = vmatprep.subr.mxu0 0.0
    %596 = vmatpush1.xpose.msra.mxu0 0.0
    %597 = vmatprep.subr.mxu0 0.0
    %598 = vmatpush1.xpose.msra.mxu0 0.0
    %599 = vmatprep.subr.mxu0 0.0
    %600 = vmatpush1.xpose.msra.mxu0 0.0
    %601 = vmatprep.subr.mxu0 0.0
    %602 = vmatpush1.xpose.msra.mxu0 0.0
    %603 = vmatprep.subr.mxu0 0.0
    %604 = vmatpush1.xpose.msra.mxu0 0.0
    %605 = vmatprep.subr.mxu0 0.0
    %606 = vmatpush1.xpose.msra.mxu0 0.0
    %607 = vmatprep.subr.mxu0 0.0
    %608 = vmatpush1.xpose.msra.mxu0 0.0
    %609 = vmatprep.subr.mxu0 0.0
    %610 = vmatpush1.xpose.msra.mxu0 0.0
    %611 = vmatprep.subr.mxu0 0.0
    %612 = vmatpush1.xpose.msra.mxu0 0.0
    %613 = vmatprep.subr.mxu0 0.0
    %614 = vmatpush1.xpose.msra.mxu0 0.0
    %615 = vmatprep.subr.mxu0 0.0
    %616 = vmatpush1.xpose.msra.mxu0 0.0
    %617 = vmatprep.subr.mxu0 0.0
    %618 = vmatpush1.xpose.msra.mxu0 0.0
    %619 = vmatprep.subr.mxu0 0.0
    %620 = vmatpush1.xpose.msra.mxu0 %v589
    %621 = vmatprep.subr.mxu0 0.0
    %622 = vmatpush1.xpose.msra.mxu0 %v587
    %623 = vmatprep.subr.mxu0 0.0
    %624 = vmatpush2.xpose.msra.mxu0 0.0
    %625 = vmatprep.subr.mxu0 0.0
    %626 = vmatpush2.xpose.msra.mxu0 0.0
    %627 = vmatprep.subr.mxu0 0.0
    %628 = vmatpush2.xpose.msra.mxu0 0.0
    %629 = vmatprep.subr.mxu0 0.0
    %630 = vmatpush2.xpose.msra.mxu0 0.0
    %631 = vmatprep.subr.mxu0 0.0
    %632 = vmatpush2.xpose.msra.mxu0 0.0
    %633 = vmatprep.subr.mxu0 0.0
    %634 = vmatpush2.xpose.msra.mxu0 0.0
    %635 = vmatprep.subr.mxu0 0.0
    %636 = vmatpush2.xpose.msra.mxu0 0.0
    %637 = vmatprep.subr.mxu0 0.0
    %638 = vmatpush2.xpose.msra.mxu0 0.0
    %639 = vmatprep.subr.mxu0 0.0
    %640 = vmatpush2.xpose.msra.mxu0 0.0
    %641 = vmatprep.subr.mxu0 0.0
    %642 = vmatpush2.xpose.msra.mxu0 0.0
    %643 = vmatprep.subr.mxu0 0.0
    %644 = vmatpush2.xpose.msra.mxu0 0.0
    %645 = vmatprep.subr.mxu0 0.0
    %646 = vmatpush2.xpose.msra.mxu0 0.0
    %647 = vmatprep.subr.mxu0 0.0
    %648 = vmatpush2.xpose.msra.mxu0 0.0
    %649 = vmatprep.subr.mxu0 0.0
    %650 = vmatpush2.xpose.msra.mxu0 0.0
    %651 = vmatprep.subr.mxu0 0.0
    %652 = vmatpush2.xpose.msra.mxu0 0.0
    %653 = vmatprep.subr.mxu0 0.0
    %654 = vmatpush2.xpose.msra.mxu0 0.0
    %655 = vmatprep.mubr.f32.mxu0 0.0
    %656 = vmatmul.mubr.f32.gmra.mxu0 %v583
    %v657 = vpop.f32.mrf.mxu0
    %v658 = vadd.f32 %v201, %v657
    %v659 = vpop.f32.mrf.mxu0
    %660 = vmatprep.mubr.f32.mxu0 0.0
    %661 = vmatmul.mubr.f32.gmra.mxu0 %v585
    %v662 = vpop.f32.mrf.mxu0
    %v663 = vadd.f32 %v202, %v662
    %v664 = vpop.f32.mrf.mxu0
    %665 = vdwg.mxu0
    %vm666 = vcmask 130048
    %v667 = vsel %vm666, %v385, -inf
    %668 = vmax.xlane.f32.xlu0 %v667
    %v669 = vpop.xlane.xlu0 %668
    %v670 = vsel %vm666, %v390, -inf
    %671 = vmax.xlane.f32.xlu0 %v670
    %v672 = vpop.xlane.xlu0 %671
    %v673 = vsel %vm666, %v476, -inf
    %674 = vmax.xlane.f32.xlu0 %v673
    %v675 = vpop.xlane.xlu0 %674
    %v676 = vsel %vm666, %v481, -inf
    %677 = vmax.xlane.f32.xlu0 %v676
    %v678 = vpop.xlane.xlu0 %677
    %v679 = vsel %vm666, %v567, -inf
    %680 = vmax.xlane.f32.xlu0 %v679
    %v681 = vpop.xlane.xlu0 %680
    %v682 = vsel %vm666, %v572, -inf
    %683 = vmax.xlane.f32.xlu0 %v682
    %v684 = vpop.xlane.xlu0 %683
    %v685 = vsel %vm666, %v658, -inf
    %686 = vmax.xlane.f32.xlu0 %v685
    %v687 = vpop.xlane.xlu0 %686
    %v688 = vsel %vm666, %v663, -inf
    %689 = vmax.xlane.f32.xlu0 %v688
    %v690 = vpop.xlane.xlu0 %689
    %v691 = vsub.f32 %v385, %v669
    %v692 = vsub.f32 %v390, %v672
    %v693 = vsub.f32 %v476, %v675
    %v694 = vsub.f32 %v481, %v678
    %v695 = vsub.f32 %v567, %v681
    %v696 = vsub.f32 %v572, %v684
    %v697 = vsub.f32 %v658, %v687
    %v698 = vsub.f32 %v663, %v690
    %v699 = vmul.f32 %v691, 1.442695
    %v700 = vpow.pop %v699
    %v701 = vmul.f32 %v692, 1.442695
    %v702 = vpow.pop %v701
    %v703 = vmul.f32 %v693, 1.442695
    %v704 = vpow.pop %v703
    %v705 = vmul.f32 %v694, 1.442695
    %v706 = vpow.pop %v705
    %v707 = vmul.f32 %v695, 1.442695
    %v708 = vpow.pop %v707
    %v709 = vmul.f32 %v696, 1.442695
    %v710 = vpow.pop %v709
    %v711 = vmul.f32 %v697, 1.442695
    %v712 = vpow.pop %v711
    %v713 = vmul.f32 %v698, 1.442695
    %v714 = vpow.pop %v713
    %v715 = vsel %vm666, %v700, 0.0
    %716 = vadd.xlane.f32.xlu0 %v715
    %v717 = vpop.xlane.xlu0 %716
    %v718 = vsel %vm666, %v702, 0.0
    %719 = vadd.xlane.f32.xlu0 %v718
    %v720 = vpop.xlane.xlu0 %719
    %v721 = vsel %vm666, %v704, 0.0
    %722 = vadd.xlane.f32.xlu0 %v721
    %v723 = vpop.xlane.xlu0 %722
    %v724 = vsel %vm666, %v706, 0.0
    %725 = vadd.xlane.f32.xlu0 %v724
    %v726 = vpop.xlane.xlu0 %725
    %v727 = vsel %vm666, %v708, 0.0
    %728 = vadd.xlane.f32.xlu0 %v727
    %v729 = vpop.xlane.xlu0 %728
    %v730 = vsel %vm666, %v710, 0.0
    %731 = vadd.xlane.f32.xlu0 %v730
    %v732 = vpop.xlane.xlu0 %731
    %v733 = vsel %vm666, %v712, 0.0
    %734 = vadd.xlane.f32.xlu0 %v733
    %v735 = vpop.xlane.xlu0 %734
    %v736 = vsel %vm666, %v714, 0.0
    %737 = vadd.xlane.f32.xlu0 %v736
    %v738 = vpop.xlane.xlu0 %737
    %v739 = vrcp.pop %v717
    %v740 = vmul.f32 1.0, %v739
    %v741 = vrcp.pop %v720
    %v742 = vmul.f32 1.0, %v741
    %v743 = vrcp.pop %v723
    %v744 = vmul.f32 1.0, %v743
    %v745 = vrcp.pop %v726
    %v746 = vmul.f32 1.0, %v745
    %v747 = vrcp.pop %v729
    %v748 = vmul.f32 1.0, %v747
    %v749 = vrcp.pop %v732
    %v750 = vmul.f32 1.0, %v749
    %v751 = vrcp.pop %v735
    %v752 = vmul.f32 1.0, %v751
    %v753 = vrcp.pop %v738
    %v754 = vmul.f32 1.0, %v753
    %v755 = vmul.f32 %v700, %v740
    %v756 = vmul.f32 %v702, %v742
    %v757 = vmul.f32 %v704, %v744
    %v758 = vmul.f32 %v706, %v746
    %v759 = vmul.f32 %v708, %v748
    %v760 = vmul.f32 %v710, %v750
    %v761 = vmul.f32 %v712, %v752
    %v762 = vmul.f32 %v714, %v754
    %763 = vrot.lane.b32.xlu0 %v290, 64
    %v764 = vpop.permute.xlu0 %763
    %765 = vrot.lane.b32.xlu0 %v295, 64
    %v766 = vpop.permute.xlu0 %765
    %v770 = vsel %vm666, %v755, 0
    %v773 = vsel %vm666, %v756, 0
    %775 = vmatprep.subr.mxu0 0.0
    %776 = vmatpush1.msra.mxu0 0.0
    %777 = vmatprep.subr.mxu0 0.0
    %778 = vmatpush1.msra.mxu0 0.0
    %779 = vmatprep.subr.mxu0 0.0
    %780 = vmatpush1.msra.mxu0 0.0
    %781 = vmatprep.subr.mxu0 0.0
    %782 = vmatpush1.msra.mxu0 0.0
    %783 = vmatprep.subr.mxu0 0.0
    %784 = vmatpush1.msra.mxu0 0.0
    %785 = vmatprep.subr.mxu0 0.0
    %786 = vmatpush1.msra.mxu0 0.0
    %787 = vmatprep.subr.mxu0 0.0
    %788 = vmatpush1.msra.mxu0 0.0
    %789 = vmatprep.subr.mxu0 0.0
    %790 = vmatpush1.msra.mxu0 0.0
    %791 = vmatprep.subr.mxu0 0.0
    %792 = vmatpush1.msra.mxu0 0.0
    %793 = vmatprep.subr.mxu0 0.0
    %794 = vmatpush1.msra.mxu0 0.0
    %795 = vmatprep.subr.mxu0 0.0
    %796 = vmatpush1.msra.mxu0 0.0
    %797 = vmatprep.subr.mxu0 0.0
    %798 = vmatpush1.msra.mxu0 0.0
    %799 = vmatprep.subr.mxu0 0.0
    %800 = vmatpush1.msra.mxu0 0.0
    %801 = vmatprep.subr.mxu0 0.0
    %802 = vmatpush1.msra.mxu0 0.0
    %803 = vmatprep.subr.mxu0 0.0
    %804 = vmatpush1.msra.mxu0 %v766
    %805 = vmatprep.subr.mxu0 0.0
    %806 = vmatpush1.msra.mxu0 %v764
    %807 = vmatprep.subr.mxu0 0.0
    %808 = vmatpush2.msra.mxu0 0.0
    %809 = vmatprep.subr.mxu0 0.0
    %810 = vmatpush2.msra.mxu0 0.0
    %811 = vmatprep.subr.mxu0 0.0
    %812 = vmatpush2.msra.mxu0 0.0
    %813 = vmatprep.subr.mxu0 0.0
    %814 = vmatpush2.msra.mxu0 0.0
    %815 = vmatprep.subr.mxu0 0.0
    %816 = vmatpush2.msra.mxu0 0.0
    %817 = vmatprep.subr.mxu0 0.0
    %818 = vmatpush2.msra.mxu0 0.0
    %819 = vmatprep.subr.mxu0 0.0
    %820 = vmatpush2.msra.mxu0 0.0
    %821 = vmatprep.subr.mxu0 0.0
    %822 = vmatpush2.msra.mxu0 0.0
    %823 = vmatprep.subr.mxu0 0.0
    %824 = vmatpush2.msra.mxu0 0.0
    %825 = vmatprep.subr.mxu0 0.0
    %826 = vmatpush2.msra.mxu0 0.0
    %827 = vmatprep.subr.mxu0 0.0
    %828 = vmatpush2.msra.mxu0 0.0
    %829 = vmatprep.subr.mxu0 0.0
    %830 = vmatpush2.msra.mxu0 0.0
    %831 = vmatprep.subr.mxu0 0.0
    %832 = vmatpush2.msra.mxu0 0.0
    %833 = vmatprep.subr.mxu0 0.0
    %834 = vmatpush2.msra.mxu0 0.0
    %835 = vmatprep.subr.mxu0 0.0
    %836 = vmatpush2.msra.mxu0 0.0
    %837 = vmatprep.subr.mxu0 0.0
    %838 = vmatpush2.msra.mxu0 0.0
    %839 = vmatprep.mubr.f32.mxu0 0.0
    %840 = vmatmul.mubr.f32.gmra.mxu0 %v770
    %v841 = vpop.f32.mrf.mxu0
    %v842 = vadd.f32 0.0, %v841
    %v843 = vpop.f32.mrf.mxu0
    %844 = vmatprep.mubr.f32.mxu0 0.0
    %845 = vmatmul.mubr.f32.gmra.mxu0 %v773
    %v846 = vpop.f32.mrf.mxu0
    %v847 = vadd.f32 0.0, %v846
    %v848 = vpop.f32.mrf.mxu0
    %849 = vdwg.mxu0
    %850 = vrot.lane.b32.xlu0 %v290, 56
    %v851 = vpop.permute.xlu0 %850
    %852 = vrot.lane.b32.xlu0 %v295, 56
    %v853 = vpop.permute.xlu0 %852
    %v857 = vsel %vm666, %v757, 0
    %v860 = vsel %vm666, %v758, 0
    %862 = vmatprep.subr.mxu0 0.0
    %863 = vmatpush1.msra.mxu0 0.0
    %864 = vmatprep.subr.mxu0 0.0
    %865 = vmatpush1.msra.mxu0 0.0
    %866 = vmatprep.subr.mxu0 0.0
    %867 = vmatpush1.msra.mxu0 0.0
    %868 = vmatprep.subr.mxu0 0.0
    %869 = vmatpush1.msra.mxu0 0.0
    %870 = vmatprep.subr.mxu0 0.0
    %871 = vmatpush1.msra.mxu0 0.0
    %872 = vmatprep.subr.mxu0 0.0
    %873 = vmatpush1.msra.mxu0 0.0
    %874 = vmatprep.subr.mxu0 0.0
    %875 = vmatpush1.msra.mxu0 0.0
    %876 = vmatprep.subr.mxu0 0.0
    %877 = vmatpush1.msra.mxu0 0.0
    %878 = vmatprep.subr.mxu0 0.0
    %879 = vmatpush1.msra.mxu0 0.0
    %880 = vmatprep.subr.mxu0 0.0
    %881 = vmatpush1.msra.mxu0 0.0
    %882 = vmatprep.subr.mxu0 0.0
    %883 = vmatpush1.msra.mxu0 0.0
    %884 = vmatprep.subr.mxu0 0.0
    %885 = vmatpush1.msra.mxu0 0.0
    %886 = vmatprep.subr.mxu0 0.0
    %887 = vmatpush1.msra.mxu0 0.0
    %888 = vmatprep.subr.mxu0 0.0
    %889 = vmatpush1.msra.mxu0 0.0
    %890 = vmatprep.subr.mxu0 0.0
    %891 = vmatpush1.msra.mxu0 %v853
    %892 = vmatprep.subr.mxu0 0.0
    %893 = vmatpush1.msra.mxu0 %v851
    %894 = vmatprep.subr.mxu0 0.0
    %895 = vmatpush2.msra.mxu0 0.0
    %896 = vmatprep.subr.mxu0 0.0
    %897 = vmatpush2.msra.mxu0 0.0
    %898 = vmatprep.subr.mxu0 0.0
    %899 = vmatpush2.msra.mxu0 0.0
    %900 = vmatprep.subr.mxu0 0.0
    %901 = vmatpush2.msra.mxu0 0.0
    %902 = vmatprep.subr.mxu0 0.0
    %903 = vmatpush2.msra.mxu0 0.0
    %904 = vmatprep.subr.mxu0 0.0
    %905 = vmatpush2.msra.mxu0 0.0
    %906 = vmatprep.subr.mxu0 0.0
    %907 = vmatpush2.msra.mxu0 0.0
    %908 = vmatprep.subr.mxu0 0.0
    %909 = vmatpush2.msra.mxu0 0.0
    %910 = vmatprep.subr.mxu0 0.0
    %911 = vmatpush2.msra.mxu0 0.0
    %912 = vmatprep.subr.mxu0 0.0
    %913 = vmatpush2.msra.mxu0 0.0
    %914 = vmatprep.subr.mxu0 0.0
    %915 = vmatpush2.msra.mxu0 0.0
    %916 = vmatprep.subr.mxu0 0.0
    %917 = vmatpush2.msra.mxu0 0.0
    %918 = vmatprep.subr.mxu0 0.0
    %919 = vmatpush2.msra.mxu0 0.0
    %920 = vmatprep.subr.mxu0 0.0
    %921 = vmatpush2.msra.mxu0 0.0
    %922 = vmatprep.subr.mxu0 0.0
    %923 = vmatpush2.msra.mxu0 0.0
    %924 = vmatprep.subr.mxu0 0.0
    %925 = vmatpush2.msra.mxu0 0.0
    %926 = vmatprep.mubr.f32.mxu0 0.0
    %927 = vmatmul.mubr.f32.gmra.mxu0 %v857
    %v928 = vpop.f32.mrf.mxu0
    %v929 = vadd.f32 0.0, %v928
    %v930 = vpop.f32.mrf.mxu0
    %931 = vmatprep.mubr.f32.mxu0 0.0
    %932 = vmatmul.mubr.f32.gmra.mxu0 %v860
    %v933 = vpop.f32.mrf.mxu0
    %v934 = vadd.f32 0.0, %v933
    %v935 = vpop.f32.mrf.mxu0
    %936 = vdwg.mxu0
    %v938 = vsel %vm309, %v929, 0
    %v941 = vsel %vm309, %v934, 0
    %943 = vmatprep.subr.mxu0 0.0
    %944 = vmatpush1.msra.mxu0 0.0
    %945 = vmatprep.subr.mxu0 0.0
    %946 = vmatpush1.msra.mxu0 0.0
    %947 = vmatprep.subr.mxu0 0.0
    %948 = vmatpush1.msra.mxu0 0.0
    %949 = vmatprep.subr.mxu0 0.0
    %950 = vmatpush1.msra.mxu0 0.0
    %951 = vmatprep.subr.mxu0 0.0
    %952 = vmatpush1.msra.mxu0 0.0
    %953 = vmatprep.subr.mxu0 0.0
    %954 = vmatpush1.msra.mxu0 0.0
    %955 = vmatprep.subr.mxu0 0.0
    %956 = vmatpush1.msra.mxu0 0.0
    %957 = vmatprep.subr.mxu0 0.0
    %958 = vmatpush1.msra.mxu0 0.0
    %959 = vmatprep.subr.mxu0 0.0
    %960 = vmatpush1.msra.mxu0 0.0
    %961 = vmatprep.subr.mxu0 0.0
    %962 = vmatpush1.msra.mxu0 0.0
    %963 = vmatprep.subr.mxu0 0.0
    %964 = vmatpush1.msra.mxu0 0.0
    %965 = vmatprep.subr.mxu0 0.0
    %966 = vmatpush1.msra.mxu0 0.0
    %967 = vmatprep.subr.mxu0 0.0
    %968 = vmatpush1.msra.mxu0 0.0
    %969 = vmatprep.subr.mxu0 0.0
    %970 = vmatpush1.msra.mxu0 0.0
    %971 = vmatprep.subr.mxu0 0.0
    %972 = vmatpush1.msra.mxu0 0.0
    %973 = vmatprep.subr.mxu0 0.0
    %974 = vmatpush1.msra.mxu0 %v299
    %975 = vmatprep.subr.mxu0 0.0
    %976 = vmatpush2.msra.mxu0 0.0
    %977 = vmatprep.subr.mxu0 0.0
    %978 = vmatpush2.msra.mxu0 0.0
    %979 = vmatprep.subr.mxu0 0.0
    %980 = vmatpush2.msra.mxu0 0.0
    %981 = vmatprep.subr.mxu0 0.0
    %982 = vmatpush2.msra.mxu0 0.0
    %983 = vmatprep.subr.mxu0 0.0
    %984 = vmatpush2.msra.mxu0 0.0
    %985 = vmatprep.subr.mxu0 0.0
    %986 = vmatpush2.msra.mxu0 0.0
    %987 = vmatprep.subr.mxu0 0.0
    %988 = vmatpush2.msra.mxu0 0.0
    %989 = vmatprep.subr.mxu0 0.0
    %990 = vmatpush2.msra.mxu0 0.0
    %991 = vmatprep.subr.mxu0 0.0
    %992 = vmatpush2.msra.mxu0 0.0
    %993 = vmatprep.subr.mxu0 0.0
    %994 = vmatpush2.msra.mxu0 0.0
    %995 = vmatprep.subr.mxu0 0.0
    %996 = vmatpush2.msra.mxu0 0.0
    %997 = vmatprep.subr.mxu0 0.0
    %998 = vmatpush2.msra.mxu0 0.0
    %999 = vmatprep.subr.mxu0 0.0
    %1000 = vmatpush2.msra.mxu0 0.0
    %1001 = vmatprep.subr.mxu0 0.0
    %1002 = vmatpush2.msra.mxu0 0.0
    %1003 = vmatprep.subr.mxu0 0.0
    %1004 = vmatpush2.msra.mxu0 0.0
    %1005 = vmatprep.subr.mxu0 0.0
    %1006 = vmatpush2.msra.mxu0 0.0
    %1007 = vmatprep.mubr.f32.mxu0 0.0
    %1008 = vmatmul.mubr.f32.gmra.mxu0 %v938
    %v1009 = vpop.f32.mrf.mxu0
    %v1010 = vadd.f32 0.0, %v1009
    %v1011 = vpop.f32.mrf.mxu0
    %1012 = vmatprep.mubr.f32.mxu0 0.0
    %1013 = vmatmul.mubr.f32.gmra.mxu0 %v941
    %v1014 = vpop.f32.mrf.mxu0
    %v1015 = vadd.f32 0.0, %v1014
    %v1016 = vpop.f32.mrf.mxu0
    %1017 = vdwg.mxu0
    %v1019 = vsel %vm309, %v842, 0
    %v1022 = vsel %vm309, %v847, 0
    %1024 = vmatprep.subr.mxu0 0.0
    %1025 = vmatpush1.msra.mxu0 0.0
    %1026 = vmatprep.subr.mxu0 0.0
    %1027 = vmatpush1.msra.mxu0 0.0
    %1028 = vmatprep.subr.mxu0 0.0
    %1029 = vmatpush1.msra.mxu0 0.0
    %1030 = vmatprep.subr.mxu0 0.0
    %1031 = vmatpush1.msra.mxu0 0.0
    %1032 = vmatprep.subr.mxu0 0.0
    %1033 = vmatpush1.msra.mxu0 0.0
    %1034 = vmatprep.subr.mxu0 0.0
    %1035 = vmatpush1.msra.mxu0 0.0
    %1036 = vmatprep.subr.mxu0 0.0
    %1037 = vmatpush1.msra.mxu0 0.0
    %1038 = vmatprep.subr.mxu0 0.0
    %1039 = vmatpush1.msra.mxu0 0.0
    %1040 = vmatprep.subr.mxu0 0.0
    %1041 = vmatpush1.msra.mxu0 0.0
    %1042 = vmatprep.subr.mxu0 0.0
    %1043 = vmatpush1.msra.mxu0 0.0
    %1044 = vmatprep.subr.mxu0 0.0
    %1045 = vmatpush1.msra.mxu0 0.0
    %1046 = vmatprep.subr.mxu0 0.0
    %1047 = vmatpush1.msra.mxu0 0.0
    %1048 = vmatprep.subr.mxu0 0.0
    %1049 = vmatpush1.msra.mxu0 0.0
    %1050 = vmatprep.subr.mxu0 0.0
    %1051 = vmatpush1.msra.mxu0 0.0
    %1052 = vmatprep.subr.mxu0 0.0
    %1053 = vmatpush1.msra.mxu0 0.0
    %1054 = vmatprep.subr.mxu0 0.0
    %1055 = vmatpush1.msra.mxu0 %v298
    %1056 = vmatprep.subr.mxu0 0.0
    %1057 = vmatpush2.msra.mxu0 0.0
    %1058 = vmatprep.subr.mxu0 0.0
    %1059 = vmatpush2.msra.mxu0 0.0
    %1060 = vmatprep.subr.mxu0 0.0
    %1061 = vmatpush2.msra.mxu0 0.0
    %1062 = vmatprep.subr.mxu0 0.0
    %1063 = vmatpush2.msra.mxu0 0.0
    %1064 = vmatprep.subr.mxu0 0.0
    %1065 = vmatpush2.msra.mxu0 0.0
    %1066 = vmatprep.subr.mxu0 0.0
    %1067 = vmatpush2.msra.mxu0 0.0
    %1068 = vmatprep.subr.mxu0 0.0
    %1069 = vmatpush2.msra.mxu0 0.0
    %1070 = vmatprep.subr.mxu0 0.0
    %1071 = vmatpush2.msra.mxu0 0.0
    %1072 = vmatprep.subr.mxu0 0.0
    %1073 = vmatpush2.msra.mxu0 0.0
    %1074 = vmatprep.subr.mxu0 0.0
    %1075 = vmatpush2.msra.mxu0 0.0
    %1076 = vmatprep.subr.mxu0 0.0
    %1077 = vmatpush2.msra.mxu0 0.0
    %1078 = vmatprep.subr.mxu0 0.0
    %1079 = vmatpush2.msra.mxu0 0.0
    %1080 = vmatprep.subr.mxu0 0.0
    %1081 = vmatpush2.msra.mxu0 0.0
    %1082 = vmatprep.subr.mxu0 0.0
    %1083 = vmatpush2.msra.mxu0 0.0
    %1084 = vmatprep.subr.mxu0 0.0
    %1085 = vmatpush2.msra.mxu0 0.0
    %1086 = vmatprep.subr.mxu0 0.0
    %1087 = vmatpush2.msra.mxu0 0.0
    %1088 = vmatprep.mubr.f32.mxu0 0.0
    %1089 = vmatmul.mubr.f32.gmra.mxu0 %v1019
    %v1090 = vpop.f32.mrf.mxu0
    %v1091 = vadd.f32 %v1010, %v1090
    %v1092 = vpop.f32.mrf.mxu0
    %1093 = vmatprep.mubr.f32.mxu0 0.0
    %1094 = vmatmul.mubr.f32.gmra.mxu0 %v1022
    %v1095 = vpop.f32.mrf.mxu0
    %v1096 = vadd.f32 %v1015, %v1095
    %v1097 = vpop.f32.mrf.mxu0
    %1098 = vdwg.mxu0
    %1099 = vrot.lane.b32.xlu0 %v290, 48
    %v1100 = vpop.permute.xlu0 %1099
    %1101 = vrot.lane.b32.xlu0 %v295, 48
    %v1102 = vpop.permute.xlu0 %1101
    %v1106 = vsel %vm666, %v759, 0
    %v1109 = vsel %vm666, %v760, 0
    %1111 = vmatprep.subr.mxu0 0.0
    %1112 = vmatpush1.msra.mxu0 0.0
    %1113 = vmatprep.subr.mxu0 0.0
    %1114 = vmatpush1.msra.mxu0 0.0
    %1115 = vmatprep.subr.mxu0 0.0
    %1116 = vmatpush1.msra.mxu0 0.0
    %1117 = vmatprep.subr.mxu0 0.0
    %1118 = vmatpush1.msra.mxu0 0.0
    %1119 = vmatprep.subr.mxu0 0.0
    %1120 = vmatpush1.msra.mxu0 0.0
    %1121 = vmatprep.subr.mxu0 0.0
    %1122 = vmatpush1.msra.mxu0 0.0
    %1123 = vmatprep.subr.mxu0 0.0
    %1124 = vmatpush1.msra.mxu0 0.0
    %1125 = vmatprep.subr.mxu0 0.0
    %1126 = vmatpush1.msra.mxu0 0.0
    %1127 = vmatprep.subr.mxu0 0.0
    %1128 = vmatpush1.msra.mxu0 0.0
    %1129 = vmatprep.subr.mxu0 0.0
    %1130 = vmatpush1.msra.mxu0 0.0
    %1131 = vmatprep.subr.mxu0 0.0
    %1132 = vmatpush1.msra.mxu0 0.0
    %1133 = vmatprep.subr.mxu0 0.0
    %1134 = vmatpush1.msra.mxu0 0.0
    %1135 = vmatprep.subr.mxu0 0.0
    %1136 = vmatpush1.msra.mxu0 0.0
    %1137 = vmatprep.subr.mxu0 0.0
    %1138 = vmatpush1.msra.mxu0 0.0
    %1139 = vmatprep.subr.mxu0 0.0
    %1140 = vmatpush1.msra.mxu0 %v1102
    %1141 = vmatprep.subr.mxu0 0.0
    %1142 = vmatpush1.msra.mxu0 %v1100
    %1143 = vmatprep.subr.mxu0 0.0
    %1144 = vmatpush2.msra.mxu0 0.0
    %1145 = vmatprep.subr.mxu0 0.0
    %1146 = vmatpush2.msra.mxu0 0.0
    %1147 = vmatprep.subr.mxu0 0.0
    %1148 = vmatpush2.msra.mxu0 0.0
    %1149 = vmatprep.subr.mxu0 0.0
    %1150 = vmatpush2.msra.mxu0 0.0
    %1151 = vmatprep.subr.mxu0 0.0
    %1152 = vmatpush2.msra.mxu0 0.0
    %1153 = vmatprep.subr.mxu0 0.0
    %1154 = vmatpush2.msra.mxu0 0.0
    %1155 = vmatprep.subr.mxu0 0.0
    %1156 = vmatpush2.msra.mxu0 0.0
    %1157 = vmatprep.subr.mxu0 0.0
    %1158 = vmatpush2.msra.mxu0 0.0
    %1159 = vmatprep.subr.mxu0 0.0
    %1160 = vmatpush2.msra.mxu0 0.0
    %1161 = vmatprep.subr.mxu0 0.0
    %1162 = vmatpush2.msra.mxu0 0.0
    %1163 = vmatprep.subr.mxu0 0.0
    %1164 = vmatpush2.msra.mxu0 0.0
    %1165 = vmatprep.subr.mxu0 0.0
    %1166 = vmatpush2.msra.mxu0 0.0
    %1167 = vmatprep.subr.mxu0 0.0
    %1168 = vmatpush2.msra.mxu0 0.0
    %1169 = vmatprep.subr.mxu0 0.0
    %1170 = vmatpush2.msra.mxu0 0.0
    %1171 = vmatprep.subr.mxu0 0.0
    %1172 = vmatpush2.msra.mxu0 0.0
    %1173 = vmatprep.subr.mxu0 0.0
    %1174 = vmatpush2.msra.mxu0 0.0
    %1175 = vmatprep.mubr.f32.mxu0 0.0
    %1176 = vmatmul.mubr.f32.gmra.mxu0 %v1106
    %v1177 = vpop.f32.mrf.mxu0
    %v1178 = vadd.f32 0.0, %v1177
    %v1179 = vpop.f32.mrf.mxu0
    %1180 = vmatprep.mubr.f32.mxu0 0.0
    %1181 = vmatmul.mubr.f32.gmra.mxu0 %v1109
    %v1182 = vpop.f32.mrf.mxu0
    %v1183 = vadd.f32 0.0, %v1182
    %v1184 = vpop.f32.mrf.mxu0
    %1185 = vdwg.mxu0
    %v1187 = vsel %vm309, %v1178, 0
    %v1190 = vsel %vm309, %v1183, 0
    %1192 = vmatprep.subr.mxu0 0.0
    %1193 = vmatpush1.msra.mxu0 0.0
    %1194 = vmatprep.subr.mxu0 0.0
    %1195 = vmatpush1.msra.mxu0 0.0
    %1196 = vmatprep.subr.mxu0 0.0
    %1197 = vmatpush1.msra.mxu0 0.0
    %1198 = vmatprep.subr.mxu0 0.0
    %1199 = vmatpush1.msra.mxu0 0.0
    %1200 = vmatprep.subr.mxu0 0.0
    %1201 = vmatpush1.msra.mxu0 0.0
    %1202 = vmatprep.subr.mxu0 0.0
    %1203 = vmatpush1.msra.mxu0 0.0
    %1204 = vmatprep.subr.mxu0 0.0
    %1205 = vmatpush1.msra.mxu0 0.0
    %1206 = vmatprep.subr.mxu0 0.0
    %1207 = vmatpush1.msra.mxu0 0.0
    %1208 = vmatprep.subr.mxu0 0.0
    %1209 = vmatpush1.msra.mxu0 0.0
    %1210 = vmatprep.subr.mxu0 0.0
    %1211 = vmatpush1.msra.mxu0 0.0
    %1212 = vmatprep.subr.mxu0 0.0
    %1213 = vmatpush1.msra.mxu0 0.0
    %1214 = vmatprep.subr.mxu0 0.0
    %1215 = vmatpush1.msra.mxu0 0.0
    %1216 = vmatprep.subr.mxu0 0.0
    %1217 = vmatpush1.msra.mxu0 0.0
    %1218 = vmatprep.subr.mxu0 0.0
    %1219 = vmatpush1.msra.mxu0 0.0
    %1220 = vmatprep.subr.mxu0 0.0
    %1221 = vmatpush1.msra.mxu0 0.0
    %1222 = vmatprep.subr.mxu0 0.0
    %1223 = vmatpush1.msra.mxu0 %v300
    %1224 = vmatprep.subr.mxu0 0.0
    %1225 = vmatpush2.msra.mxu0 0.0
    %1226 = vmatprep.subr.mxu0 0.0
    %1227 = vmatpush2.msra.mxu0 0.0
    %1228 = vmatprep.subr.mxu0 0.0
    %1229 = vmatpush2.msra.mxu0 0.0
    %1230 = vmatprep.subr.mxu0 0.0
    %1231 = vmatpush2.msra.mxu0 0.0
    %1232 = vmatprep.subr.mxu0 0.0
    %1233 = vmatpush2.msra.mxu0 0.0
    %1234 = vmatprep.subr.mxu0 0.0
    %1235 = vmatpush2.msra.mxu0 0.0
    %1236 = vmatprep.subr.mxu0 0.0
    %1237 = vmatpush2.msra.mxu0 0.0
    %1238 = vmatprep.subr.mxu0 0.0
    %1239 = vmatpush2.msra.mxu0 0.0
    %1240 = vmatprep.subr.mxu0 0.0
    %1241 = vmatpush2.msra.mxu0 0.0
    %1242 = vmatprep.subr.mxu0 0.0
    %1243 = vmatpush2.msra.mxu0 0.0
    %1244 = vmatprep.subr.mxu0 0.0
    %1245 = vmatpush2.msra.mxu0 0.0
    %1246 = vmatprep.subr.mxu0 0.0
    %1247 = vmatpush2.msra.mxu0 0.0
    %1248 = vmatprep.subr.mxu0 0.0
    %1249 = vmatpush2.msra.mxu0 0.0
    %1250 = vmatprep.subr.mxu0 0.0
    %1251 = vmatpush2.msra.mxu0 0.0
    %1252 = vmatprep.subr.mxu0 0.0
    %1253 = vmatpush2.msra.mxu0 0.0
    %1254 = vmatprep.subr.mxu0 0.0
    %1255 = vmatpush2.msra.mxu0 0.0
    %1256 = vmatprep.mubr.f32.mxu0 0.0
    %1257 = vmatmul.mubr.f32.gmra.mxu0 %v1187
    %v1258 = vpop.f32.mrf.mxu0
    %v1259 = vadd.f32 0.0, %v1258
    %v1260 = vpop.f32.mrf.mxu0
    %1261 = vmatprep.mubr.f32.mxu0 0.0
    %1262 = vmatmul.mubr.f32.gmra.mxu0 %v1190
    %v1263 = vpop.f32.mrf.mxu0
    %v1264 = vadd.f32 0.0, %v1263
    %v1265 = vpop.f32.mrf.mxu0
    %1266 = vdwg.mxu0
    %v1267 = vadd.f32 %v1091, %v1259
    %v1268 = vadd.f32 %v1096, %v1264
    %1269 = vrot.lane.b32.xlu0 %v290, 40
    %v1270 = vpop.permute.xlu0 %1269
    %1271 = vrot.lane.b32.xlu0 %v295, 40
    %v1272 = vpop.permute.xlu0 %1271
    %v1276 = vsel %vm666, %v761, 0
    %v1279 = vsel %vm666, %v762, 0
    %1281 = vmatprep.subr.mxu0 0.0
    %1282 = vmatpush1.msra.mxu0 0.0
    %1283 = vmatprep.subr.mxu0 0.0
    %1284 = vmatpush1.msra.mxu0 0.0
    %1285 = vmatprep.subr.mxu0 0.0
    %1286 = vmatpush1.msra.mxu0 0.0
    %1287 = vmatprep.subr.mxu0 0.0
    %1288 = vmatpush1.msra.mxu0 0.0
    %1289 = vmatprep.subr.mxu0 0.0
    %1290 = vmatpush1.msra.mxu0 0.0
    %1291 = vmatprep.subr.mxu0 0.0
    %1292 = vmatpush1.msra.mxu0 0.0
    %1293 = vmatprep.subr.mxu0 0.0
    %1294 = vmatpush1.msra.mxu0 0.0
    %1295 = vmatprep.subr.mxu0 0.0
    %1296 = vmatpush1.msra.mxu0 0.0
    %1297 = vmatprep.subr.mxu0 0.0
    %1298 = vmatpush1.msra.mxu0 0.0
    %1299 = vmatprep.subr.mxu0 0.0
    %1300 = vmatpush1.msra.mxu0 0.0
    %1301 = vmatprep.subr.mxu0 0.0
    %1302 = vmatpush1.msra.mxu0 0.0
    %1303 = vmatprep.subr.mxu0 0.0
    %1304 = vmatpush1.msra.mxu0 0.0
    %1305 = vmatprep.subr.mxu0 0.0
    %1306 = vmatpush1.msra.mxu0 0.0
    %1307 = vmatprep.subr.mxu0 0.0
    %1308 = vmatpush1.msra.mxu0 0.0
    %1309 = vmatprep.subr.mxu0 0.0
    %1310 = vmatpush1.msra.mxu0 %v1272
    %1311 = vmatprep.subr.mxu0 0.0
    %1312 = vmatpush1.msra.mxu0 %v1270
    %1313 = vmatprep.subr.mxu0 0.0
    %1314 = vmatpush2.msra.mxu0 0.0
    %1315 = vmatprep.subr.mxu0 0.0
    %1316 = vmatpush2.msra.mxu0 0.0
    %1317 = vmatprep.subr.mxu0 0.0
    %1318 = vmatpush2.msra.mxu0 0.0
    %1319 = vmatprep.subr.mxu0 0.0
    %1320 = vmatpush2.msra.mxu0 0.0
    %1321 = vmatprep.subr.mxu0 0.0
    %1322 = vmatpush2.msra.mxu0 0.0
    %1323 = vmatprep.subr.mxu0 0.0
    %1324 = vmatpush2.msra.mxu0 0.0
    %1325 = vmatprep.subr.mxu0 0.0
    %1326 = vmatpush2.msra.mxu0 0.0
    %1327 = vmatprep.subr.mxu0 0.0
    %1328 = vmatpush2.msra.mxu0 0.0
    %1329 = vmatprep.subr.mxu0 0.0
    %1330 = vmatpush2.msra.mxu0 0.0
    %1331 = vmatprep.subr.mxu0 0.0
    %1332 = vmatpush2.msra.mxu0 0.0
    %1333 = vmatprep.subr.mxu0 0.0
    %1334 = vmatpush2.msra.mxu0 0.0
    %1335 = vmatprep.subr.mxu0 0.0
    %1336 = vmatpush2.msra.mxu0 0.0
    %1337 = vmatprep.subr.mxu0 0.0
    %1338 = vmatpush2.msra.mxu0 0.0
    %1339 = vmatprep.subr.mxu0 0.0
    %1340 = vmatpush2.msra.mxu0 0.0
    %1341 = vmatprep.subr.mxu0 0.0
    %1342 = vmatpush2.msra.mxu0 0.0
    %1343 = vmatprep.subr.mxu0 0.0
    %1344 = vmatpush2.msra.mxu0 0.0
    %1345 = vmatprep.mubr.f32.mxu0 0.0
    %1346 = vmatmul.mubr.f32.gmra.mxu0 %v1276
    %v1347 = vpop.f32.mrf.mxu0
    %v1348 = vadd.f32 0.0, %v1347
    %v1349 = vpop.f32.mrf.mxu0
    %1350 = vmatprep.mubr.f32.mxu0 0.0
    %1351 = vmatmul.mubr.f32.gmra.mxu0 %v1279
    %v1352 = vpop.f32.mrf.mxu0
    %v1353 = vadd.f32 0.0, %v1352
    %v1354 = vpop.f32.mrf.mxu0
    %1355 = vdwg.mxu0
    %v1357 = vsel %vm309, %v1348, 0
    %v1360 = vsel %vm309, %v1353, 0
    %1362 = vmatprep.subr.mxu0 0.0
    %1363 = vmatpush1.msra.mxu0 0.0
    %1364 = vmatprep.subr.mxu0 0.0
    %1365 = vmatpush1.msra.mxu0 0.0
    %1366 = vmatprep.subr.mxu0 0.0
    %1367 = vmatpush1.msra.mxu0 0.0
    %1368 = vmatprep.subr.mxu0 0.0
    %1369 = vmatpush1.msra.mxu0 0.0
    %1370 = vmatprep.subr.mxu0 0.0
    %1371 = vmatpush1.msra.mxu0 0.0
    %1372 = vmatprep.subr.mxu0 0.0
    %1373 = vmatpush1.msra.mxu0 0.0
    %1374 = vmatprep.subr.mxu0 0.0
    %1375 = vmatpush1.msra.mxu0 0.0
    %1376 = vmatprep.subr.mxu0 0.0
    %1377 = vmatpush1.msra.mxu0 0.0
    %1378 = vmatprep.subr.mxu0 0.0
    %1379 = vmatpush1.msra.mxu0 0.0
    %1380 = vmatprep.subr.mxu0 0.0
    %1381 = vmatpush1.msra.mxu0 0.0
    %1382 = vmatprep.subr.mxu0 0.0
    %1383 = vmatpush1.msra.mxu0 0.0
    %1384 = vmatprep.subr.mxu0 0.0
    %1385 = vmatpush1.msra.mxu0 0.0
    %1386 = vmatprep.subr.mxu0 0.0
    %1387 = vmatpush1.msra.mxu0 0.0
    %1388 = vmatprep.subr.mxu0 0.0
    %1389 = vmatpush1.msra.mxu0 0.0
    %1390 = vmatprep.subr.mxu0 0.0
    %1391 = vmatpush1.msra.mxu0 0.0
    %1392 = vmatprep.subr.mxu0 0.0
    %1393 = vmatpush1.msra.mxu0 %v301
    %1394 = vmatprep.subr.mxu0 0.0
    %1395 = vmatpush2.msra.mxu0 0.0
    %1396 = vmatprep.subr.mxu0 0.0
    %1397 = vmatpush2.msra.mxu0 0.0
    %1398 = vmatprep.subr.mxu0 0.0
    %1399 = vmatpush2.msra.mxu0 0.0
    %1400 = vmatprep.subr.mxu0 0.0
    %1401 = vmatpush2.msra.mxu0 0.0
    %1402 = vmatprep.subr.mxu0 0.0
    %1403 = vmatpush2.msra.mxu0 0.0
    %1404 = vmatprep.subr.mxu0 0.0
    %1405 = vmatpush2.msra.mxu0 0.0
    %1406 = vmatprep.subr.mxu0 0.0
    %1407 = vmatpush2.msra.mxu0 0.0
    %1408 = vmatprep.subr.mxu0 0.0
    %1409 = vmatpush2.msra.mxu0 0.0
    %1410 = vmatprep.subr.mxu0 0.0
    %1411 = vmatpush2.msra.mxu0 0.0
    %1412 = vmatprep.subr.mxu0 0.0
    %1413 = vmatpush2.msra.mxu0 0.0
    %1414 = vmatprep.subr.mxu0 0.0
    %1415 = vmatpush2.msra.mxu0 0.0
    %1416 = vmatprep.subr.mxu0 0.0
    %1417 = vmatpush2.msra.mxu0 0.0
    %1418 = vmatprep.subr.mxu0 0.0
    %1419 = vmatpush2.msra.mxu0 0.0
    %1420 = vmatprep.subr.mxu0 0.0
    %1421 = vmatpush2.msra.mxu0 0.0
    %1422 = vmatprep.subr.mxu0 0.0
    %1423 = vmatpush2.msra.mxu0 0.0
    %1424 = vmatprep.subr.mxu0 0.0
    %1425 = vmatpush2.msra.mxu0 0.0
    %1426 = vmatprep.mubr.f32.mxu0 0.0
    %1427 = vmatmul.mubr.f32.gmra.mxu0 %v1357
    %v1428 = vpop.f32.mrf.mxu0
    %v1429 = vadd.f32 0.0, %v1428
    %v1430 = vpop.f32.mrf.mxu0
    %1431 = vmatprep.mubr.f32.mxu0 0.0
    %1432 = vmatmul.mubr.f32.gmra.mxu0 %v1360
    %v1433 = vpop.f32.mrf.mxu0
    %v1434 = vadd.f32 0.0, %v1433
    %v1435 = vpop.f32.mrf.mxu0
    %1436 = vdwg.mxu0
    %v1437 = vadd.f32 %v1267, %v1429
    %v1438 = vadd.f32 %v1268, %v1434
    %v1440 = vlaneseq
    %v1441 = vshrl.u32 %v1440, 7
    %v1442 = vsub.s32 0, %v1441
    %v1443 = vrot.slane %v302, %v1442
    %v1445 = vadd.f32 %v1437, %v1443
    %v1446 = vadd.f32 %v1438, %v1443
    %v1447 = vadd.f32 %v1445, %v197
    %v1448 = vadd.f32 %v1446, %v198
    %v1449 = vld [vmem:[%s8] sm:$0xff]
    %v1450 = vld [vmem:[%s8 + $0x8] sm:$0xff]
    %v1451 = vld [vmem:[%s8 + $0x10] sm:$0xff]
    %v1452 = vld [vmem:[%s8 + $0x18] sm:$0xff]
    %v1453 = vld [vmem:[#allocation8] sm:$0x1]
    %v1455 = vlaneseq
    %v1456 = vshrl.u32 %v1455, 7
    %v1457 = vsub.s32 0, %v1456
    %v1458 = vrot.slane %v1453, %v1457
    %v1461 = vsel %vm216, %v1447, 0
    %v1464 = vsel %vm216, %v1448, 0
    %1466 = vmatprep.subr.mxu0 0.0
    %1467 = vmatpush1.msra.mxu0 0.0
    %1468 = vmatprep.subr.mxu0 0.0
    %1469 = vmatpush1.msra.mxu0 0.0
    %1470 = vmatprep.subr.mxu0 0.0
    %1471 = vmatpush1.msra.mxu0 0.0
    %1472 = vmatprep.subr.mxu0 0.0
    %1473 = vmatpush1.msra.mxu0 0.0
    %1474 = vmatprep.subr.mxu0 0.0
    %1475 = vmatpush1.msra.mxu0 0.0
    %1476 = vmatprep.subr.mxu0 0.0
    %1477 = vmatpush1.msra.mxu0 0.0
    %1478 = vmatprep.subr.mxu0 0.0
    %1479 = vmatpush1.msra.mxu0 0.0
    %1480 = vmatprep.subr.mxu0 0.0
    %1481 = vmatpush1.msra.mxu0 0.0
    %1482 = vmatprep.subr.mxu0 0.0
    %1483 = vmatpush1.msra.mxu0 0.0
    %1484 = vmatprep.subr.mxu0 0.0
    %1485 = vmatpush1.msra.mxu0 0.0
    %1486 = vmatprep.subr.mxu0 0.0
    %1487 = vmatpush1.msra.mxu0 0.0
    %1488 = vmatprep.subr.mxu0 0.0
    %1489 = vmatpush1.msra.mxu0 0.0
    %1490 = vmatprep.subr.mxu0 0.0
    %1491 = vmatpush1.msra.mxu0 %v1452
    %1492 = vmatprep.subr.mxu0 0.0
    %1493 = vmatpush1.msra.mxu0 %v1451
    %1494 = vmatprep.subr.mxu0 0.0
    %1495 = vmatpush1.msra.mxu0 %v1450
    %1496 = vmatprep.subr.mxu0 0.0
    %1497 = vmatpush1.msra.mxu0 %v1449
    %1498 = vmatprep.subr.mxu0 0.0
    %1499 = vmatpush2.msra.mxu0 0.0
    %1500 = vmatprep.subr.mxu0 0.0
    %1501 = vmatpush2.msra.mxu0 0.0
    %1502 = vmatprep.subr.mxu0 0.0
    %1503 = vmatpush2.msra.mxu0 0.0
    %1504 = vmatprep.subr.mxu0 0.0
    %1505 = vmatpush2.msra.mxu0 0.0
    %1506 = vmatprep.subr.mxu0 0.0
    %1507 = vmatpush2.msra.mxu0 0.0
    %1508 = vmatprep.subr.mxu0 0.0
    %1509 = vmatpush2.msra.mxu0 0.0
    %1510 = vmatprep.subr.mxu0 0.0
    %1511 = vmatpush2.msra.mxu0 0.0
    %1512 = vmatprep.subr.mxu0 0.0
    %1513 = vmatpush2.msra.mxu0 0.0
    %1514 = vmatprep.subr.mxu0 0.0
    %1515 = vmatpush2.msra.mxu0 0.0
    %1516 = vmatprep.subr.mxu0 0.0
    %1517 = vmatpush2.msra.mxu0 0.0
    %1518 = vmatprep.subr.mxu0 0.0
    %1519 = vmatpush2.msra.mxu0 0.0
    %1520 = vmatprep.subr.mxu0 0.0
    %1521 = vmatpush2.msra.mxu0 0.0
    %1522 = vmatprep.subr.mxu0 0.0
    %1523 = vmatpush2.msra.mxu0 0.0
    %1524 = vmatprep.subr.mxu0 0.0
    %1525 = vmatpush2.msra.mxu0 0.0
    %1526 = vmatprep.subr.mxu0 0.0
    %1527 = vmatpush2.msra.mxu0 0.0
    %1528 = vmatprep.subr.mxu0 0.0
    %1529 = vmatpush2.msra.mxu0 0.0
    %1530 = vmatprep.mubr.f32.mxu0 0.0
    %1531 = vmatmul.mubr.f32.gmra.mxu0 %v1461
    %v1532 = vpop.f32.mrf.mxu0
    %v1533 = vadd.f32 %v1458, %v1532
    %v1534 = vpop.f32.mrf.mxu0
    %1535 = vmatprep.mubr.f32.mxu0 0.0
    %1536 = vmatmul.mubr.f32.gmra.mxu0 %v1464
    %v1537 = vpop.f32.mrf.mxu0
    %v1538 = vadd.f32 %v1458, %v1537
    %v1539 = vpop.f32.mrf.mxu0
    %1540 = vdwg.mxu0
    %v1541 = vld [vmem:[#allocation10] sm:$0xff]
    %v1542 = vld [vmem:[#allocation10 + $0x8] sm:$0xff]
    %v1543 = vld [vmem:[#allocation10 + $0x10] sm:$0xff]
    %v1544 = vld [vmem:[#allocation10 + $0x18] sm:$0xff]
    %v1545 = vld [vmem:[#allocation11] sm:$0x1]
    %v1547 = vlaneseq
    %v1548 = vshrl.u32 %v1547, 7
    %v1549 = vsub.s32 0, %v1548
    %v1550 = vrot.slane %v1545, %v1549
    %v1553 = vsel %vm216, %v199, 0
    %v1556 = vsel %vm216, %v200, 0
    %1558 = vmatprep.subr.mxu0 0.0
    %1559 = vmatpush1.msra.mxu0 0.0
    %1560 = vmatprep.subr.mxu0 0.0
    %1561 = vmatpush1.msra.mxu0 0.0
    %1562 = vmatprep.subr.mxu0 0.0
    %1563 = vmatpush1.msra.mxu0 0.0
    %1564 = vmatprep.subr.mxu0 0.0
    %1565 = vmatpush1.msra.mxu0 0.0
    %1566 = vmatprep.subr.mxu0 0.0
    %1567 = vmatpush1.msra.mxu0 0.0
    %1568 = vmatprep.subr.mxu0 0.0
    %1569 = vmatpush1.msra.mxu0 0.0
    %1570 = vmatprep.subr.mxu0 0.0
    %1571 = vmatpush1.msra.mxu0 0.0
    %1572 = vmatprep.subr.mxu0 0.0
    %1573 = vmatpush1.msra.mxu0 0.0
    %1574 = vmatprep.subr.mxu0 0.0
    %1575 = vmatpush1.msra.mxu0 0.0
    %1576 = vmatprep.subr.mxu0 0.0
    %1577 = vmatpush1.msra.mxu0 0.0
    %1578 = vmatprep.subr.mxu0 0.0
    %1579 = vmatpush1.msra.mxu0 0.0
    %1580 = vmatprep.subr.mxu0 0.0
    %1581 = vmatpush1.msra.mxu0 0.0
    %1582 = vmatprep.subr.mxu0 0.0
    %1583 = vmatpush1.msra.mxu0 %v1544
    %1584 = vmatprep.subr.mxu0 0.0
    %1585 = vmatpush1.msra.mxu0 %v1543
    %1586 = vmatprep.subr.mxu0 0.0
    %1587 = vmatpush1.msra.mxu0 %v1542
    %1588 = vmatprep.subr.mxu0 0.0
    %1589 = vmatpush1.msra.mxu0 %v1541
    %1590 = vmatprep.subr.mxu0 0.0
    %1591 = vmatpush2.msra.mxu0 0.0
    %1592 = vmatprep.subr.mxu0 0.0
    %1593 = vmatpush2.msra.mxu0 0.0
    %1594 = vmatprep.subr.mxu0 0.0
    %1595 = vmatpush2.msra.mxu0 0.0
    %1596 = vmatprep.subr.mxu0 0.0
    %1597 = vmatpush2.msra.mxu0 0.0
    %1598 = vmatprep.subr.mxu0 0.0
    %1599 = vmatpush2.msra.mxu0 0.0
    %1600 = vmatprep.subr.mxu0 0.0
    %1601 = vmatpush2.msra.mxu0 0.0
    %1602 = vmatprep.subr.mxu0 0.0
    %1603 = vmatpush2.msra.mxu0 0.0
    %1604 = vmatprep.subr.mxu0 0.0
    %1605 = vmatpush2.msra.mxu0 0.0
    %1606 = vmatprep.subr.mxu0 0.0
    %1607 = vmatpush2.msra.mxu0 0.0
    %1608 = vmatprep.subr.mxu0 0.0
    %1609 = vmatpush2.msra.mxu0 0.0
    %1610 = vmatprep.subr.mxu0 0.0
    %1611 = vmatpush2.msra.mxu0 0.0
    %1612 = vmatprep.subr.mxu0 0.0
    %1613 = vmatpush2.msra.mxu0 0.0
    %1614 = vmatprep.subr.mxu0 0.0
    %1615 = vmatpush2.msra.mxu0 0.0
    %1616 = vmatprep.subr.mxu0 0.0
    %1617 = vmatpush2.msra.mxu0 0.0
    %1618 = vmatprep.subr.mxu0 0.0
    %1619 = vmatpush2.msra.mxu0 0.0
    %1620 = vmatprep.subr.mxu0 0.0
    %1621 = vmatpush2.msra.mxu0 0.0
    %1622 = vmatprep.mubr.f32.mxu0 0.0
    %1623 = vmatmul.mubr.f32.gmra.mxu0 %v1553
    %v1624 = vpop.f32.mrf.mxu0
    %v1625 = vadd.f32 %v1550, %v1624
    %v1626 = vpop.f32.mrf.mxu0
    %1627 = vmatprep.mubr.f32.mxu0 0.0
    %1628 = vmatmul.mubr.f32.gmra.mxu0 %v1556
    %v1629 = vpop.f32.mrf.mxu0
    %v1630 = vadd.f32 %v1550, %v1629
    %v1631 = vpop.f32.mrf.mxu0
    %1632 = vdwg.mxu0
    %v1633 = vld [vmem:[#allocation13] sm:$0xff]
    %v1634 = vld [vmem:[#allocation13 + $0x8] sm:$0xff]
    %v1635 = vld [vmem:[#allocation13 + $0x10] sm:$0xff]
    %v1636 = vld [vmem:[#allocation13 + $0x18] sm:$0xff]
    %v1637 = vld [vmem:[#allocation14] sm:$0x1]
    %v1639 = vsel %vm309, %v1533, 0
    %v1642 = vsel %vm309, %v1538, 0
    %v1645 = vsel %vm309, %v1625, 0
    %v1648 = vsel %vm309, %v1630, 0
    %1650 = vmatprep.subr.mxu0 0.0
    %1651 = vmatpush1.xpose.msra.mxu0 0.0
    %1652 = vmatprep.subr.mxu0 0.0
    %1653 = vmatpush1.xpose.msra.mxu0 0.0
    %1654 = vmatprep.subr.mxu0 0.0
    %1655 = vmatpush1.xpose.msra.mxu0 0.0
    %1656 = vmatprep.subr.mxu0 0.0
    %1657 = vmatpush1.xpose.msra.mxu0 0.0
    %1658 = vmatprep.subr.mxu0 0.0
    %1659 = vmatpush1.xpose.msra.mxu0 0.0
    %1660 = vmatprep.subr.mxu0 0.0
    %1661 = vmatpush1.xpose.msra.mxu0 0.0
    %1662 = vmatprep.subr.mxu0 0.0
    %1663 = vmatpush1.xpose.msra.mxu0 0.0
    %1664 = vmatprep.subr.mxu0 0.0
    %1665 = vmatpush1.xpose.msra.mxu0 0.0
    %1666 = vmatprep.subr.mxu0 0.0
    %1667 = vmatpush1.xpose.msra.mxu0 0.0
    %1668 = vmatprep.subr.mxu0 0.0
    %1669 = vmatpush1.xpose.msra.mxu0 0.0
    %1670 = vmatprep.subr.mxu0 0.0
    %1671 = vmatpush1.xpose.msra.mxu0 0.0
    %1672 = vmatprep.subr.mxu0 0.0
    %1673 = vmatpush1.xpose.msra.mxu0 0.0
    %1674 = vmatprep.subr.mxu0 0.0
    %1675 = vmatpush1.xpose.msra.mxu0 0.0
    %1676 = vmatprep.subr.mxu0 0.0
    %1677 = vmatpush1.xpose.msra.mxu0 0.0
    %1678 = vmatprep.subr.mxu0 0.0
    %1679 = vmatpush1.xpose.msra.mxu0 %v1648
    %1680 = vmatprep.subr.mxu0 0.0
    %1681 = vmatpush1.xpose.msra.mxu0 %v1645
    %1682 = vmatprep.subr.mxu0 0.0
    %1683 = vmatpush2.xpose.msra.mxu0 0.0
    %1684 = vmatprep.subr.mxu0 0.0
    %1685 = vmatpush2.xpose.msra.mxu0 0.0
    %1686 = vmatprep.subr.mxu0 0.0
    %1687 = vmatpush2.xpose.msra.mxu0 0.0
    %1688 = vmatprep.subr.mxu0 0.0
    %1689 = vmatpush2.xpose.msra.mxu0 0.0
    %1690 = vmatprep.subr.mxu0 0.0
    %1691 = vmatpush2.xpose.msra.mxu0 0.0
    %1692 = vmatprep.subr.mxu0 0.0
    %1693 = vmatpush2.xpose.msra.mxu0 0.0
    %1694 = vmatprep.subr.mxu0 0.0
    %1695 = vmatpush2.xpose.msra.mxu0 0.0
    %1696 = vmatprep.subr.mxu0 0.0
    %1697 = vmatpush2.xpose.msra.mxu0 0.0
    %1698 = vmatprep.subr.mxu0 0.0
    %1699 = vmatpush2.xpose.msra.mxu0 0.0
    %1700 = vmatprep.subr.mxu0 0.0
    %1701 = vmatpush2.xpose.msra.mxu0 0.0
    %1702 = vmatprep.subr.mxu0 0.0
    %1703 = vmatpush2.xpose.msra.mxu0 0.0
    %1704 = vmatprep.subr.mxu0 0.0
    %1705 = vmatpush2.xpose.msra.mxu0 0.0
    %1706 = vmatprep.subr.mxu0 0.0
    %1707 = vmatpush2.xpose.msra.mxu0 0.0
    %1708 = vmatprep.subr.mxu0 0.0
    %1709 = vmatpush2.xpose.msra.mxu0 0.0
    %1710 = vmatprep.subr.mxu0 0.0
    %1711 = vmatpush2.xpose.msra.mxu0 0.0
    %1712 = vmatprep.subr.mxu0 0.0
    %1713 = vmatpush2.xpose.msra.mxu0 0.0
    %1714 = vmatprep.mubr.f32.mxu0 0.0
    %1715 = vmatmul.mubr.f32.gmra.mxu0 %v1639
    %v1716 = vpop.f32.mrf.mxu0
    %v1717 = vadd.f32 %v203, %v1716
    %v1718 = vpop.f32.mrf.mxu0
    %1719 = vmatprep.mubr.f32.mxu0 0.0
    %1720 = vmatmul.mubr.f32.gmra.mxu0 %v1642
    %v1721 = vpop.f32.mrf.mxu0
    %v1722 = vadd.f32 %v204, %v1721
    %v1723 = vpop.f32.mrf.mxu0
    %1724 = vdwg.mxu0
    %1725 = vrot.lane.b32.xlu0 %v1533, 120
    %v1726 = vpop.permute.xlu0 %1725
    %1727 = vrot.lane.b32.xlu0 %v1538, 120
    %v1728 = vpop.permute.xlu0 %1727
    %1729 = vrot.lane.b32.xlu0 %v1625, 120
    %v1730 = vpop.permute.xlu0 %1729
    %1731 = vrot.lane.b32.xlu0 %v1630, 120
    %v1732 = vpop.permute.xlu0 %1731
    %v1733 = vsel %vm309, %v1726, 0
    %v1735 = vsel %vm309, %v1728, 0
    %v1737 = vsel %vm309, %v1730, 0
    %v1739 = vsel %vm309, %v1732, 0
    %1741 = vmatprep.subr.mxu0 0.0
    %1742 = vmatpush1.xpose.msra.mxu0 0.0
    %1743 = vmatprep.subr.mxu0 0.0
    %1744 = vmatpush1.xpose.msra.mxu0 0.0
    %1745 = vmatprep.subr.mxu0 0.0
    %1746 = vmatpush1.xpose.msra.mxu0 0.0
    %1747 = vmatprep.subr.mxu0 0.0
    %1748 = vmatpush1.xpose.msra.mxu0 0.0
    %1749 = vmatprep.subr.mxu0 0.0
    %1750 = vmatpush1.xpose.msra.mxu0 0.0
    %1751 = vmatprep.subr.mxu0 0.0
    %1752 = vmatpush1.xpose.msra.mxu0 0.0
    %1753 = vmatprep.subr.mxu0 0.0
    %1754 = vmatpush1.xpose.msra.mxu0 0.0
    %1755 = vmatprep.subr.mxu0 0.0
    %1756 = vmatpush1.xpose.msra.mxu0 0.0
    %1757 = vmatprep.subr.mxu0 0.0
    %1758 = vmatpush1.xpose.msra.mxu0 0.0
    %1759 = vmatprep.subr.mxu0 0.0
    %1760 = vmatpush1.xpose.msra.mxu0 0.0
    %1761 = vmatprep.subr.mxu0 0.0
    %1762 = vmatpush1.xpose.msra.mxu0 0.0
    %1763 = vmatprep.subr.mxu0 0.0
    %1764 = vmatpush1.xpose.msra.mxu0 0.0
    %1765 = vmatprep.subr.mxu0 0.0
    %1766 = vmatpush1.xpose.msra.mxu0 0.0
    %1767 = vmatprep.subr.mxu0 0.0
    %1768 = vmatpush1.xpose.msra.mxu0 0.0
    %1769 = vmatprep.subr.mxu0 0.0
    %1770 = vmatpush1.xpose.msra.mxu0 %v1739
    %1771 = vmatprep.subr.mxu0 0.0
    %1772 = vmatpush1.xpose.msra.mxu0 %v1737
    %1773 = vmatprep.subr.mxu0 0.0
    %1774 = vmatpush2.xpose.msra.mxu0 0.0
    %1775 = vmatprep.subr.mxu0 0.0
    %1776 = vmatpush2.xpose.msra.mxu0 0.0
    %1777 = vmatprep.subr.mxu0 0.0
    %1778 = vmatpush2.xpose.msra.mxu0 0.0
    %1779 = vmatprep.subr.mxu0 0.0
    %1780 = vmatpush2.xpose.msra.mxu0 0.0
    %1781 = vmatprep.subr.mxu0 0.0
    %1782 = vmatpush2.xpose.msra.mxu0 0.0
    %1783 = vmatprep.subr.mxu0 0.0
    %1784 = vmatpush2.xpose.msra.mxu0 0.0
    %1785 = vmatprep.subr.mxu0 0.0
    %1786 = vmatpush2.xpose.msra.mxu0 0.0
    %1787 = vmatprep.subr.mxu0 0.0
    %1788 = vmatpush2.xpose.msra.mxu0 0.0
    %1789 = vmatprep.subr.mxu0 0.0
    %1790 = vmatpush2.xpose.msra.mxu0 0.0
    %1791 = vmatprep.subr.mxu0 0.0
    %1792 = vmatpush2.xpose.msra.mxu0 0.0
    %1793 = vmatprep.subr.mxu0 0.0
    %1794 = vmatpush2.xpose.msra.mxu0 0.0
    %1795 = vmatprep.subr.mxu0 0.0
    %1796 = vmatpush2.xpose.msra.mxu0 0.0
    %1797 = vmatprep.subr.mxu0 0.0
    %1798 = vmatpush2.xpose.msra.mxu0 0.0
    %1799 = vmatprep.subr.mxu0 0.0
    %1800 = vmatpush2.xpose.msra.mxu0 0.0
    %1801 = vmatprep.subr.mxu0 0.0
    %1802 = vmatpush2.xpose.msra.mxu0 0.0
    %1803 = vmatprep.subr.mxu0 0.0
    %1804 = vmatpush2.xpose.msra.mxu0 0.0
    %1805 = vmatprep.mubr.f32.mxu0 0.0
    %1806 = vmatmul.mubr.f32.gmra.mxu0 %v1733
    %v1807 = vpop.f32.mrf.mxu0
    %v1808 = vadd.f32 %v203, %v1807
    %v1809 = vpop.f32.mrf.mxu0
    %1810 = vmatprep.mubr.f32.mxu0 0.0
    %1811 = vmatmul.mubr.f32.gmra.mxu0 %v1735
    %v1812 = vpop.f32.mrf.mxu0
    %v1813 = vadd.f32 %v204, %v1812
    %v1814 = vpop.f32.mrf.mxu0
    %1815 = vdwg.mxu0
    %1816 = vrot.lane.b32.xlu0 %v1533, 112
    %v1817 = vpop.permute.xlu0 %1816
    %1818 = vrot.lane.b32.xlu0 %v1538, 112
    %v1819 = vpop.permute.xlu0 %1818
    %1820 = vrot.lane.b32.xlu0 %v1625, 112
    %v1821 = vpop.permute.xlu0 %1820
    %1822 = vrot.lane.b32.xlu0 %v1630, 112
    %v1823 = vpop.permute.xlu0 %1822
    %v1824 = vsel %vm309, %v1817, 0
    %v1826 = vsel %vm309, %v1819, 0
    %v1828 = vsel %vm309, %v1821, 0
    %v1830 = vsel %vm309, %v1823, 0
    %1832 = vmatprep.subr.mxu0 0.0
    %1833 = vmatpush1.xpose.msra.mxu0 0.0
    %1834 = vmatprep.subr.mxu0 0.0
    %1835 = vmatpush1.xpose.msra.mxu0 0.0
    %1836 = vmatprep.subr.mxu0 0.0
    %1837 = vmatpush1.xpose.msra.mxu0 0.0
    %1838 = vmatprep.subr.mxu0 0.0
    %1839 = vmatpush1.xpose.msra.mxu0 0.0
    %1840 = vmatprep.subr.mxu0 0.0
    %1841 = vmatpush1.xpose.msra.mxu0 0.0
    %1842 = vmatprep.subr.mxu0 0.0
    %1843 = vmatpush1.xpose.msra.mxu0 0.0
    %1844 = vmatprep.subr.mxu0 0.0
    %1845 = vmatpush1.xpose.msra.mxu0 0.0
    %1846 = vmatprep.subr.mxu0 0.0
    %1847 = vmatpush1.xpose.msra.mxu0 0.0
    %1848 = vmatprep.subr.mxu0 0.0
    %1849 = vmatpush1.xpose.msra.mxu0 0.0
    %1850 = vmatprep.subr.mxu0 0.0
    %1851 = vmatpush1.xpose.msra.mxu0 0.0
    %1852 = vmatprep.subr.mxu0 0.0
    %1853 = vmatpush1.xpose.msra.mxu0 0.0
    %1854 = vmatprep.subr.mxu0 0.0
    %1855 = vmatpush1.xpose.msra.mxu0 0.0
    %1856 = vmatprep.subr.mxu0 0.0
    %1857 = vmatpush1.xpose.msra.mxu0 0.0
    %1858 = vmatprep.subr.mxu0 0.0
    %1859 = vmatpush1.xpose.msra.mxu0 0.0
    %1860 = vmatprep.subr.mxu0 0.0
    %1861 = vmatpush1.xpose.msra.mxu0 %v1830
    %1862 = vmatprep.subr.mxu0 0.0
    %1863 = vmatpush1.xpose.msra.mxu0 %v1828
    %1864 = vmatprep.subr.mxu0 0.0
    %1865 = vmatpush2.xpose.msra.mxu0 0.0
    %1866 = vmatprep.subr.mxu0 0.0
    %1867 = vmatpush2.xpose.msra.mxu0 0.0
    %1868 = vmatprep.subr.mxu0 0.0
    %1869 = vmatpush2.xpose.msra.mxu0 0.0
    %1870 = vmatprep.subr.mxu0 0.0
    %1871 = vmatpush2.xpose.msra.mxu0 0.0
    %1872 = vmatprep.subr.mxu0 0.0
    %1873 = vmatpush2.xpose.msra.mxu0 0.0
    %1874 = vmatprep.subr.mxu0 0.0
    %1875 = vmatpush2.xpose.msra.mxu0 0.0
    %1876 = vmatprep.subr.mxu0 0.0
    %1877 = vmatpush2.xpose.msra.mxu0 0.0
    %1878 = vmatprep.subr.mxu0 0.0
    %1879 = vmatpush2.xpose.msra.mxu0 0.0
    %1880 = vmatprep.subr.mxu0 0.0
    %1881 = vmatpush2.xpose.msra.mxu0 0.0
    %1882 = vmatprep.subr.mxu0 0.0
    %1883 = vmatpush2.xpose.msra.mxu0 0.0
    %1884 = vmatprep.subr.mxu0 0.0
    %1885 = vmatpush2.xpose.msra.mxu0 0.0
    %1886 = vmatprep.subr.mxu0 0.0
    %1887 = vmatpush2.xpose.msra.mxu0 0.0
    %1888 = vmatprep.subr.mxu0 0.0
    %1889 = vmatpush2.xpose.msra.mxu0 0.0
    %1890 = vmatprep.subr.mxu0 0.0
    %1891 = vmatpush2.xpose.msra.mxu0 0.0
    %1892 = vmatprep.subr.mxu0 0.0
    %1893 = vmatpush2.xpose.msra.mxu0 0.0
    %1894 = vmatprep.subr.mxu0 0.0
    %1895 = vmatpush2.xpose.msra.mxu0 0.0
    %1896 = vmatprep.mubr.f32.mxu0 0.0
    %1897 = vmatmul.mubr.f32.gmra.mxu0 %v1824
    %v1898 = vpop.f32.mrf.mxu0
    %v1899 = vadd.f32 %v203, %v1898
    %v1900 = vpop.f32.mrf.mxu0
    %1901 = vmatprep.mubr.f32.mxu0 0.0
    %1902 = vmatmul.mubr.f32.gmra.mxu0 %v1826
    %v1903 = vpop.f32.mrf.mxu0
    %v1904 = vadd.f32 %v204, %v1903
    %v1905 = vpop.f32.mrf.mxu0
    %1906 = vdwg.mxu0
    %1907 = vrot.lane.b32.xlu0 %v1533, 104
    %v1908 = vpop.permute.xlu0 %1907
    %1909 = vrot.lane.b32.xlu0 %v1538, 104
    %v1910 = vpop.permute.xlu0 %1909
    %1911 = vrot.lane.b32.xlu0 %v1625, 104
    %v1912 = vpop.permute.xlu0 %1911
    %1913 = vrot.lane.b32.xlu0 %v1630, 104
    %v1914 = vpop.permute.xlu0 %1913
    %v1915 = vsel %vm309, %v1908, 0
    %v1917 = vsel %vm309, %v1910, 0
    %v1919 = vsel %vm309, %v1912, 0
    %v1921 = vsel %vm309, %v1914, 0
    %1923 = vmatprep.subr.mxu0 0.0
    %1924 = vmatpush1.xpose.msra.mxu0 0.0
    %1925 = vmatprep.subr.mxu0 0.0
    %1926 = vmatpush1.xpose.msra.mxu0 0.0
    %1927 = vmatprep.subr.mxu0 0.0
    %1928 = vmatpush1.xpose.msra.mxu0 0.0
    %1929 = vmatprep.subr.mxu0 0.0
    %1930 = vmatpush1.xpose.msra.mxu0 0.0
    %1931 = vmatprep.subr.mxu0 0.0
    %1932 = vmatpush1.xpose.msra.mxu0 0.0
    %1933 = vmatprep.subr.mxu0 0.0
    %1934 = vmatpush1.xpose.msra.mxu0 0.0
    %1935 = vmatprep.subr.mxu0 0.0
    %1936 = vmatpush1.xpose.msra.mxu0 0.0
    %1937 = vmatprep.subr.mxu0 0.0
    %1938 = vmatpush1.xpose.msra.mxu0 0.0
    %1939 = vmatprep.subr.mxu0 0.0
    %1940 = vmatpush1.xpose.msra.mxu0 0.0
    %1941 = vmatprep.subr.mxu0 0.0
    %1942 = vmatpush1.xpose.msra.mxu0 0.0
    %1943 = vmatprep.subr.mxu0 0.0
    %1944 = vmatpush1.xpose.msra.mxu0 0.0
    %1945 = vmatprep.subr.mxu0 0.0
    %1946 = vmatpush1.xpose.msra.mxu0 0.0
    %1947 = vmatprep.subr.mxu0 0.0
    %1948 = vmatpush1.xpose.msra.mxu0 0.0
    %1949 = vmatprep.subr.mxu0 0.0
    %1950 = vmatpush1.xpose.msra.mxu0 0.0
    %1951 = vmatprep.subr.mxu0 0.0
    %1952 = vmatpush1.xpose.msra.mxu0 %v1921
    %1953 = vmatprep.subr.mxu0 0.0
    %1954 = vmatpush1.xpose.msra.mxu0 %v1919
    %1955 = vmatprep.subr.mxu0 0.0
    %1956 = vmatpush2.xpose.msra.mxu0 0.0
    %1957 = vmatprep.subr.mxu0 0.0
    %1958 = vmatpush2.xpose.msra.mxu0 0.0
    %1959 = vmatprep.subr.mxu0 0.0
    %1960 = vmatpush2.xpose.msra.mxu0 0.0
    %1961 = vmatprep.subr.mxu0 0.0
    %1962 = vmatpush2.xpose.msra.mxu0 0.0
    %1963 = vmatprep.subr.mxu0 0.0
    %1964 = vmatpush2.xpose.msra.mxu0 0.0
    %1965 = vmatprep.subr.mxu0 0.0
    %1966 = vmatpush2.xpose.msra.mxu0 0.0
    %1967 = vmatprep.subr.mxu0 0.0
    %1968 = vmatpush2.xpose.msra.mxu0 0.0
    %1969 = vmatprep.subr.mxu0 0.0
    %1970 = vmatpush2.xpose.msra.mxu0 0.0
    %1971 = vmatprep.subr.mxu0 0.0
    %1972 = vmatpush2.xpose.msra.mxu0 0.0
    %1973 = vmatprep.subr.mxu0 0.0
    %1974 = vmatpush2.xpose.msra.mxu0 0.0
    %1975 = vmatprep.subr.mxu0 0.0
    %1976 = vmatpush2.xpose.msra.mxu0 0.0
    %1977 = vmatprep.subr.mxu0 0.0
    %1978 = vmatpush2.xpose.msra.mxu0 0.0
    %1979 = vmatprep.subr.mxu0 0.0
    %1980 = vmatpush2.xpose.msra.mxu0 0.0
    %1981 = vmatprep.subr.mxu0 0.0
    %1982 = vmatpush2.xpose.msra.mxu0 0.0
    %1983 = vmatprep.subr.mxu0 0.0
    %1984 = vmatpush2.xpose.msra.mxu0 0.0
    %1985 = vmatprep.subr.mxu0 0.0
    %1986 = vmatpush2.xpose.msra.mxu0 0.0
    %1987 = vmatprep.mubr.f32.mxu0 0.0
    %1988 = vmatmul.mubr.f32.gmra.mxu0 %v1915
    %v1989 = vpop.f32.mrf.mxu0
    %v1990 = vadd.f32 %v203, %v1989
    %v1991 = vpop.f32.mrf.mxu0
    %1992 = vmatprep.mubr.f32.mxu0 0.0
    %1993 = vmatmul.mubr.f32.gmra.mxu0 %v1917
    %v1994 = vpop.f32.mrf.mxu0
    %v1995 = vadd.f32 %v204, %v1994
    %v1996 = vpop.f32.mrf.mxu0
    %1997 = vdwg.mxu0
    %v1998 = vsel %vm666, %v1717, -inf
    %1999 = vmax.xlane.f32.xlu0 %v1998
    %v2000 = vpop.xlane.xlu0 %1999
    %v2001 = vsel %vm666, %v1722, -inf
    %2002 = vmax.xlane.f32.xlu0 %v2001
    %v2003 = vpop.xlane.xlu0 %2002
    %v2004 = vsel %vm666, %v1808, -inf
    %2005 = vmax.xlane.f32.xlu0 %v2004
    %v2006 = vpop.xlane.xlu0 %2005
    %v2007 = vsel %vm666, %v1813, -inf
    %2008 = vmax.xlane.f32.xlu0 %v2007
    %v2009 = vpop.xlane.xlu0 %2008
    %v2010 = vsel %vm666, %v1899, -inf
    %2011 = vmax.xlane.f32.xlu0 %v2010
    %v2012 = vpop.xlane.xlu0 %2011
    %v2013 = vsel %vm666, %v1904, -inf
    %2014 = vmax.xlane.f32.xlu0 %v2013
    %v2015 = vpop.xlane.xlu0 %2014
    %v2016 = vsel %vm666, %v1990, -inf
    %2017 = vmax.xlane.f32.xlu0 %v2016
    %v2018 = vpop.xlane.xlu0 %2017
    %v2019 = vsel %vm666, %v1995, -inf
    %2020 = vmax.xlane.f32.xlu0 %v2019
    %v2021 = vpop.xlane.xlu0 %2020
    %v2022 = vsub.f32 %v1717, %v2000
    %v2023 = vsub.f32 %v1722, %v2003
    %v2024 = vsub.f32 %v1808, %v2006
    %v2025 = vsub.f32 %v1813, %v2009
    %v2026 = vsub.f32 %v1899, %v2012
    %v2027 = vsub.f32 %v1904, %v2015
    %v2028 = vsub.f32 %v1990, %v2018
    %v2029 = vsub.f32 %v1995, %v2021
    %v2030 = vmul.f32 %v2022, 1.442695
    %v2031 = vpow.pop %v2030
    %v2032 = vmul.f32 %v2023, 1.442695
    %v2033 = vpow.pop %v2032
    %v2034 = vmul.f32 %v2024, 1.442695
    %v2035 = vpow.pop %v2034
    %v2036 = vmul.f32 %v2025, 1.442695
    %v2037 = vpow.pop %v2036
    %v2038 = vmul.f32 %v2026, 1.442695
    %v2039 = vpow.pop %v2038
    %v2040 = vmul.f32 %v2027, 1.442695
    %v2041 = vpow.pop %v2040
    %v2042 = vmul.f32 %v2028, 1.442695
    %v2043 = vpow.pop %v2042
    %v2044 = vmul.f32 %v2029, 1.442695
    %v2045 = vpow.pop %v2044
    %v2046 = vsel %vm666, %v2031, 0.0
    %2047 = vadd.xlane.f32.xlu0 %v2046
    %v2048 = vpop.xlane.xlu0 %2047
    %v2049 = vsel %vm666, %v2033, 0.0
    %2050 = vadd.xlane.f32.xlu0 %v2049
    %v2051 = vpop.xlane.xlu0 %2050
    %v2052 = vsel %vm666, %v2035, 0.0
    %2053 = vadd.xlane.f32.xlu0 %v2052
    %v2054 = vpop.xlane.xlu0 %2053
    %v2055 = vsel %vm666, %v2037, 0.0
    %2056 = vadd.xlane.f32.xlu0 %v2055
    %v2057 = vpop.xlane.xlu0 %2056
    %v2058 = vsel %vm666, %v2039, 0.0
    %2059 = vadd.xlane.f32.xlu0 %v2058
    %v2060 = vpop.xlane.xlu0 %2059
    %v2061 = vsel %vm666, %v2041, 0.0
    %2062 = vadd.xlane.f32.xlu0 %v2061
    %v2063 = vpop.xlane.xlu0 %2062
    %v2064 = vsel %vm666, %v2043, 0.0
    %2065 = vadd.xlane.f32.xlu0 %v2064
    %v2066 = vpop.xlane.xlu0 %2065
    %v2067 = vsel %vm666, %v2045, 0.0
    %2068 = vadd.xlane.f32.xlu0 %v2067
    %v2069 = vpop.xlane.xlu0 %2068
    %v2070 = vrcp.pop %v2048
    %v2071 = vmul.f32 1.0, %v2070
    %v2072 = vrcp.pop %v2051
    %v2073 = vmul.f32 1.0, %v2072
    %v2074 = vrcp.pop %v2054
    %v2075 = vmul.f32 1.0, %v2074
    %v2076 = vrcp.pop %v2057
    %v2077 = vmul.f32 1.0, %v2076
    %v2078 = vrcp.pop %v2060
    %v2079 = vmul.f32 1.0, %v2078
    %v2080 = vrcp.pop %v2063
    %v2081 = vmul.f32 1.0, %v2080
    %v2082 = vrcp.pop %v2066
    %v2083 = vmul.f32 1.0, %v2082
    %v2084 = vrcp.pop %v2069
    %v2085 = vmul.f32 1.0, %v2084
    %v2086 = vmul.f32 %v2031, %v2071
    %v2087 = vmul.f32 %v2033, %v2073
    %v2088 = vmul.f32 %v2035, %v2075
    %v2089 = vmul.f32 %v2037, %v2077
    %v2090 = vmul.f32 %v2039, %v2079
    %v2091 = vmul.f32 %v2041, %v2081
    %v2092 = vmul.f32 %v2043, %v2083
    %v2093 = vmul.f32 %v2045, %v2085
    %2094 = vrot.lane.b32.xlu0 %v1625, 96
    %v2095 = vpop.permute.xlu0 %2094
    %2096 = vrot.lane.b32.xlu0 %v1630, 96
    %v2097 = vpop.permute.xlu0 %2096
    %v2101 = vsel %vm666, %v2086, 0
    %v2104 = vsel %vm666, %v2087, 0
    %2106 = vmatprep.subr.mxu0 0.0
    %2107 = vmatpush1.msra.mxu0 0.0
    %2108 = vmatprep.subr.mxu0 0.0
    %2109 = vmatpush1.msra.mxu0 0.0
    %2110 = vmatprep.subr.mxu0 0.0
    %2111 = vmatpush1.msra.mxu0 0.0
    %2112 = vmatprep.subr.mxu0 0.0
    %2113 = vmatpush1.msra.mxu0 0.0
    %2114 = vmatprep.subr.mxu0 0.0
    %2115 = vmatpush1.msra.mxu0 0.0
    %2116 = vmatprep.subr.mxu0 0.0
    %2117 = vmatpush1.msra.mxu0 0.0
    %2118 = vmatprep.subr.mxu0 0.0
    %2119 = vmatpush1.msra.mxu0 0.0
    %2120 = vmatprep.subr.mxu0 0.0
    %2121 = vmatpush1.msra.mxu0 0.0
    %2122 = vmatprep.subr.mxu0 0.0
    %2123 = vmatpush1.msra.mxu0 0.0
    %2124 = vmatprep.subr.mxu0 0.0
    %2125 = vmatpush1.msra.mxu0 0.0
    %2126 = vmatprep.subr.mxu0 0.0
    %2127 = vmatpush1.msra.mxu0 0.0
    %2128 = vmatprep.subr.mxu0 0.0
    %2129 = vmatpush1.msra.mxu0 0.0
    %2130 = vmatprep.subr.mxu0 0.0
    %2131 = vmatpush1.msra.mxu0 0.0
    %2132 = vmatprep.subr.mxu0 0.0
    %2133 = vmatpush1.msra.mxu0 0.0
    %2134 = vmatprep.subr.mxu0 0.0
    %2135 = vmatpush1.msra.mxu0 %v2097
    %2136 = vmatprep.subr.mxu0 0.0
    %2137 = vmatpush1.msra.mxu0 %v2095
    %2138 = vmatprep.subr.mxu0 0.0
    %2139 = vmatpush2.msra.mxu0 0.0
    %2140 = vmatprep.subr.mxu0 0.0
    %2141 = vmatpush2.msra.mxu0 0.0
    %2142 = vmatprep.subr.mxu0 0.0
    %2143 = vmatpush2.msra.mxu0 0.0
    %2144 = vmatprep.subr.mxu0 0.0
    %2145 = vmatpush2.msra.mxu0 0.0
    %2146 = vmatprep.subr.mxu0 0.0
    %2147 = vmatpush2.msra.mxu0 0.0
    %2148 = vmatprep.subr.mxu0 0.0
    %2149 = vmatpush2.msra.mxu0 0.0
    %2150 = vmatprep.subr.mxu0 0.0
    %2151 = vmatpush2.msra.mxu0 0.0
    %2152 = vmatprep.subr.mxu0 0.0
    %2153 = vmatpush2.msra.mxu0 0.0
    %2154 = vmatprep.subr.mxu0 0.0
    %2155 = vmatpush2.msra.mxu0 0.0
    %2156 = vmatprep.subr.mxu0 0.0
    %2157 = vmatpush2.msra.mxu0 0.0
    %2158 = vmatprep.subr.mxu0 0.0
    %2159 = vmatpush2.msra.mxu0 0.0
    %2160 = vmatprep.subr.mxu0 0.0
    %2161 = vmatpush2.msra.mxu0 0.0
    %2162 = vmatprep.subr.mxu0 0.0
    %2163 = vmatpush2.msra.mxu0 0.0
    %2164 = vmatprep.subr.mxu0 0.0
    %2165 = vmatpush2.msra.mxu0 0.0
    %2166 = vmatprep.subr.mxu0 0.0
    %2167 = vmatpush2.msra.mxu0 0.0
    %2168 = vmatprep.subr.mxu0 0.0
    %2169 = vmatpush2.msra.mxu0 0.0
    %2170 = vmatprep.mubr.f32.mxu0 0.0
    %2171 = vmatmul.mubr.f32.gmra.mxu0 %v2101
    %v2172 = vpop.f32.mrf.mxu0
    %v2173 = vadd.f32 0.0, %v2172
    %v2174 = vpop.f32.mrf.mxu0
    %2175 = vmatprep.mubr.f32.mxu0 0.0
    %2176 = vmatmul.mubr.f32.gmra.mxu0 %v2104
    %v2177 = vpop.f32.mrf.mxu0
    %v2178 = vadd.f32 0.0, %v2177
    %v2179 = vpop.f32.mrf.mxu0
    %2180 = vdwg.mxu0
    %2181 = vrot.lane.b32.xlu0 %v1625, 88
    %v2182 = vpop.permute.xlu0 %2181
    %2183 = vrot.lane.b32.xlu0 %v1630, 88
    %v2184 = vpop.permute.xlu0 %2183
    %v2188 = vsel %vm666, %v2088, 0
    %v2191 = vsel %vm666, %v2089, 0
    %2193 = vmatprep.subr.mxu0 0.0
    %2194 = vmatpush1.msra.mxu0 0.0
    %2195 = vmatprep.subr.mxu0 0.0
    %2196 = vmatpush1.msra.mxu0 0.0
    %2197 = vmatprep.subr.mxu0 0.0
    %2198 = vmatpush1.msra.mxu0 0.0
    %2199 = vmatprep.subr.mxu0 0.0
    %2200 = vmatpush1.msra.mxu0 0.0
    %2201 = vmatprep.subr.mxu0 0.0
    %2202 = vmatpush1.msra.mxu0 0.0
    %2203 = vmatprep.subr.mxu0 0.0
    %2204 = vmatpush1.msra.mxu0 0.0
    %2205 = vmatprep.subr.mxu0 0.0
    %2206 = vmatpush1.msra.mxu0 0.0
    %2207 = vmatprep.subr.mxu0 0.0
    %2208 = vmatpush1.msra.mxu0 0.0
    %2209 = vmatprep.subr.mxu0 0.0
    %2210 = vmatpush1.msra.mxu0 0.0
    %2211 = vmatprep.subr.mxu0 0.0
    %2212 = vmatpush1.msra.mxu0 0.0
    %2213 = vmatprep.subr.mxu0 0.0
    %2214 = vmatpush1.msra.mxu0 0.0
    %2215 = vmatprep.subr.mxu0 0.0
    %2216 = vmatpush1.msra.mxu0 0.0
    %2217 = vmatprep.subr.mxu0 0.0
    %2218 = vmatpush1.msra.mxu0 0.0
    %2219 = vmatprep.subr.mxu0 0.0
    %2220 = vmatpush1.msra.mxu0 0.0
    %2221 = vmatprep.subr.mxu0 0.0
    %2222 = vmatpush1.msra.mxu0 %v2184
    %2223 = vmatprep.subr.mxu0 0.0
    %2224 = vmatpush1.msra.mxu0 %v2182
    %2225 = vmatprep.subr.mxu0 0.0
    %2226 = vmatpush2.msra.mxu0 0.0
    %2227 = vmatprep.subr.mxu0 0.0
    %2228 = vmatpush2.msra.mxu0 0.0
    %2229 = vmatprep.subr.mxu0 0.0
    %2230 = vmatpush2.msra.mxu0 0.0
    %2231 = vmatprep.subr.mxu0 0.0
    %2232 = vmatpush2.msra.mxu0 0.0
    %2233 = vmatprep.subr.mxu0 0.0
    %2234 = vmatpush2.msra.mxu0 0.0
    %2235 = vmatprep.subr.mxu0 0.0
    %2236 = vmatpush2.msra.mxu0 0.0
    %2237 = vmatprep.subr.mxu0 0.0
    %2238 = vmatpush2.msra.mxu0 0.0
    %2239 = vmatprep.subr.mxu0 0.0
    %2240 = vmatpush2.msra.mxu0 0.0
    %2241 = vmatprep.subr.mxu0 0.0
    %2242 = vmatpush2.msra.mxu0 0.0
    %2243 = vmatprep.subr.mxu0 0.0
    %2244 = vmatpush2.msra.mxu0 0.0
    %2245 = vmatprep.subr.mxu0 0.0
    %2246 = vmatpush2.msra.mxu0 0.0
    %2247 = vmatprep.subr.mxu0 0.0
    %2248 = vmatpush2.msra.mxu0 0.0
    %2249 = vmatprep.subr.mxu0 0.0
    %2250 = vmatpush2.msra.mxu0 0.0
    %2251 = vmatprep.subr.mxu0 0.0
    %2252 = vmatpush2.msra.mxu0 0.0
    %2253 = vmatprep.subr.mxu0 0.0
    %2254 = vmatpush2.msra.mxu0 0.0
    %2255 = vmatprep.subr.mxu0 0.0
    %2256 = vmatpush2.msra.mxu0 0.0
    %2257 = vmatprep.mubr.f32.mxu0 0.0
    %2258 = vmatmul.mubr.f32.gmra.mxu0 %v2188
    %v2259 = vpop.f32.mrf.mxu0
    %v2260 = vadd.f32 0.0, %v2259
    %v2261 = vpop.f32.mrf.mxu0
    %2262 = vmatprep.mubr.f32.mxu0 0.0
    %2263 = vmatmul.mubr.f32.gmra.mxu0 %v2191
    %v2264 = vpop.f32.mrf.mxu0
    %v2265 = vadd.f32 0.0, %v2264
    %v2266 = vpop.f32.mrf.mxu0
    %2267 = vdwg.mxu0
    %v2269 = vsel %vm309, %v2260, 0
    %v2272 = vsel %vm309, %v2265, 0
    %2274 = vmatprep.subr.mxu0 0.0
    %2275 = vmatpush1.msra.mxu0 0.0
    %2276 = vmatprep.subr.mxu0 0.0
    %2277 = vmatpush1.msra.mxu0 0.0
    %2278 = vmatprep.subr.mxu0 0.0
    %2279 = vmatpush1.msra.mxu0 0.0
    %2280 = vmatprep.subr.mxu0 0.0
    %2281 = vmatpush1.msra.mxu0 0.0
    %2282 = vmatprep.subr.mxu0 0.0
    %2283 = vmatpush1.msra.mxu0 0.0
    %2284 = vmatprep.subr.mxu0 0.0
    %2285 = vmatpush1.msra.mxu0 0.0
    %2286 = vmatprep.subr.mxu0 0.0
    %2287 = vmatpush1.msra.mxu0 0.0
    %2288 = vmatprep.subr.mxu0 0.0
    %2289 = vmatpush1.msra.mxu0 0.0
    %2290 = vmatprep.subr.mxu0 0.0
    %2291 = vmatpush1.msra.mxu0 0.0
    %2292 = vmatprep.subr.mxu0 0.0
    %2293 = vmatpush1.msra.mxu0 0.0
    %2294 = vmatprep.subr.mxu0 0.0
    %2295 = vmatpush1.msra.mxu0 0.0
    %2296 = vmatprep.subr.mxu0 0.0
    %2297 = vmatpush1.msra.mxu0 0.0
    %2298 = vmatprep.subr.mxu0 0.0
    %2299 = vmatpush1.msra.mxu0 0.0
    %2300 = vmatprep.subr.mxu0 0.0
    %2301 = vmatpush1.msra.mxu0 0.0
    %2302 = vmatprep.subr.mxu0 0.0
    %2303 = vmatpush1.msra.mxu0 0.0
    %2304 = vmatprep.subr.mxu0 0.0
    %2305 = vmatpush1.msra.mxu0 %v1634
    %2306 = vmatprep.subr.mxu0 0.0
    %2307 = vmatpush2.msra.mxu0 0.0
    %2308 = vmatprep.subr.mxu0 0.0
    %2309 = vmatpush2.msra.mxu0 0.0
    %2310 = vmatprep.subr.mxu0 0.0
    %2311 = vmatpush2.msra.mxu0 0.0
    %2312 = vmatprep.subr.mxu0 0.0
    %2313 = vmatpush2.msra.mxu0 0.0
    %2314 = vmatprep.subr.mxu0 0.0
    %2315 = vmatpush2.msra.mxu0 0.0
    %2316 = vmatprep.subr.mxu0 0.0
    %2317 = vmatpush2.msra.mxu0 0.0
    %2318 = vmatprep.subr.mxu0 0.0
    %2319 = vmatpush2.msra.mxu0 0.0
    %2320 = vmatprep.subr.mxu0 0.0
    %2321 = vmatpush2.msra.mxu0 0.0
    %2322 = vmatprep.subr.mxu0 0.0
    %2323 = vmatpush2.msra.mxu0 0.0
    %2324 = vmatprep.subr.mxu0 0.0
    %2325 = vmatpush2.msra.mxu0 0.0
    %2326 = vmatprep.subr.mxu0 0.0
    %2327 = vmatpush2.msra.mxu0 0.0
    %2328 = vmatprep.subr.mxu0 0.0
    %2329 = vmatpush2.msra.mxu0 0.0
    %2330 = vmatprep.subr.mxu0 0.0
    %2331 = vmatpush2.msra.mxu0 0.0
    %2332 = vmatprep.subr.mxu0 0.0
    %2333 = vmatpush2.msra.mxu0 0.0
    %2334 = vmatprep.subr.mxu0 0.0
    %2335 = vmatpush2.msra.mxu0 0.0
    %2336 = vmatprep.subr.mxu0 0.0
    %2337 = vmatpush2.msra.mxu0 0.0
    %2338 = vmatprep.mubr.f32.mxu0 0.0
    %2339 = vmatmul.mubr.f32.gmra.mxu0 %v2269
    %v2340 = vpop.f32.mrf.mxu0
    %v2341 = vadd.f32 0.0, %v2340
    %v2342 = vpop.f32.mrf.mxu0
    %2343 = vmatprep.mubr.f32.mxu0 0.0
    %2344 = vmatmul.mubr.f32.gmra.mxu0 %v2272
    %v2345 = vpop.f32.mrf.mxu0
    %v2346 = vadd.f32 0.0, %v2345
    %v2347 = vpop.f32.mrf.mxu0
    %2348 = vdwg.mxu0
    %v2350 = vsel %vm309, %v2173, 0
    %v2353 = vsel %vm309, %v2178, 0
    %2355 = vmatprep.subr.mxu0 0.0
    %2356 = vmatpush1.msra.mxu0 0.0
    %2357 = vmatprep.subr.mxu0 0.0
    %2358 = vmatpush1.msra.mxu0 0.0
    %2359 = vmatprep.subr.mxu0 0.0
    %2360 = vmatpush1.msra.mxu0 0.0
    %2361 = vmatprep.subr.mxu0 0.0
    %2362 = vmatpush1.msra.mxu0 0.0
    %2363 = vmatprep.subr.mxu0 0.0
    %2364 = vmatpush1.msra.mxu0 0.0
    %2365 = vmatprep.subr.mxu0 0.0
    %2366 = vmatpush1.msra.mxu0 0.0
    %2367 = vmatprep.subr.mxu0 0.0
    %2368 = vmatpush1.msra.mxu0 0.0
    %2369 = vmatprep.subr.mxu0 0.0
    %2370 = vmatpush1.msra.mxu0 0.0
    %2371 = vmatprep.subr.mxu0 0.0
    %2372 = vmatpush1.msra.mxu0 0.0
    %2373 = vmatprep.subr.mxu0 0.0
    %2374 = vmatpush1.msra.mxu0 0.0
    %2375 = vmatprep.subr.mxu0 0.0
    %2376 = vmatpush1.msra.mxu0 0.0
    %2377 = vmatprep.subr.mxu0 0.0
    %2378 = vmatpush1.msra.mxu0 0.0
    %2379 = vmatprep.subr.mxu0 0.0
    %2380 = vmatpush1.msra.mxu0 0.0
    %2381 = vmatprep.subr.mxu0 0.0
    %2382 = vmatpush1.msra.mxu0 0.0
    %2383 = vmatprep.subr.mxu0 0.0
    %2384 = vmatpush1.msra.mxu0 0.0
    %2385 = vmatprep.subr.mxu0 0.0
    %2386 = vmatpush1.msra.mxu0 %v1633
    %2387 = vmatprep.subr.mxu0 0.0
    %2388 = vmatpush2.msra.mxu0 0.0
    %2389 = vmatprep.subr.mxu0 0.0
    %2390 = vmatpush2.msra.mxu0 0.0
    %2391 = vmatprep.subr.mxu0 0.0
    %2392 = vmatpush2.msra.mxu0 0.0
    %2393 = vmatprep.subr.mxu0 0.0
    %2394 = vmatpush2.msra.mxu0 0.0
    %2395 = vmatprep.subr.mxu0 0.0
    %2396 = vmatpush2.msra.mxu0 0.0
    %2397 = vmatprep.subr.mxu0 0.0
    %2398 = vmatpush2.msra.mxu0 0.0
    %2399 = vmatprep.subr.mxu0 0.0
    %2400 = vmatpush2.msra.mxu0 0.0
    %2401 = vmatprep.subr.mxu0 0.0
    %2402 = vmatpush2.msra.mxu0 0.0
    %2403 = vmatprep.subr.mxu0 0.0
    %2404 = vmatpush2.msra.mxu0 0.0
    %2405 = vmatprep.subr.mxu0 0.0
    %2406 = vmatpush2.msra.mxu0 0.0
    %2407 = vmatprep.subr.mxu0 0.0
    %2408 = vmatpush2.msra.mxu0 0.0
    %2409 = vmatprep.subr.mxu0 0.0
    %2410 = vmatpush2.msra.mxu0 0.0
    %2411 = vmatprep.subr.mxu0 0.0
    %2412 = vmatpush2.msra.mxu0 0.0
    %2413 = vmatprep.subr.mxu0 0.0
    %2414 = vmatpush2.msra.mxu0 0.0
    %2415 = vmatprep.subr.mxu0 0.0
    %2416 = vmatpush2.msra.mxu0 0.0
    %2417 = vmatprep.subr.mxu0 0.0
    %2418 = vmatpush2.msra.mxu0 0.0
    %2419 = vmatprep.mubr.f32.mxu0 0.0
    %2420 = vmatmul.mubr.f32.gmra.mxu0 %v2350
    %v2421 = vpop.f32.mrf.mxu0
    %v2422 = vadd.f32 %v2341, %v2421
    %v2423 = vpop.f32.mrf.mxu0
    %2424 = vmatprep.mubr.f32.mxu0 0.0
    %2425 = vmatmul.mubr.f32.gmra.mxu0 %v2353
    %v2426 = vpop.f32.mrf.mxu0
    %v2427 = vadd.f32 %v2346, %v2426
    %v2428 = vpop.f32.mrf.mxu0
    %2429 = vdwg.mxu0
    %2430 = vrot.lane.b32.xlu0 %v1625, 80
    %v2431 = vpop.permute.xlu0 %2430
    %2432 = vrot.lane.b32.xlu0 %v1630, 80
    %v2433 = vpop.permute.xlu0 %2432
    %v2437 = vsel %vm666, %v2090, 0
    %v2440 = vsel %vm666, %v2091, 0
    %2442 = vmatprep.subr.mxu0 0.0
    %2443 = vmatpush1.msra.mxu0 0.0
    %2444 = vmatprep.subr.mxu0 0.0
    %2445 = vmatpush1.msra.mxu0 0.0
    %2446 = vmatprep.subr.mxu0 0.0
    %2447 = vmatpush1.msra.mxu0 0.0
    %2448 = vmatprep.subr.mxu0 0.0
    %2449 = vmatpush1.msra.mxu0 0.0
    %2450 = vmatprep.subr.mxu0 0.0
    %2451 = vmatpush1.msra.mxu0 0.0
    %2452 = vmatprep.subr.mxu0 0.0
    %2453 = vmatpush1.msra.mxu0 0.0
    %2454 = vmatprep.subr.mxu0 0.0
    %2455 = vmatpush1.msra.mxu0 0.0
    %2456 = vmatprep.subr.mxu0 0.0
    %2457 = vmatpush1.msra.mxu0 0.0
    %2458 = vmatprep.subr.mxu0 0.0
    %2459 = vmatpush1.msra.mxu0 0.0
    %2460 = vmatprep.subr.mxu0 0.0
    %2461 = vmatpush1.msra.mxu0 0.0
    %2462 = vmatprep.subr.mxu0 0.0
    %2463 = vmatpush1.msra.mxu0 0.0
    %2464 = vmatprep.subr.mxu0 0.0
    %2465 = vmatpush1.msra.mxu0 0.0
    %2466 = vmatprep.subr.mxu0 0.0
    %2467 = vmatpush1.msra.mxu0 0.0
    %2468 = vmatprep.subr.mxu0 0.0
    %2469 = vmatpush1.msra.mxu0 0.0
    %2470 = vmatprep.subr.mxu0 0.0
    %2471 = vmatpush1.msra.mxu0 %v2433
    %2472 = vmatprep.subr.mxu0 0.0
    %2473 = vmatpush1.msra.mxu0 %v2431
    %2474 = vmatprep.subr.mxu0 0.0
    %2475 = vmatpush2.msra.mxu0 0.0
    %2476 = vmatprep.subr.mxu0 0.0
    %2477 = vmatpush2.msra.mxu0 0.0
    %2478 = vmatprep.subr.mxu0 0.0
    %2479 = vmatpush2.msra.mxu0 0.0
    %2480 = vmatprep.subr.mxu0 0.0
    %2481 = vmatpush2.msra.mxu0 0.0
    %2482 = vmatprep.subr.mxu0 0.0
    %2483 = vmatpush2.msra.mxu0 0.0
    %2484 = vmatprep.subr.mxu0 0.0
    %2485 = vmatpush2.msra.mxu0 0.0
    %2486 = vmatprep.subr.mxu0 0.0
    %2487 = vmatpush2.msra.mxu0 0.0
    %2488 = vmatprep.subr.mxu0 0.0
    %2489 = vmatpush2.msra.mxu0 0.0
    %2490 = vmatprep.subr.mxu0 0.0
    %2491 = vmatpush2.msra.mxu0 0.0
    %2492 = vmatprep.subr.mxu0 0.0
    %2493 = vmatpush2.msra.mxu0 0.0
    %2494 = vmatprep.subr.mxu0 0.0
    %2495 = vmatpush2.msra.mxu0 0.0
    %2496 = vmatprep.subr.mxu0 0.0
    %2497 = vmatpush2.msra.mxu0 0.0
    %2498 = vmatprep.subr.mxu0 0.0
    %2499 = vmatpush2.msra.mxu0 0.0
    %2500 = vmatprep.subr.mxu0 0.0
    %2501 = vmatpush2.msra.mxu0 0.0
    %2502 = vmatprep.subr.mxu0 0.0
    %2503 = vmatpush2.msra.mxu0 0.0
    %2504 = vmatprep.subr.mxu0 0.0
    %2505 = vmatpush2.msra.mxu0 0.0
    %2506 = vmatprep.mubr.f32.mxu0 0.0
    %2507 = vmatmul.mubr.f32.gmra.mxu0 %v2437
    %v2508 = vpop.f32.mrf.mxu0
    %v2509 = vadd.f32 0.0, %v2508
    %v2510 = vpop.f32.mrf.mxu0
    %2511 = vmatprep.mubr.f32.mxu0 0.0
    %2512 = vmatmul.mubr.f32.gmra.mxu0 %v2440
    %v2513 = vpop.f32.mrf.mxu0
    %v2514 = vadd.f32 0.0, %v2513
    %v2515 = vpop.f32.mrf.mxu0
    %2516 = vdwg.mxu0
    %v2518 = vsel %vm309, %v2509, 0
    %v2521 = vsel %vm309, %v2514, 0
    %2523 = vmatprep.subr.mxu0 0.0
    %2524 = vmatpush1.msra.mxu0 0.0
    %2525 = vmatprep.subr.mxu0 0.0
    %2526 = vmatpush1.msra.mxu0 0.0
    %2527 = vmatprep.subr.mxu0 0.0
    %2528 = vmatpush1.msra.mxu0 0.0
    %2529 = vmatprep.subr.mxu0 0.0
    %2530 = vmatpush1.msra.mxu0 0.0
    %2531 = vmatprep.subr.mxu0 0.0
    %2532 = vmatpush1.msra.mxu0 0.0
    %2533 = vmatprep.subr.mxu0 0.0
    %2534 = vmatpush1.msra.mxu0 0.0
    %2535 = vmatprep.subr.mxu0 0.0
    %2536 = vmatpush1.msra.mxu0 0.0
    %2537 = vmatprep.subr.mxu0 0.0
    %2538 = vmatpush1.msra.mxu0 0.0
    %2539 = vmatprep.subr.mxu0 0.0
    %2540 = vmatpush1.msra.mxu0 0.0
    %2541 = vmatprep.subr.mxu0 0.0
    %2542 = vmatpush1.msra.mxu0 0.0
    %2543 = vmatprep.subr.mxu0 0.0
    %2544 = vmatpush1.msra.mxu0 0.0
    %2545 = vmatprep.subr.mxu0 0.0
    %2546 = vmatpush1.msra.mxu0 0.0
    %2547 = vmatprep.subr.mxu0 0.0
    %2548 = vmatpush1.msra.mxu0 0.0
    %2549 = vmatprep.subr.mxu0 0.0
    %2550 = vmatpush1.msra.mxu0 0.0
    %2551 = vmatprep.subr.mxu0 0.0
    %2552 = vmatpush1.msra.mxu0 0.0
    %2553 = vmatprep.subr.mxu0 0.0
    %2554 = vmatpush1.msra.mxu0 %v1635
    %2555 = vmatprep.subr.mxu0 0.0
    %2556 = vmatpush2.msra.mxu0 0.0
    %2557 = vmatprep.subr.mxu0 0.0
    %2558 = vmatpush2.msra.mxu0 0.0
    %2559 = vmatprep.subr.mxu0 0.0
    %2560 = vmatpush2.msra.mxu0 0.0
    %2561 = vmatprep.subr.mxu0 0.0
    %2562 = vmatpush2.msra.mxu0 0.0
    %2563 = vmatprep.subr.mxu0 0.0
    %2564 = vmatpush2.msra.mxu0 0.0
    %2565 = vmatprep.subr.mxu0 0.0
    %2566 = vmatpush2.msra.mxu0 0.0
    %2567 = vmatprep.subr.mxu0 0.0
    %2568 = vmatpush2.msra.mxu0 0.0
    %2569 = vmatprep.subr.mxu0 0.0
    %2570 = vmatpush2.msra.mxu0 0.0
    %2571 = vmatprep.subr.mxu0 0.0
    %2572 = vmatpush2.msra.mxu0 0.0
    %2573 = vmatprep.subr.mxu0 0.0
    %2574 = vmatpush2.msra.mxu0 0.0
    %2575 = vmatprep.subr.mxu0 0.0
    %2576 = vmatpush2.msra.mxu0 0.0
    %2577 = vmatprep.subr.mxu0 0.0
    %2578 = vmatpush2.msra.mxu0 0.0
    %2579 = vmatprep.subr.mxu0 0.0
    %2580 = vmatpush2.msra.mxu0 0.0
    %2581 = vmatprep.subr.mxu0 0.0
    %2582 = vmatpush2.msra.mxu0 0.0
    %2583 = vmatprep.subr.mxu0 0.0
    %2584 = vmatpush2.msra.mxu0 0.0
    %2585 = vmatprep.subr.mxu0 0.0
    %2586 = vmatpush2.msra.mxu0 0.0
    %2587 = vmatprep.mubr.f32.mxu0 0.0
    %2588 = vmatmul.mubr.f32.gmra.mxu0 %v2518
    %v2589 = vpop.f32.mrf.mxu0
    %v2590 = vadd.f32 0.0, %v2589
    %v2591 = vpop.f32.mrf.mxu0
    %2592 = vmatprep.mubr.f32.mxu0 0.0
    %2593 = vmatmul.mubr.f32.gmra.mxu0 %v2521
    %v2594 = vpop.f32.mrf.mxu0
    %v2595 = vadd.f32 0.0, %v2594
    %v2596 = vpop.f32.mrf.mxu0
    %2597 = vdwg.mxu0
    %v2598 = vadd.f32 %v2422, %v2590
    %v2599 = vadd.f32 %v2427, %v2595
    %2600 = vrot.lane.b32.xlu0 %v1625, 72
    %v2601 = vpop.permute.xlu0 %2600
    %2602 = vrot.lane.b32.xlu0 %v1630, 72
    %v2603 = vpop.permute.xlu0 %2602
    %v2607 = vsel %vm666, %v2092, 0
    %v2610 = vsel %vm666, %v2093, 0
    %2612 = vmatprep.subr.mxu0 0.0
    %2613 = vmatpush1.msra.mxu0 0.0
    %2614 = vmatprep.subr.mxu0 0.0
    %2615 = vmatpush1.msra.mxu0 0.0
    %2616 = vmatprep.subr.mxu0 0.0
    %2617 = vmatpush1.msra.mxu0 0.0
    %2618 = vmatprep.subr.mxu0 0.0
    %2619 = vmatpush1.msra.mxu0 0.0
    %2620 = vmatprep.subr.mxu0 0.0
    %2621 = vmatpush1.msra.mxu0 0.0
    %2622 = vmatprep.subr.mxu0 0.0
    %2623 = vmatpush1.msra.mxu0 0.0
    %2624 = vmatprep.subr.mxu0 0.0
    %2625 = vmatpush1.msra.mxu0 0.0
    %2626 = vmatprep.subr.mxu0 0.0
    %2627 = vmatpush1.msra.mxu0 0.0
    %2628 = vmatprep.subr.mxu0 0.0
    %2629 = vmatpush1.msra.mxu0 0.0
    %2630 = vmatprep.subr.mxu0 0.0
    %2631 = vmatpush1.msra.mxu0 0.0
    %2632 = vmatprep.subr.mxu0 0.0
    %2633 = vmatpush1.msra.mxu0 0.0
    %2634 = vmatprep.subr.mxu0 0.0
    %2635 = vmatpush1.msra.mxu0 0.0
    %2636 = vmatprep.subr.mxu0 0.0
    %2637 = vmatpush1.msra.mxu0 0.0
    %2638 = vmatprep.subr.mxu0 0.0
    %2639 = vmatpush1.msra.mxu0 0.0
    %2640 = vmatprep.subr.mxu0 0.0
    %2641 = vmatpush1.msra.mxu0 %v2603
    %2642 = vmatprep.subr.mxu0 0.0
    %2643 = vmatpush1.msra.mxu0 %v2601
    %2644 = vmatprep.subr.mxu0 0.0
    %2645 = vmatpush2.msra.mxu0 0.0
    %2646 = vmatprep.subr.mxu0 0.0
    %2647 = vmatpush2.msra.mxu0 0.0
    %2648 = vmatprep.subr.mxu0 0.0
    %2649 = vmatpush2.msra.mxu0 0.0
    %2650 = vmatprep.subr.mxu0 0.0
    %2651 = vmatpush2.msra.mxu0 0.0
    %2652 = vmatprep.subr.mxu0 0.0
    %2653 = vmatpush2.msra.mxu0 0.0
    %2654 = vmatprep.subr.mxu0 0.0
    %2655 = vmatpush2.msra.mxu0 0.0
    %2656 = vmatprep.subr.mxu0 0.0
    %2657 = vmatpush2.msra.mxu0 0.0
    %2658 = vmatprep.subr.mxu0 0.0
    %2659 = vmatpush2.msra.mxu0 0.0
    %2660 = vmatprep.subr.mxu0 0.0
    %2661 = vmatpush2.msra.mxu0 0.0
    %2662 = vmatprep.subr.mxu0 0.0
    %2663 = vmatpush2.msra.mxu0 0.0
    %2664 = vmatprep.subr.mxu0 0.0
    %2665 = vmatpush2.msra.mxu0 0.0
    %2666 = vmatprep.subr.mxu0 0.0
    %2667 = vmatpush2.msra.mxu0 0.0
    %2668 = vmatprep.subr.mxu0 0.0
    %2669 = vmatpush2.msra.mxu0 0.0
    %2670 = vmatprep.subr.mxu0 0.0
    %2671 = vmatpush2.msra.mxu0 0.0
    %2672 = vmatprep.subr.mxu0 0.0
    %2673 = vmatpush2.msra.mxu0 0.0
    %2674 = vmatprep.subr.mxu0 0.0
    %2675 = vmatpush2.msra.mxu0 0.0
    %2676 = vmatprep.mubr.f32.mxu0 0.0
    %2677 = vmatmul.mubr.f32.gmra.mxu0 %v2607
    %v2678 = vpop.f32.mrf.mxu0
    %v2679 = vadd.f32 0.0, %v2678
    %v2680 = vpop.f32.mrf.mxu0
    %2681 = vmatprep.mubr.f32.mxu0 0.0
    %2682 = vmatmul.mubr.f32.gmra.mxu0 %v2610
    %v2683 = vpop.f32.mrf.mxu0
    %v2684 = vadd.f32 0.0, %v2683
    %v2685 = vpop.f32.mrf.mxu0
    %2686 = vdwg.mxu0
    %v2688 = vsel %vm309, %v2679, 0
    %v2691 = vsel %vm309, %v2684, 0
    %2693 = vmatprep.subr.mxu0 0.0
    %2694 = vmatpush1.msra.mxu0 0.0
    %2695 = vmatprep.subr.mxu0 0.0
    %2696 = vmatpush1.msra.mxu0 0.0
    %2697 = vmatprep.subr.mxu0 0.0
    %2698 = vmatpush1.msra.mxu0 0.0
    %2699 = vmatprep.subr.mxu0 0.0
    %2700 = vmatpush1.msra.mxu0 0.0
    %2701 = vmatprep.subr.mxu0 0.0
    %2702 = vmatpush1.msra.mxu0 0.0
    %2703 = vmatprep.subr.mxu0 0.0
    %2704 = vmatpush1.msra.mxu0 0.0
    %2705 = vmatprep.subr.mxu0 0.0
    %2706 = vmatpush1.msra.mxu0 0.0
    %2707 = vmatprep.subr.mxu0 0.0
    %2708 = vmatpush1.msra.mxu0 0.0
    %2709 = vmatprep.subr.mxu0 0.0
    %2710 = vmatpush1.msra.mxu0 0.0
    %2711 = vmatprep.subr.mxu0 0.0
    %2712 = vmatpush1.msra.mxu0 0.0
    %2713 = vmatprep.subr.mxu0 0.0
    %2714 = vmatpush1.msra.mxu0 0.0
    %2715 = vmatprep.subr.mxu0 0.0
    %2716 = vmatpush1.msra.mxu0 0.0
    %2717 = vmatprep.subr.mxu0 0.0
    %2718 = vmatpush1.msra.mxu0 0.0
    %2719 = vmatprep.subr.mxu0 0.0
    %2720 = vmatpush1.msra.mxu0 0.0
    %2721 = vmatprep.subr.mxu0 0.0
    %2722 = vmatpush1.msra.mxu0 0.0
    %2723 = vmatprep.subr.mxu0 0.0
    %2724 = vmatpush1.msra.mxu0 %v1636
    %2725 = vmatprep.subr.mxu0 0.0
    %2726 = vmatpush2.msra.mxu0 0.0
    %2727 = vmatprep.subr.mxu0 0.0
    %2728 = vmatpush2.msra.mxu0 0.0
    %2729 = vmatprep.subr.mxu0 0.0
    %2730 = vmatpush2.msra.mxu0 0.0
    %2731 = vmatprep.subr.mxu0 0.0
    %2732 = vmatpush2.msra.mxu0 0.0
    %2733 = vmatprep.subr.mxu0 0.0
    %2734 = vmatpush2.msra.mxu0 0.0
    %2735 = vmatprep.subr.mxu0 0.0
    %2736 = vmatpush2.msra.mxu0 0.0
    %2737 = vmatprep.subr.mxu0 0.0
    %2738 = vmatpush2.msra.mxu0 0.0
    %2739 = vmatprep.subr.mxu0 0.0
    %2740 = vmatpush2.msra.mxu0 0.0
    %2741 = vmatprep.subr.mxu0 0.0
    %2742 = vmatpush2.msra.mxu0 0.0
    %2743 = vmatprep.subr.mxu0 0.0
    %2744 = vmatpush2.msra.mxu0 0.0
    %2745 = vmatprep.subr.mxu0 0.0
    %2746 = vmatpush2.msra.mxu0 0.0
    %2747 = vmatprep.subr.mxu0 0.0
    %2748 = vmatpush2.msra.mxu0 0.0
    %2749 = vmatprep.subr.mxu0 0.0
    %2750 = vmatpush2.msra.mxu0 0.0
    %2751 = vmatprep.subr.mxu0 0.0
    %2752 = vmatpush2.msra.mxu0 0.0
    %2753 = vmatprep.subr.mxu0 0.0
    %2754 = vmatpush2.msra.mxu0 0.0
    %2755 = vmatprep.subr.mxu0 0.0
    %2756 = vmatpush2.msra.mxu0 0.0
    %2757 = vmatprep.mubr.f32.mxu0 0.0
    %2758 = vmatmul.mubr.f32.gmra.mxu0 %v2688
    %v2759 = vpop.f32.mrf.mxu0
    %v2760 = vadd.f32 0.0, %v2759
    %v2761 = vpop.f32.mrf.mxu0
    %2762 = vmatprep.mubr.f32.mxu0 0.0
    %2763 = vmatmul.mubr.f32.gmra.mxu0 %v2691
    %v2764 = vpop.f32.mrf.mxu0
    %v2765 = vadd.f32 0.0, %v2764
    %v2766 = vpop.f32.mrf.mxu0
    %2767 = vdwg.mxu0
    %v2768 = vadd.f32 %v2598, %v2760
    %v2769 = vadd.f32 %v2599, %v2765
    %v2771 = vlaneseq
    %v2772 = vshrl.u32 %v2771, 7
    %v2773 = vsub.s32 0, %v2772
    %v2774 = vrot.slane %v1637, %v2773
    %v2776 = vadd.f32 %v2768, %v2774
    %v2777 = vadd.f32 %v2769, %v2774
    %v2778 = vadd.f32 %v2776, %v1447
    %v2779 = vadd.f32 %v2777, %v1448
    %v2780 = vld [vmem:[%s14] sm:$0xff]
    %v2781 = vld [vmem:[%s14 + $0x8] sm:$0xff]
    %v2782 = vld [vmem:[%s14 + $0x10] sm:$0xff]
    %v2783 = vld [vmem:[%s14 + $0x18] sm:$0xff]
    %v2784 = vld [vmem:[#allocation16] sm:$0x1]
    %v2786 = vlaneseq
    %v2787 = vshrl.u32 %v2786, 7
    %v2788 = vsub.s32 0, %v2787
    %v2789 = vrot.slane %v2784, %v2788
    %v2792 = vsel %vm216, %v2778, 0
    %v2795 = vsel %vm216, %v2779, 0
    %2797 = vmatprep.subr.mxu0 0.0
    %2798 = vmatpush1.msra.mxu0 0.0
    %2799 = vmatprep.subr.mxu0 0.0
    %2800 = vmatpush1.msra.mxu0 0.0
    %2801 = vmatprep.subr.mxu0 0.0
    %2802 = vmatpush1.msra.mxu0 0.0
    %2803 = vmatprep.subr.mxu0 0.0
    %2804 = vmatpush1.msra.mxu0 0.0
    %2805 = vmatprep.subr.mxu0 0.0
    %2806 = vmatpush1.msra.mxu0 0.0
    %2807 = vmatprep.subr.mxu0 0.0
    %2808 = vmatpush1.msra.mxu0 0.0
    %2809 = vmatprep.subr.mxu0 0.0
    %2810 = vmatpush1.msra.mxu0 0.0
    %2811 = vmatprep.subr.mxu0 0.0
    %2812 = vmatpush1.msra.mxu0 0.0
    %2813 = vmatprep.subr.mxu0 0.0
    %2814 = vmatpush1.msra.mxu0 0.0
    %2815 = vmatprep.subr.mxu0 0.0
    %2816 = vmatpush1.msra.mxu0 0.0
    %2817 = vmatprep.subr.mxu0 0.0
    %2818 = vmatpush1.msra.mxu0 0.0
    %2819 = vmatprep.subr.mxu0 0.0
    %2820 = vmatpush1.msra.mxu0 0.0
    %2821 = vmatprep.subr.mxu0 0.0
    %2822 = vmatpush1.msra.mxu0 %v2783
    %2823 = vmatprep.subr.mxu0 0.0
    %2824 = vmatpush1.msra.mxu0 %v2782
    %2825 = vmatprep.subr.mxu0 0.0
    %2826 = vmatpush1.msra.mxu0 %v2781
    %2827 = vmatprep.subr.mxu0 0.0
    %2828 = vmatpush1.msra.mxu0 %v2780
    %2829 = vmatprep.subr.mxu0 0.0
    %2830 = vmatpush2.msra.mxu0 0.0
    %2831 = vmatprep.subr.mxu0 0.0
    %2832 = vmatpush2.msra.mxu0 0.0
    %2833 = vmatprep.subr.mxu0 0.0
    %2834 = vmatpush2.msra.mxu0 0.0
    %2835 = vmatprep.subr.mxu0 0.0
    %2836 = vmatpush2.msra.mxu0 0.0
    %2837 = vmatprep.subr.mxu0 0.0
    %2838 = vmatpush2.msra.mxu0 0.0
    %2839 = vmatprep.subr.mxu0 0.0
    %2840 = vmatpush2.msra.mxu0 0.0
    %2841 = vmatprep.subr.mxu0 0.0
    %2842 = vmatpush2.msra.mxu0 0.0
    %2843 = vmatprep.subr.mxu0 0.0
    %2844 = vmatpush2.msra.mxu0 0.0
    %2845 = vmatprep.subr.mxu0 0.0
    %2846 = vmatpush2.msra.mxu0 0.0
    %2847 = vmatprep.subr.mxu0 0.0
    %2848 = vmatpush2.msra.mxu0 0.0
    %2849 = vmatprep.subr.mxu0 0.0
    %2850 = vmatpush2.msra.mxu0 0.0
    %2851 = vmatprep.subr.mxu0 0.0
    %2852 = vmatpush2.msra.mxu0 0.0
    %2853 = vmatprep.subr.mxu0 0.0
    %2854 = vmatpush2.msra.mxu0 0.0
    %2855 = vmatprep.subr.mxu0 0.0
    %2856 = vmatpush2.msra.mxu0 0.0
    %2857 = vmatprep.subr.mxu0 0.0
    %2858 = vmatpush2.msra.mxu0 0.0
    %2859 = vmatprep.subr.mxu0 0.0
    %2860 = vmatpush2.msra.mxu0 0.0
    %2861 = vmatprep.mubr.f32.mxu0 0.0
    %2862 = vmatmul.mubr.f32.gmra.mxu0 %v2792
    %v2863 = vpop.f32.mrf.mxu0
    %v2864 = vadd.f32 %v2789, %v2863
    %v2865 = vpop.f32.mrf.mxu0
    %2866 = vmatprep.mubr.f32.mxu0 0.0
    %2867 = vmatmul.mubr.f32.gmra.mxu0 %v2795
    %v2868 = vpop.f32.mrf.mxu0
    %v2869 = vadd.f32 %v2789, %v2868
    %v2870 = vpop.f32.mrf.mxu0
    %2871 = vdwg.mxu0
    %vm2872 = vcmp.ge.f32.partialorder %v2864, 0.0
    %vm2873 = vcmp.ge.f32.partialorder %v2869, 0.0
    %v2874 = vmul.f32 %v2864, 0.01
    %v2875 = vmul.f32 %v2869, 0.01
    %v2876 = vsel %vm2872, %v2864, %v2874
    %v2877 = vsel %vm2873, %v2869, %v2875
    %v2878 = vld [vmem:[#allocation17] sm:$0xff]
    %v2879 = vld [vmem:[#allocation17 + $0x8] sm:$0xff]
    %v2880 = vld [vmem:[#allocation19] sm:$0x1]
    %v2882 = vlaneseq
    %v2883 = vshrl.u32 %v2882, 7
    %v2884 = vsub.s32 0, %v2883
    %v2885 = vrot.slane %v2880, %v2884
    %v2888 = vsel %vm666, %v2876, 0
    %v2891 = vsel %vm666, %v2877, 0
    %2893 = vmatprep.subr.mxu0 0.0
    %2894 = vmatpush1.msra.mxu0 0.0
    %2895 = vmatprep.subr.mxu0 0.0
    %2896 = vmatpush1.msra.mxu0 0.0
    %2897 = vmatprep.subr.mxu0 0.0
    %2898 = vmatpush1.msra.mxu0 0.0
    %2899 = vmatprep.subr.mxu0 0.0
    %2900 = vmatpush1.msra.mxu0 0.0
    %2901 = vmatprep.subr.mxu0 0.0
    %2902 = vmatpush1.msra.mxu0 0.0
    %2903 = vmatprep.subr.mxu0 0.0
    %2904 = vmatpush1.msra.mxu0 0.0
    %2905 = vmatprep.subr.mxu0 0.0
    %2906 = vmatpush1.msra.mxu0 0.0
    %2907 = vmatprep.subr.mxu0 0.0
    %2908 = vmatpush1.msra.mxu0 0.0
    %2909 = vmatprep.subr.mxu0 0.0
    %2910 = vmatpush1.msra.mxu0 0.0
    %2911 = vmatprep.subr.mxu0 0.0
    %2912 = vmatpush1.msra.mxu0 0.0
    %2913 = vmatprep.subr.mxu0 0.0
    %2914 = vmatpush1.msra.mxu0 0.0
    %2915 = vmatprep.subr.mxu0 0.0
    %2916 = vmatpush1.msra.mxu0 0.0
    %2917 = vmatprep.subr.mxu0 0.0
    %2918 = vmatpush1.msra.mxu0 0.0
    %2919 = vmatprep.subr.mxu0 0.0
    %2920 = vmatpush1.msra.mxu0 0.0
    %2921 = vmatprep.subr.mxu0 0.0
    %2922 = vmatpush1.msra.mxu0 %v2879
    %2923 = vmatprep.subr.mxu0 0.0
    %2924 = vmatpush1.msra.mxu0 %v2878
    %2925 = vmatprep.subr.mxu0 0.0
    %2926 = vmatpush2.msra.mxu0 0.0
    %2927 = vmatprep.subr.mxu0 0.0
    %2928 = vmatpush2.msra.mxu0 0.0
    %2929 = vmatprep.subr.mxu0 0.0
    %2930 = vmatpush2.msra.mxu0 0.0
    %2931 = vmatprep.subr.mxu0 0.0
    %2932 = vmatpush2.msra.mxu0 0.0
    %2933 = vmatprep.subr.mxu0 0.0
    %2934 = vmatpush2.msra.mxu0 0.0
    %2935 = vmatprep.subr.mxu0 0.0
    %2936 = vmatpush2.msra.mxu0 0.0
    %2937 = vmatprep.subr.mxu0 0.0
    %2938 = vmatpush2.msra.mxu0 0.0
    %2939 = vmatprep.subr.mxu0 0.0
    %2940 = vmatpush2.msra.mxu0 0.0
    %2941 = vmatprep.subr.mxu0 0.0
    %2942 = vmatpush2.msra.mxu0 0.0
    %2943 = vmatprep.subr.mxu0 0.0
    %2944 = vmatpush2.msra.mxu0 0.0
    %2945 = vmatprep.subr.mxu0 0.0
    %2946 = vmatpush2.msra.mxu0 0.0
    %2947 = vmatprep.subr.mxu0 0.0
    %2948 = vmatpush2.msra.mxu0 0.0
    %2949 = vmatprep.subr.mxu0 0.0
    %2950 = vmatpush2.msra.mxu0 0.0
    %2951 = vmatprep.subr.mxu0 0.0
    %2952 = vmatpush2.msra.mxu0 0.0
    %2953 = vmatprep.subr.mxu0 0.0
    %2954 = vmatpush2.msra.mxu0 0.0
    %2955 = vmatprep.subr.mxu0 0.0
    %2956 = vmatpush2.msra.mxu0 0.0
    %2957 = vmatprep.mubr.f32.mxu0 0.0
    %2958 = vmatmul.mubr.f32.gmra.mxu0 %v2888
    %v2959 = vpop.f32.mrf.mxu0
    %v2960 = vadd.f32 %v2885, %v2959
    %v2961 = vpop.f32.mrf.mxu0
    %2962 = vmatprep.mubr.f32.mxu0 0.0
    %2963 = vmatmul.mubr.f32.gmra.mxu0 %v2891
    %v2964 = vpop.f32.mrf.mxu0
    %v2965 = vadd.f32 %v2885, %v2964
    %v2966 = vpop.f32.mrf.mxu0
    %2967 = vdwg.mxu0
    %v2968 = vadd.f32 %v2960, %v2778
    %v2969 = vadd.f32 %v2965, %v2779
    %2970 = vst.msk [vmem:[#allocation20] sm:$0xff] %vm216, %v2968
    %2971 = vst.msk [vmem:[#allocation20 + $0x8] sm:$0xff] %vm216, %v2969
    // Predicated region
    $region118: #{transformer_decoder_layer.1} parent=1 // pred_check
      _
    $region119: #{transformer_decoder_layer.1} parent=1 // pred_check_branch
      %2973 = sbr.rel (0) target = $region121
    $region120: #{transformer_decoder_layer.1} parent=1 // pred_region
      %s2975 = ssub.s32 256, 256
      %2976 = vsyncadd [#allocation4], %s2975
      %s2977 = sshll.u32 [#allocation20], 4
      %s2978 = int_to_ptr.vmem [resolvable:$true] %s2977
      %2983 = dma.vmem_to_hbm [thread:$0]  %s2978, 256, %s18, [#allocation4], 128, 128, 8
    $region121: #{transformer_decoder_layer.1} parent=1 // pred_fallthru
      _
    // Predicated region
    $region122: #{transformer_decoder_layer.1} parent=1 // pred_check
      _
    $region123: #{transformer_decoder_layer.1} parent=1 // pred_check_branch
      %2985 = sbr.rel (0) target = $region125
    $region124: #{transformer_decoder_layer.1} parent=1 // pred_region
      %2986 = dma.done [#allocation4], 256
    $region125: #{transformer_decoder_layer.1} parent=1 // pred_fallthru
      _
    %2987 = vsyncpa [#allocation3], 1
    %2988 = vsyncpa [#allocation6], 1
    %2989 = vsyncpa [#allocation9], 1
    %2990 = vsyncpa [#allocation12], 1
    %2991 = vsyncpa [#allocation15], 1
    %2992 = vsyncpa [#allocation18], 1
    %2993 = vsyncpa [#allocation4], 1

</llo_original>
